<compile_context>
chip_gen: v7x
topology: tpu7x:2x2x1
jax: 0.10.0
libtpu: 0.0.40
codegen_flags: <defaults>
</compile_context>

<pallas_src>
import functools

import jax
import jax.numpy as jnp
from jax.experimental import pallas as pl
from jax.experimental.pallas import tpu as pltpu

INPUT_DIM = 200
HIDDEN_DIM = 128
OUTPUT_DIM = 2

# Layer widths (in, out) matching ANNmodel2.__init__
LAYER_DIMS = [
    (INPUT_DIM, 784),
    (784, 512),
    (512, HIDDEN_DIM),
    (HIDDEN_DIM, HIDDEN_DIM),
    (HIDDEN_DIM, HIDDEN_DIM),
    (HIDDEN_DIM, HIDDEN_DIM),
    (HIDDEN_DIM, OUTPUT_DIM),
]

LANE = 128


def _round_up(n, m):
    return ((n + m - 1) // m) * m


# Lane-aligned (padded) layer dims: every matmul K/N is a multiple of 128.
PADDED_DIMS = [(_round_up(i, LANE), _round_up(o, LANE)) for (i, o) in LAYER_DIMS]
INPUT_PAD = PADDED_DIMS[0][0]      # 256
OUTPUT_PAD = PADDED_DIMS[-1][1]    # 128


def _epilogue_dtype():
    """bf16 bias/ReLU epilogue on chips with a bf16 VPU (v6e/v7x), f32 else."""
    try:
        kind = jax.devices()[0].device_kind.lower()
    except Exception:  # pragma: no cover - defensive
        return jnp.float32
    if ("v6" in kind) or ("v7" in kind) or ("7x" in kind):
        return jnp.bfloat16
    return jnp.float32


def _mlp_kernel(x_ref,
                w1, b1, w2, b2, w3, b3, w4, b4, w5, b5, w6, b6, w7, b7,
                o_ref, xpad_ref):
    """Fused 7-layer MLP on one batch tile.

    x_ref: (TB, 200) f32 (unpadded input tile); xpad_ref: (TB, 256) bf16
    scratch used to zero-pad the feature dim in VMEM. Weights are bf16 and
    resident in VMEM across grid steps; every matmul accumulates in f32 on
    the MXU.
    """
    TBk = xpad_ref.shape[0]
    # Re-zero pad columns every step (cheap; keeps the kernel correct when the
    # batch grid is split across TensorCores and scratch is per-core).
    xpad_ref[:, INPUT_DIM:] = jnp.zeros(
        (TBk, INPUT_PAD - INPUT_DIM), xpad_ref.dtype)
    xpad_ref[:, :INPUT_DIM] = x_ref[...].astype(jnp.bfloat16)
    h = xpad_ref[...]                                   # (TB, 256) bf16

    def hidden(h, w_ref, b_ref):
        y = jnp.dot(h, w_ref[...], preferred_element_type=jnp.float32)
        y = y.astype(b_ref.dtype) + b_ref[...]          # bias add (epilogue dtype)
        # dropout (eval mode) == identity, then ReLU.
        return jnp.maximum(y, 0).astype(jnp.bfloat16)

    h = hidden(h, w1, b1)
    h = hidden(h, w2, b2)
    h = hidden(h, w3, b3)
    h = hidden(h, w4, b4)
    h = hidden(h, w5, b5)
    h = hidden(h, w6, b6)

    y = jnp.dot(h, w7[...], preferred_element_type=jnp.float32)
    y = y.astype(b7.dtype) + b7[...]
    o_ref[...] = y.astype(o_ref.dtype)                  # bf16 output slab


def init_params(key):
    """Deterministic init mimicking PyTorch nn.Linear default
    (uniform in +-1/sqrt(fan_in)). Weights stored as (in, out), f32."""
    params = []
    for (fan_in, fan_out) in LAYER_DIMS:
        key, kw, kb = jax.random.split(key, 3)
        bound = 1.0 / (fan_in ** 0.5)
        w = jax.random.uniform(kw, (fan_in, fan_out), jnp.float32,
                               minval=-bound, maxval=bound)
        b = jax.random.uniform(kb, (1, fan_out), jnp.float32,
                               minval=-bound, maxval=bound)
        params.append((w, b))
    return params


@functools.partial(jax.jit, static_argnames=("tb",))
def annmodel2_forward(x, params, *, tb=1024):
    B = x.shape[0]
    ep_dtype = _epilogue_dtype()

    # --- batch tiling -------------------------------------------------------
    # Tiny batches: pad rows to 16 (bf16 packs (16,128) tiles); cheap copy.
    if B < 16:
        x = jnp.pad(x, ((0, 16 - B), (0, 0)))
    Bk = x.shape[0]
    # TB: multiple of 16, never larger than the (padded) batch, capped at tb.
    TB = max(16, (min(tb, Bk) // 16) * 16)
    grid = (pl.cdiv(Bk, TB),)

    # --- parameter prep (small, constant-size; weights stay bf16) ----------
    flat = [x]
    for (w, b), (pin, pout) in zip(params, PADDED_DIMS):
        wp = jnp.pad(w.astype(jnp.bfloat16),
                     ((0, pin - w.shape[0]), (0, pout - w.shape[1])))
        bp = jnp.pad(b.astype(ep_dtype), ((0, 0), (0, pout - b.shape[1])))
        flat.append(wp)
        flat.append(bp)

    # x block: last dim 200 == full array dim (legal); only the batch is tiled.
    in_specs = [pl.BlockSpec((TB, INPUT_DIM), lambda i: (i, 0))]
    for (pin, pout) in PADDED_DIMS:
        # Constant index_map -> block index never changes -> weights/biases
        # stay resident in VMEM across the batch grid (no re-DMA).
        in_specs.append(pl.BlockSpec((pin, pout), lambda i: (0, 0)))
        in_specs.append(pl.BlockSpec((1, pout), lambda i: (0, 0)))
    out_spec = pl.BlockSpec((TB, OUTPUT_PAD), lambda i: (i, 0))

    eff_b = grid[0] * TB
    flops = 2 * eff_b * sum(pin * pout for (pin, pout) in PADDED_DIMS)
    bytes_accessed = (
        Bk * INPUT_DIM * 4                               # f32 input tiles
        + Bk * OUTPUT_PAD * 2                            # bf16 output tiles
        + sum(pin * pout * 2 + pout * 4 for (pin, pout) in PADDED_DIMS)
    )

    out = pl.pallas_call(
        _mlp_kernel,
        out_shape=jax.ShapeDtypeStruct((Bk, OUTPUT_PAD), jnp.bfloat16),
        grid=grid,
        in_specs=in_specs,
        out_specs=out_spec,
        scratch_shapes=[pltpu.VMEM((TB, INPUT_PAD), jnp.bfloat16)],
        compiler_params=pltpu.CompilerParams(
            dimension_semantics=("parallel",),           # megacore sharding
            vmem_limit_bytes=64 * 1024 * 1024,           # v5e default is 16 MiB
        ),
        cost_estimate=pl.CostEstimate(
            flops=flops, transcendentals=0, bytes_accessed=bytes_accessed),
    )(*flat)

    # Strip batch and lane padding; upcast the tiny logits slice to f32.
    return out[:B, :OUTPUT_DIM].astype(jnp.float32)


def reference_forward(x, params, epilogue_dtype):
    """Pure-JAX reference mirroring kernel numerics (bf16 operands, f32 accum,
    epilogue in `epilogue_dtype`, bf16 output)."""
    h = x.astype(jnp.bfloat16)
    n = len(params)
    for i, (w, b) in enumerate(params):
        y = jnp.dot(h, w.astype(jnp.bfloat16),
                    preferred_element_type=jnp.float32)
        y = y.astype(epilogue_dtype) + b.astype(epilogue_dtype)
        if i < n - 1:
            h = jnp.maximum(y, 0).astype(jnp.bfloat16)
        else:
            h = y.astype(jnp.bfloat16)
    return h.astype(jnp.float32)


if __name__ == "__main__":
    key = jax.random.PRNGKey(0)
    key, kx = jax.random.split(key)

    batch = 8
    x = jax.random.normal(kx, (batch, INPUT_DIM), jnp.float32)
    params = init_params(key)

    out = annmodel2_forward(x, params)
    out = jax.block_until_ready(out)

    ref = reference_forward(x, params, _epilogue_dtype())
    assert out.shape == (batch, OUTPUT_DIM)
    assert jnp.allclose(out, ref, atol=2e-2, rtol=2e-2), "mismatch vs reference"

    print("KERNEL_OK")
</pallas_src>

<mosaic_0001>
module attributes {stable_mosaic.version = 11 : i64} {
  func.func @_mlp_kernel(%arg0: i32, %arg1: memref<16x200xf32, #tpu.memory_space<vmem>>, %arg2: memref<256x896xbf16, #tpu.memory_space<vmem>>, %arg3: memref<1x896xf32, #tpu.memory_space<vmem>>, %arg4: memref<896x512xbf16, #tpu.memory_space<vmem>>, %arg5: memref<1x512xf32, #tpu.memory_space<vmem>>, %arg6: memref<512x128xbf16, #tpu.memory_space<vmem>>, %arg7: memref<1x128xf32, #tpu.memory_space<vmem>>, %arg8: memref<128x128xbf16, #tpu.memory_space<vmem>>, %arg9: memref<1x128xf32, #tpu.memory_space<vmem>>, %arg10: memref<128x128xbf16, #tpu.memory_space<vmem>>, %arg11: memref<1x128xf32, #tpu.memory_space<vmem>>, %arg12: memref<128x128xbf16, #tpu.memory_space<vmem>>, %arg13: memref<1x128xf32, #tpu.memory_space<vmem>>, %arg14: memref<128x128xbf16, #tpu.memory_space<vmem>>, %arg15: memref<1x128xf32, #tpu.memory_space<vmem>>, %arg16: memref<16x128xbf16, #tpu.memory_space<vmem>>, %arg17: memref<16x256xbf16, #tpu.memory_space<vmem>>) attributes {dimension_semantics = [#tpu.dimension_semantics<parallel>], iteration_bounds = array<i64: 1>, scalar_prefetch = 0 : i64, scratch_operands = 1 : i64, tpu.core_type = #tpu.core_type<tc>, window_params = [{transform_indices = @transform_0, window_bounds = array<i64: 16, 200>}, {pipeline_mode = #tpu.pipeline_mode<synchronous>, transform_indices = @transform_1, window_bounds = array<i64: 256, 896>}, {pipeline_mode = #tpu.pipeline_mode<synchronous>, transform_indices = @transform_2, window_bounds = array<i64: 1, 896>}, {pipeline_mode = #tpu.pipeline_mode<synchronous>, transform_indices = @transform_3, window_bounds = array<i64: 896, 512>}, {pipeline_mode = #tpu.pipeline_mode<synchronous>, transform_indices = @transform_4, window_bounds = array<i64: 1, 512>}, {pipeline_mode = #tpu.pipeline_mode<synchronous>, transform_indices = @transform_5, window_bounds = array<i64: 512, 128>}, {pipeline_mode = #tpu.pipeline_mode<synchronous>, transform_indices = @transform_6, window_bounds = array<i64: 1, 128>}, {pipeline_mode = #tpu.pipeline_mode<synchronous>, transform_indices = @transform_7, window_bounds = array<i64: 128, 128>}, {pipeline_mode = #tpu.pipeline_mode<synchronous>, transform_indices = @transform_8, window_bounds = array<i64: 1, 128>}, {pipeline_mode = #tpu.pipeline_mode<synchronous>, transform_indices = @transform_9, window_bounds = array<i64: 128, 128>}, {pipeline_mode = #tpu.pipeline_mode<synchronous>, transform_indices = @transform_10, window_bounds = array<i64: 1, 128>}, {pipeline_mode = #tpu.pipeline_mode<synchronous>, transform_indices = @transform_11, window_bounds = array<i64: 128, 128>}, {pipeline_mode = #tpu.pipeline_mode<synchronous>, transform_indices = @transform_12, window_bounds = array<i64: 1, 128>}, {pipeline_mode = #tpu.pipeline_mode<synchronous>, transform_indices = @transform_13, window_bounds = array<i64: 128, 128>}, {pipeline_mode = #tpu.pipeline_mode<synchronous>, transform_indices = @transform_14, window_bounds = array<i64: 1, 128>}, {transform_indices = @transform_15, window_bounds = array<i64: 16, 128>}]} {
    %cst = arith.constant 0.000000e+00 : bf16
    %0 = vector.broadcast %cst : bf16 to vector<16x56xbf16>
    %c0 = arith.constant 0 : index
    %c200 = arith.constant 200 : index
    %1 = vector.load %arg17[%c0, %c200] : memref<16x256xbf16, #tpu.memory_space<vmem>>, vector<16x56xbf16>
    tpu.vector_store %arg17[%c0, %c200], %0 {strides = array<i32>} : memref<16x256xbf16, #tpu.memory_space<vmem>>, vector<16x56xbf16>,
    %c0_0 = arith.constant 0 : index
    %c0_1 = arith.constant 0 : index
    %2 = vector.load %arg1[%c0_0, %c0_1] : memref<16x200xf32, #tpu.memory_space<vmem>>, vector<16x200xf32>
    %3 = arith.truncf %2 : vector<16x200xf32> to vector<16x200xbf16>
    %c0_2 = arith.constant 0 : index
    %c0_3 = arith.constant 0 : index
    %4 = vector.load %arg17[%c0_2, %c0_3] : memref<16x256xbf16, #tpu.memory_space<vmem>>, vector<16x200xbf16>
    tpu.vector_store %arg17[%c0_2, %c0_3], %3 {strides = array<i32>} : memref<16x256xbf16, #tpu.memory_space<vmem>>, vector<16x200xbf16>,
    %c0_4 = arith.constant 0 : index
    %c0_5 = arith.constant 0 : index
    %5 = vector.load %arg17[%c0_4, %c0_5] : memref<16x256xbf16, #tpu.memory_space<vmem>>, vector<16x256xbf16>
    %c0_6 = arith.constant 0 : index
    %c0_7 = arith.constant 0 : index
    %6 = vector.load %arg2[%c0_6, %c0_7] : memref<256x896xbf16, #tpu.memory_space<vmem>>, vector<256x896xbf16>
    %cst_8 = arith.constant dense<0.000000e+00> : vector<16x896xf32>
    %7 = tpu.matmul %5, %6, %cst_8 {dimension_numbers = #tpu.dot_dimension_numbers<[1], [0], [0], [1], [0, 0, 1, 1], [], []>} : vector<16x256xbf16>, vector<256x896xbf16>, vector<16x896xf32> -> vector<16x896xf32>
    %c0_9 = arith.constant 0 : index
    %c0_10 = arith.constant 0 : index
    %8 = vector.load %arg3[%c0_9, %c0_10] : memref<1x896xf32, #tpu.memory_space<vmem>>, vector<1x896xf32>
    %9 = vector.broadcast %8 : vector<1x896xf32> to vector<16x896xf32>
    %10 = arith.addf %7, %9 : vector<16x896xf32>
    %cst_11 = arith.constant 0.000000e+00 : f32
    %11 = vector.broadcast %cst_11 : f32 to vector<16x896xf32>
    %12 = arith.maximumf %10, %11 : vector<16x896xf32>
    %13 = arith.truncf %12 : vector<16x896xf32> to vector<16x896xbf16>
    %c0_12 = arith.constant 0 : index
    %c0_13 = arith.constant 0 : index
    %14 = vector.load %arg4[%c0_12, %c0_13] : memref<896x512xbf16, #tpu.memory_space<vmem>>, vector<896x512xbf16>
    %cst_14 = arith.constant dense<0.000000e+00> : vector<16x512xf32>
    %15 = tpu.matmul %13, %14, %cst_14 {dimension_numbers = #tpu.dot_dimension_numbers<[1], [0], [0], [1], [0, 0, 1, 1], [], []>} : vector<16x896xbf16>, vector<896x512xbf16>, vector<16x512xf32> -> vector<16x512xf32>
    %c0_15 = arith.constant 0 : index
    %c0_16 = arith.constant 0 : index
    %16 = vector.load %arg5[%c0_15, %c0_16] : memref<1x512xf32, #tpu.memory_space<vmem>>, vector<1x512xf32>
    %17 = vector.broadcast %16 : vector<1x512xf32> to vector<16x512xf32>
    %18 = arith.addf %15, %17 : vector<16x512xf32>
    %cst_17 = arith.constant 0.000000e+00 : f32
    %19 = vector.broadcast %cst_17 : f32 to vector<16x512xf32>
    %20 = arith.maximumf %18, %19 : vector<16x512xf32>
    %21 = arith.truncf %20 : vector<16x512xf32> to vector<16x512xbf16>
    %c0_18 = arith.constant 0 : index
    %c0_19 = arith.constant 0 : index
    %22 = vector.load %arg6[%c0_18, %c0_19] : memref<512x128xbf16, #tpu.memory_space<vmem>>, vector<512x128xbf16>
    %cst_20 = arith.constant dense<0.000000e+00> : vector<16x128xf32>
    %23 = tpu.matmul %21, %22, %cst_20 {dimension_numbers = #tpu.dot_dimension_numbers<[1], [0], [0], [1], [0, 0, 1, 1], [], []>} : vector<16x512xbf16>, vector<512x128xbf16>, vector<16x128xf32> -> vector<16x128xf32>
    %c0_21 = arith.constant 0 : index
    %c0_22 = arith.constant 0 : index
    %24 = vector.load %arg7[%c0_21, %c0_22] : memref<1x128xf32, #tpu.memory_space<vmem>>, vector<1x128xf32>
    %25 = vector.broadcast %24 : vector<1x128xf32> to vector<16x128xf32>
    %26 = arith.addf %23, %25 : vector<16x128xf32>
    %cst_23 = arith.constant 0.000000e+00 : f32
    %27 = vector.broadcast %cst_23 : f32 to vector<16x128xf32>
    %28 = arith.maximumf %26, %27 : vector<16x128xf32>
    %29 = arith.truncf %28 : vector<16x128xf32> to vector<16x128xbf16>
    %c0_24 = arith.constant 0 : index
    %c0_25 = arith.constant 0 : index
    %30 = vector.load %arg8[%c0_24, %c0_25] : memref<128x128xbf16, #tpu.memory_space<vmem>>, vector<128x128xbf16>
    %cst_26 = arith.constant dense<0.000000e+00> : vector<16x128xf32>
    %31 = tpu.matmul %29, %30, %cst_26 {dimension_numbers = #tpu.dot_dimension_numbers<[1], [0], [0], [1], [0, 0, 1, 1], [], []>} : vector<16x128xbf16>, vector<128x128xbf16>, vector<16x128xf32> -> vector<16x128xf32>
    %c0_27 = arith.constant 0 : index
    %c0_28 = arith.constant 0 : index
    %32 = vector.load %arg9[%c0_27, %c0_28] : memref<1x128xf32, #tpu.memory_space<vmem>>, vector<1x128xf32>
    %33 = vector.broadcast %32 : vector<1x128xf32> to vector<16x128xf32>
    %34 = arith.addf %31, %33 : vector<16x128xf32>
    %cst_29 = arith.constant 0.000000e+00 : f32
    %35 = vector.broadcast %cst_29 : f32 to vector<16x128xf32>
    %36 = arith.maximumf %34, %35 : vector<16x128xf32>
    %37 = arith.truncf %36 : vector<16x128xf32> to vector<16x128xbf16>
    %c0_30 = arith.constant 0 : index
    %c0_31 = arith.constant 0 : index
    %38 = vector.load %arg10[%c0_30, %c0_31] : memref<128x128xbf16, #tpu.memory_space<vmem>>, vector<128x128xbf16>
    %cst_32 = arith.constant dense<0.000000e+00> : vector<16x128xf32>
    %39 = tpu.matmul %37, %38, %cst_32 {dimension_numbers = #tpu.dot_dimension_numbers<[1], [0], [0], [1], [0, 0, 1, 1], [], []>} : vector<16x128xbf16>, vector<128x128xbf16>, vector<16x128xf32> -> vector<16x128xf32>
    %c0_33 = arith.constant 0 : index
    %c0_34 = arith.constant 0 : index
    %40 = vector.load %arg11[%c0_33, %c0_34] : memref<1x128xf32, #tpu.memory_space<vmem>>, vector<1x128xf32>
    %41 = vector.broadcast %40 : vector<1x128xf32> to vector<16x128xf32>
    %42 = arith.addf %39, %41 : vector<16x128xf32>
    %cst_35 = arith.constant 0.000000e+00 : f32
    %43 = vector.broadcast %cst_35 : f32 to vector<16x128xf32>
    %44 = arith.maximumf %42, %43 : vector<16x128xf32>
    %45 = arith.truncf %44 : vector<16x128xf32> to vector<16x128xbf16>
    %c0_36 = arith.constant 0 : index
    %c0_37 = arith.constant 0 : index
    %46 = vector.load %arg12[%c0_36, %c0_37] : memref<128x128xbf16, #tpu.memory_space<vmem>>, vector<128x128xbf16>
    %cst_38 = arith.constant dense<0.000000e+00> : vector<16x128xf32>
    %47 = tpu.matmul %45, %46, %cst_38 {dimension_numbers = #tpu.dot_dimension_numbers<[1], [0], [0], [1], [0, 0, 1, 1], [], []>} : vector<16x128xbf16>, vector<128x128xbf16>, vector<16x128xf32> -> vector<16x128xf32>
    %c0_39 = arith.constant 0 : index
    %c0_40 = arith.constant 0 : index
    %48 = vector.load %arg13[%c0_39, %c0_40] : memref<1x128xf32, #tpu.memory_space<vmem>>, vector<1x128xf32>
    %49 = vector.broadcast %48 : vector<1x128xf32> to vector<16x128xf32>
    %50 = arith.addf %47, %49 : vector<16x128xf32>
    %cst_41 = arith.constant 0.000000e+00 : f32
    %51 = vector.broadcast %cst_41 : f32 to vector<16x128xf32>
    %52 = arith.maximumf %50, %51 : vector<16x128xf32>
    %53 = arith.truncf %52 : vector<16x128xf32> to vector<16x128xbf16>
    %c0_42 = arith.constant 0 : index
    %c0_43 = arith.constant 0 : index
    %54 = vector.load %arg14[%c0_42, %c0_43] : memref<128x128xbf16, #tpu.memory_space<vmem>>, vector<128x128xbf16>
    %cst_44 = arith.constant dense<0.000000e+00> : vector<16x128xf32>
    %55 = tpu.matmul %53, %54, %cst_44 {dimension_numbers = #tpu.dot_dimension_numbers<[1], [0], [0], [1], [0, 0, 1, 1], [], []>} : vector<16x128xbf16>, vector<128x128xbf16>, vector<16x128xf32> -> vector<16x128xf32>
    %c0_45 = arith.constant 0 : index
    %c0_46 = arith.constant 0 : index
    %56 = vector.load %arg15[%c0_45, %c0_46] : memref<1x128xf32, #tpu.memory_space<vmem>>, vector<1x128xf32>
    %57 = vector.broadcast %56 : vector<1x128xf32> to vector<16x128xf32>
    %58 = arith.addf %55, %57 : vector<16x128xf32>
    %59 = arith.truncf %58 : vector<16x128xf32> to vector<16x128xbf16>
    %c0_47 = arith.constant 0 : index
    %c0_48 = arith.constant 0 : index
    %60 = vector.load %arg16[%c0_47, %c0_48] : memref<16x128xbf16, #tpu.memory_space<vmem>>, vector<16x128xbf16>
    tpu.vector_store %arg16[%c0_47, %c0_48], %59 {strides = array<i32>} : memref<16x128xbf16, #tpu.memory_space<vmem>>, vector<16x128xbf16>,
    return
  }
  func.func @transform_0(%arg0: i32) -> (i32, i32) {
    %c0_i32 = arith.constant 0 : i32
    %c0_i32_0 = arith.constant 0 : i32
    return %arg0, %c0_i32 : i32, i32
  }
  func.func @transform_1(%arg0: i32) -> (i32, i32) {
    %c0_i32 = arith.constant 0 : i32
    %c0_i32_0 = arith.constant 0 : i32
    %c0_i32_1 = arith.constant 0 : i32
    return %c0_i32, %c0_i32_0 : i32, i32
  }
  func.func @transform_2(%arg0: i32) -> (i32, i32) {
    %c0_i32 = arith.constant 0 : i32
    %c0_i32_0 = arith.constant 0 : i32
    %c0_i32_1 = arith.constant 0 : i32
    return %c0_i32, %c0_i32_0 : i32, i32
  }
  func.func @transform_3(%arg0: i32) -> (i32, i32) {
    %c0_i32 = arith.constant 0 : i32
    %c0_i32_0 = arith.constant 0 : i32
    %c0_i32_1 = arith.constant 0 : i32
    return %c0_i32, %c0_i32_0 : i32, i32
  }
  func.func @transform_4(%arg0: i32) -> (i32, i32) {
    %c0_i32 = arith.constant 0 : i32
    %c0_i32_0 = arith.constant 0 : i32
    %c0_i32_1 = arith.constant 0 : i32
    return %c0_i32, %c0_i32_0 : i32, i32
  }
  func.func @transform_5(%arg0: i32) -> (i32, i32) {
    %c0_i32 = arith.constant 0 : i32
    %c0_i32_0 = arith.constant 0 : i32
    %c0_i32_1 = arith.constant 0 : i32
    return %c0_i32, %c0_i32_0 : i32, i32
  }
  func.func @transform_6(%arg0: i32) -> (i32, i32) {
    %c0_i32 = arith.constant 0 : i32
    %c0_i32_0 = arith.constant 0 : i32
    %c0_i32_1 = arith.constant 0 : i32
    return %c0_i32, %c0_i32_0 : i32, i32
  }
  func.func @transform_7(%arg0: i32) -> (i32, i32) {
    %c0_i32 = arith.constant 0 : i32
    %c0_i32_0 = arith.constant 0 : i32
    %c0_i32_1 = arith.constant 0 : i32
    return %c0_i32, %c0_i32_0 : i32, i32
  }
  func.func @transform_8(%arg0: i32) -> (i32, i32) {
    %c0_i32 = arith.constant 0 : i32
    %c0_i32_0 = arith.constant 0 : i32
    %c0_i32_1 = arith.constant 0 : i32
    return %c0_i32, %c0_i32_0 : i32, i32
  }
  func.func @transform_9(%arg0: i32) -> (i32, i32) {
    %c0_i32 = arith.constant 0 : i32
    %c0_i32_0 = arith.constant 0 : i32
    %c0_i32_1 = arith.constant 0 : i32
    return %c0_i32, %c0_i32_0 : i32, i32
  }
  func.func @transform_10(%arg0: i32) -> (i32, i32) {
    %c0_i32 = arith.constant 0 : i32
    %c0_i32_0 = arith.constant 0 : i32
    %c0_i32_1 = arith.constant 0 : i32
    return %c0_i32, %c0_i32_0 : i32, i32
  }
  func.func @transform_11(%arg0: i32) -> (i32, i32) {
    %c0_i32 = arith.constant 0 : i32
    %c0_i32_0 = arith.constant 0 : i32
    %c0_i32_1 = arith.constant 0 : i32
    return %c0_i32, %c0_i32_0 : i32, i32
  }
  func.func @transform_12(%arg0: i32) -> (i32, i32) {
    %c0_i32 = arith.constant 0 : i32
    %c0_i32_0 = arith.constant 0 : i32
    %c0_i32_1 = arith.constant 0 : i32
    return %c0_i32, %c0_i32_0 : i32, i32
  }
  func.func @transform_13(%arg0: i32) -> (i32, i32) {
    %c0_i32 = arith.constant 0 : i32
    %c0_i32_0 = arith.constant 0 : i32
    %c0_i32_1 = arith.constant 0 : i32
    return %c0_i32, %c0_i32_0 : i32, i32
  }
  func.func @transform_14(%arg0: i32) -> (i32, i32) {
    %c0_i32 = arith.constant 0 : i32
    %c0_i32_0 = arith.constant 0 : i32
    %c0_i32_1 = arith.constant 0 : i32
    return %c0_i32, %c0_i32_0 : i32, i32
  }
  func.func @transform_15(%arg0: i32) -> (i32, i32) {
    %c0_i32 = arith.constant 0 : i32
    %c0_i32_0 = arith.constant 0 : i32
    return %arg0, %c0_i32 : i32, i32
  }
}

</mosaic_0001>

<llo_original>
// kernel: annmodel2_forward.1
$region0: #{annmodel2_forward.1}
  #allocation0 [shape = 'u32[]', space=smem, size = 0x4, offset = 0x4, fixed_abs, tag = 'smem constant byte address 0x4 - core index']
  #allocation1 [shape = 'u32[144,128]{1,0:T(1,128)}', space=vmem, size = 0x12000, scoped, tag = 'internal scratch']
  #allocation2 [shape = 'bf16[16,256]{1,0:T(16,128)(2,1)}', space=vmem, size = 0x2000, scoped, tag = 'scratch operand']
  %s0 = inlined_call_operand.hbm [shape: f32[16,200], index: 0, kind: input, shape index: {}]
  %s1 = inlined_call_operand.hbm [shape: bf16[256,896], index: 1, kind: input, shape index: {}]
  %s2 = inlined_call_operand.hbm [shape: f32[1,896], index: 2, kind: input, shape index: {}]
  %s3 = inlined_call_operand.hbm [shape: bf16[896,512], index: 3, kind: input, shape index: {}]
  %s4 = inlined_call_operand.hbm [shape: f32[1,512], index: 4, kind: input, shape index: {}]
  %s5 = inlined_call_operand.hbm [shape: bf16[512,128], index: 5, kind: input, shape index: {}]
  %s6 = inlined_call_operand.hbm [shape: f32[1,128], index: 6, kind: input, shape index: {}]
  %s7 = inlined_call_operand.hbm [shape: bf16[128,128], index: 7, kind: input, shape index: {}]
  %s8 = inlined_call_operand.hbm [shape: f32[1,128], index: 8, kind: input, shape index: {}]
  %s9 = inlined_call_operand.hbm [shape: bf16[128,128], index: 9, kind: input, shape index: {}]
  %s10 = inlined_call_operand.hbm [shape: f32[1,128], index: 10, kind: input, shape index: {}]
  %s11 = inlined_call_operand.hbm [shape: bf16[128,128], index: 11, kind: input, shape index: {}]
  %s12 = inlined_call_operand.hbm [shape: f32[1,128], index: 12, kind: input, shape index: {}]
  %s13 = inlined_call_operand.hbm [shape: bf16[128,128], index: 13, kind: input, shape index: {}]
  %s14 = inlined_call_operand.hbm [shape: f32[1,128], index: 14, kind: input, shape index: {}]
  %s15 = inlined_call_operand.hbm [shape: bf16[16,128], index: 15, kind: output, shape index: {}]
  %s16 = sld [smem:[#allocation0]]
  $region130: #{annmodel2_forward.1} parent=0
    _
  %s18 = ssub.s32 1, %s16
  %s19 = scalar_select 0, %s18, %s16
  $region1: #{annmodel2_forward.1} parent=0
    #allocation3 [shape = 'u8[16384]{0}', space=vmem, size = 0x4000, scoped, tag = 'input window, operand 0, single buffered']
    #allocation4 [shape = 's32[1]{0}', space=sflag, size = 0x4, scoped, tag = 'scoped memory for annmodel2_forward.1']
    #allocation5 [shape = 's32[1]{0}', space=sflag, size = 0x4, scoped, tag = 'scoped memory for annmodel2_forward.1']
    #allocation6 [shape = 'u8[458752]{0}', space=vmem, size = 0x70000, scoped, tag = 'input window, operand 1, single buffered']
    #allocation7 [shape = 's32[1]{0}', space=sflag, size = 0x4, scoped, tag = 'scoped memory for annmodel2_forward.1']
    #allocation8 [shape = 'u8[3584]{0}', space=vmem, size = 0x1000, scoped, tag = 'input window, operand 2, single buffered']
    #allocation9 [shape = 'u8[917504]{0}', space=vmem, size = 0xe0000, scoped, tag = 'input window, operand 3, single buffered']
    #allocation10 [shape = 's32[1]{0}', space=sflag, size = 0x4, scoped, tag = 'scoped memory for annmodel2_forward.1']
    #allocation11 [shape = 'u8[2048]{0}', space=vmem, size = 0x800, scoped, tag = 'input window, operand 4, single buffered']
    #allocation12 [shape = 'u8[131072]{0}', space=vmem, size = 0x20000, scoped, tag = 'input window, operand 5, single buffered']
    #allocation13 [shape = 's32[1]{0}', space=sflag, size = 0x4, scoped, tag = 'scoped memory for annmodel2_forward.1']
    #allocation14 [shape = 'u8[512]{0}', space=vmem, size = 0x400, scoped, tag = 'input window, operand 6, single buffered']
    #allocation15 [shape = 'u8[32768]{0}', space=vmem, size = 0x8000, scoped, tag = 'input window, operand 7, single buffered']
    #allocation16 [shape = 's32[1]{0}', space=sflag, size = 0x4, scoped, tag = 'scoped memory for annmodel2_forward.1']
    #allocation17 [shape = 'u8[512]{0}', space=vmem, size = 0x400, scoped, tag = 'input window, operand 8, single buffered']
    #allocation18 [shape = 'u8[32768]{0}', space=vmem, size = 0x8000, scoped, tag = 'input window, operand 9, single buffered']
    #allocation19 [shape = 's32[1]{0}', space=sflag, size = 0x4, scoped, tag = 'scoped memory for annmodel2_forward.1']
    #allocation20 [shape = 'u8[512]{0}', space=vmem, size = 0x400, scoped, tag = 'input window, operand 10, single buffered']
    #allocation21 [shape = 'u8[32768]{0}', space=vmem, size = 0x8000, scoped, tag = 'input window, operand 11, single buffered']
    #allocation22 [shape = 's32[1]{0}', space=sflag, size = 0x4, scoped, tag = 'scoped memory for annmodel2_forward.1']
    #allocation23 [shape = 'u8[512]{0}', space=vmem, size = 0x400, scoped, tag = 'input window, operand 12, single buffered']
    #allocation24 [shape = 'u8[32768]{0}', space=vmem, size = 0x8000, scoped, tag = 'input window, operand 13, single buffered']
    #allocation25 [shape = 's32[1]{0}', space=sflag, size = 0x4, scoped, tag = 'scoped memory for annmodel2_forward.1']
    #allocation26 [shape = 'u8[512]{0}', space=vmem, size = 0x400, scoped, tag = 'input window, operand 14, single buffered']
    #allocation27 [shape = 'u8[4096]{0}', space=vmem, size = 0x1000, scoped, tag = 'output window, operand 0, single buffered']
    %20 = vsyncpa [#allocation4], 0
    %21 = vsyncpa [#allocation7], 0
    %22 = vsyncpa [#allocation10], 0
    %23 = vsyncpa [#allocation13], 0
    %24 = vsyncpa [#allocation16], 0
    %25 = vsyncpa [#allocation19], 0
    %26 = vsyncpa [#allocation22], 0
    %27 = vsyncpa [#allocation25], 0
    %28 = vsyncpa [#allocation5], 0
    // Predicated region
    $region2: #{annmodel2_forward.1} parent=1 // pred_check
      _
    $region3: #{annmodel2_forward.1} parent=1 // pred_check_branch
      %30 = sbr.rel (0) target = $region5
    $region4: #{annmodel2_forward.1} parent=1 // pred_region
      %s32 = ssub.s32 512, 512
      %33 = vsyncadd [#allocation4], %s32
      %s34 = sshll.u32 [#allocation3], 4
      %s35 = int_to_ptr.vmem [resolvable:$true] %s34
      %40 = dma.hbm_to_vmem [thread:$0]  %s0, 512, %s35, [#allocation4], 256, 256, 16
    $region5: #{annmodel2_forward.1} parent=1 // pred_fallthru
      _
    // Predicated region
    $region6: #{annmodel2_forward.1} parent=1 // pred_check
      _
    $region7: #{annmodel2_forward.1} parent=1 // pred_check_branch
      %42 = sbr.rel (0) target = $region9
    $region8: #{annmodel2_forward.1} parent=1 // pred_region
      %s44 = ssub.s32 14336, 14336
      %45 = vsyncadd [#allocation7], %s44
      %s46 = sshll.u32 [#allocation6], 4
      %s47 = int_to_ptr.vmem [resolvable:$true] %s46
      %52 = dma.hbm_to_vmem [thread:$0]  %s1, 14336, %s47, [#allocation7], 448, 448, 28
    $region9: #{annmodel2_forward.1} parent=1 // pred_fallthru
      _
    // Predicated region
    $region10: #{annmodel2_forward.1} parent=1 // pred_check
      _
    $region11: #{annmodel2_forward.1} parent=1 // pred_check_branch
      %54 = sbr.rel (0) target = $region13
    $region12: #{annmodel2_forward.1} parent=1 // pred_region
      %s56 = ssub.s32 112, 112
      %57 = vsyncadd [#allocation7], %s56
      %s59 = sshll.u32 [#allocation8], 4
      %s60 = int_to_ptr.vmem [resolvable:$true] %s59
      %62 = dma.hbm_to_vmem [thread:$0]  %s2, 112, %s60, [#allocation7]
    $region13: #{annmodel2_forward.1} parent=1 // pred_fallthru
      _
    // Predicated region
    $region14: #{annmodel2_forward.1} parent=1 // pred_check
      _
    $region15: #{annmodel2_forward.1} parent=1 // pred_check_branch
      %64 = sbr.rel (0) target = $region17
    $region16: #{annmodel2_forward.1} parent=1 // pred_region
      %s66 = ssub.s32 28672, 28672
      %67 = vsyncadd [#allocation10], %s66
      %s68 = sshll.u32 [#allocation9], 4
      %s69 = int_to_ptr.vmem [resolvable:$true] %s68
      %74 = dma.hbm_to_vmem [thread:$0]  %s3, 28672, %s69, [#allocation10], 256, 256, 16
    $region17: #{annmodel2_forward.1} parent=1 // pred_fallthru
      _
    // Predicated region
    $region18: #{annmodel2_forward.1} parent=1 // pred_check
      _
    $region19: #{annmodel2_forward.1} parent=1 // pred_check_branch
      %76 = sbr.rel (0) target = $region21
    $region20: #{annmodel2_forward.1} parent=1 // pred_region
      %s78 = ssub.s32 64, 64
      %79 = vsyncadd [#allocation10], %s78
      %s81 = sshll.u32 [#allocation11], 4
      %s82 = int_to_ptr.vmem [resolvable:$true] %s81
      %84 = dma.hbm_to_vmem [thread:$0]  %s4, 64, %s82, [#allocation10]
    $region21: #{annmodel2_forward.1} parent=1 // pred_fallthru
      _
    // Predicated region
    $region22: #{annmodel2_forward.1} parent=1 // pred_check
      _
    $region23: #{annmodel2_forward.1} parent=1 // pred_check_branch
      %86 = sbr.rel (0) target = $region25
    $region24: #{annmodel2_forward.1} parent=1 // pred_region
      %s88 = ssub.s32 4096, 4096
      %89 = vsyncadd [#allocation13], %s88
      %s90 = sshll.u32 [#allocation12], 4
      %s91 = int_to_ptr.vmem [resolvable:$true] %s90
      %96 = dma.hbm_to_vmem [thread:$0]  %s5, 4096, %s91, [#allocation13], 64, 64, 4
    $region25: #{annmodel2_forward.1} parent=1 // pred_fallthru
      _
    // Predicated region
    $region26: #{annmodel2_forward.1} parent=1 // pred_check
      _
    $region27: #{annmodel2_forward.1} parent=1 // pred_check_branch
      %98 = sbr.rel (0) target = $region29
    $region28: #{annmodel2_forward.1} parent=1 // pred_region
      %s100 = ssub.s32 16, 16
      %101 = vsyncadd [#allocation13], %s100
      %s103 = sshll.u32 [#allocation14], 4
      %s104 = int_to_ptr.vmem [resolvable:$true] %s103
      %106 = dma.hbm_to_vmem [thread:$0]  %s6, 16, %s104, [#allocation13]
    $region29: #{annmodel2_forward.1} parent=1 // pred_fallthru
      _
    // Predicated region
    $region30: #{annmodel2_forward.1} parent=1 // pred_check
      _
    $region31: #{annmodel2_forward.1} parent=1 // pred_check_branch
      %108 = sbr.rel (0) target = $region33
    $region32: #{annmodel2_forward.1} parent=1 // pred_region
      %s110 = ssub.s32 1024, 1024
      %111 = vsyncadd [#allocation16], %s110
      %s112 = sshll.u32 [#allocation15], 4
      %s113 = int_to_ptr.vmem [resolvable:$true] %s112
      %118 = dma.hbm_to_vmem [thread:$0]  %s7, 1024, %s113, [#allocation16], 64, 64, 4
    $region33: #{annmodel2_forward.1} parent=1 // pred_fallthru
      _
    // Predicated region
    $region34: #{annmodel2_forward.1} parent=1 // pred_check
      _
    $region35: #{annmodel2_forward.1} parent=1 // pred_check_branch
      %120 = sbr.rel (0) target = $region37
    $region36: #{annmodel2_forward.1} parent=1 // pred_region
      %s122 = ssub.s32 16, 16
      %123 = vsyncadd [#allocation16], %s122
      %s125 = sshll.u32 [#allocation17], 4
      %s126 = int_to_ptr.vmem [resolvable:$true] %s125
      %128 = dma.hbm_to_vmem [thread:$0]  %s8, 16, %s126, [#allocation16]
    $region37: #{annmodel2_forward.1} parent=1 // pred_fallthru
      _
    // Predicated region
    $region38: #{annmodel2_forward.1} parent=1 // pred_check
      _
    $region39: #{annmodel2_forward.1} parent=1 // pred_check_branch
      %130 = sbr.rel (0) target = $region41
    $region40: #{annmodel2_forward.1} parent=1 // pred_region
      %s132 = ssub.s32 1024, 1024
      %133 = vsyncadd [#allocation19], %s132
      %s134 = sshll.u32 [#allocation18], 4
      %s135 = int_to_ptr.vmem [resolvable:$true] %s134
      %140 = dma.hbm_to_vmem [thread:$0]  %s9, 1024, %s135, [#allocation19], 64, 64, 4
    $region41: #{annmodel2_forward.1} parent=1 // pred_fallthru
      _
    // Predicated region
    $region42: #{annmodel2_forward.1} parent=1 // pred_check
      _
    $region43: #{annmodel2_forward.1} parent=1 // pred_check_branch
      %142 = sbr.rel (0) target = $region45
    $region44: #{annmodel2_forward.1} parent=1 // pred_region
      %s144 = ssub.s32 16, 16
      %145 = vsyncadd [#allocation19], %s144
      %s147 = sshll.u32 [#allocation20], 4
      %s148 = int_to_ptr.vmem [resolvable:$true] %s147
      %150 = dma.hbm_to_vmem [thread:$0]  %s10, 16, %s148, [#allocation19]
    $region45: #{annmodel2_forward.1} parent=1 // pred_fallthru
      _
    // Predicated region
    $region46: #{annmodel2_forward.1} parent=1 // pred_check
      _
    $region47: #{annmodel2_forward.1} parent=1 // pred_check_branch
      %152 = sbr.rel (0) target = $region49
    $region48: #{annmodel2_forward.1} parent=1 // pred_region
      %s154 = ssub.s32 1024, 1024
      %155 = vsyncadd [#allocation22], %s154
      %s156 = sshll.u32 [#allocation21], 4
      %s157 = int_to_ptr.vmem [resolvable:$true] %s156
      %162 = dma.hbm_to_vmem [thread:$0]  %s11, 1024, %s157, [#allocation22], 64, 64, 4
    $region49: #{annmodel2_forward.1} parent=1 // pred_fallthru
      _
    // Predicated region
    $region50: #{annmodel2_forward.1} parent=1 // pred_check
      _
    $region51: #{annmodel2_forward.1} parent=1 // pred_check_branch
      %164 = sbr.rel (0) target = $region53
    $region52: #{annmodel2_forward.1} parent=1 // pred_region
      %s166 = ssub.s32 16, 16
      %167 = vsyncadd [#allocation22], %s166
      %s169 = sshll.u32 [#allocation23], 4
      %s170 = int_to_ptr.vmem [resolvable:$true] %s169
      %172 = dma.hbm_to_vmem [thread:$0]  %s12, 16, %s170, [#allocation22]
    $region53: #{annmodel2_forward.1} parent=1 // pred_fallthru
      _
    // Predicated region
    $region54: #{annmodel2_forward.1} parent=1 // pred_check
      _
    $region55: #{annmodel2_forward.1} parent=1 // pred_check_branch
      %174 = sbr.rel (0) target = $region57
    $region56: #{annmodel2_forward.1} parent=1 // pred_region
      %s176 = ssub.s32 1024, 1024
      %177 = vsyncadd [#allocation25], %s176
      %s178 = sshll.u32 [#allocation24], 4
      %s179 = int_to_ptr.vmem [resolvable:$true] %s178
      %184 = dma.hbm_to_vmem [thread:$0]  %s13, 1024, %s179, [#allocation25], 64, 64, 4
    $region57: #{annmodel2_forward.1} parent=1 // pred_fallthru
      _
    // Predicated region
    $region58: #{annmodel2_forward.1} parent=1 // pred_check
      _
    $region59: #{annmodel2_forward.1} parent=1 // pred_check_branch
      %186 = sbr.rel (0) target = $region61
    $region60: #{annmodel2_forward.1} parent=1 // pred_region
      %s188 = ssub.s32 16, 16
      %189 = vsyncadd [#allocation25], %s188
      %s191 = sshll.u32 [#allocation26], 4
      %s192 = int_to_ptr.vmem [resolvable:$true] %s191
      %194 = dma.hbm_to_vmem [thread:$0]  %s14, 16, %s192, [#allocation25]
    $region61: #{annmodel2_forward.1} parent=1 // pred_fallthru
      _
    // Predicated region
    $region62: #{annmodel2_forward.1} parent=1 // pred_check
      _
    $region63: #{annmodel2_forward.1} parent=1 // pred_check_branch
      %196 = sbr.rel (0) target = $region65
    $region64: #{annmodel2_forward.1} parent=1 // pred_region
      %197 = dma.done [#allocation4], 512
    $region65: #{annmodel2_forward.1} parent=1 // pred_fallthru
      _
    // Predicated region
    $region66: #{annmodel2_forward.1} parent=1 // pred_check
      _
    $region67: #{annmodel2_forward.1} parent=1 // pred_check_branch
      %199 = sbr.rel (0) target = $region69
    $region68: #{annmodel2_forward.1} parent=1 // pred_region
      %200 = dma.done [#allocation7], 14336
    $region69: #{annmodel2_forward.1} parent=1 // pred_fallthru
      _
    // Predicated region
    $region70: #{annmodel2_forward.1} parent=1 // pred_check
      _
    $region71: #{annmodel2_forward.1} parent=1 // pred_check_branch
      %202 = sbr.rel (0) target = $region73
    $region72: #{annmodel2_forward.1} parent=1 // pred_region
      %203 = dma.done [#allocation7], 112
    $region73: #{annmodel2_forward.1} parent=1 // pred_fallthru
      _
    // Predicated region
    $region74: #{annmodel2_forward.1} parent=1 // pred_check
      _
    $region75: #{annmodel2_forward.1} parent=1 // pred_check_branch
      %205 = sbr.rel (0) target = $region77
    $region76: #{annmodel2_forward.1} parent=1 // pred_region
      %206 = dma.done [#allocation10], 28672
    $region77: #{annmodel2_forward.1} parent=1 // pred_fallthru
      _
    // Predicated region
    $region78: #{annmodel2_forward.1} parent=1 // pred_check
      _
    $region79: #{annmodel2_forward.1} parent=1 // pred_check_branch
      %208 = sbr.rel (0) target = $region81
    $region80: #{annmodel2_forward.1} parent=1 // pred_region
      %209 = dma.done [#allocation10], 64
    $region81: #{annmodel2_forward.1} parent=1 // pred_fallthru
      _
    // Predicated region
    $region82: #{annmodel2_forward.1} parent=1 // pred_check
      _
    $region83: #{annmodel2_forward.1} parent=1 // pred_check_branch
      %211 = sbr.rel (0) target = $region85
    $region84: #{annmodel2_forward.1} parent=1 // pred_region
      %212 = dma.done [#allocation13], 4096
    $region85: #{annmodel2_forward.1} parent=1 // pred_fallthru
      _
    // Predicated region
    $region86: #{annmodel2_forward.1} parent=1 // pred_check
      _
    $region87: #{annmodel2_forward.1} parent=1 // pred_check_branch
      %214 = sbr.rel (0) target = $region89
    $region88: #{annmodel2_forward.1} parent=1 // pred_region
      %215 = dma.done [#allocation13], 16
    $region89: #{annmodel2_forward.1} parent=1 // pred_fallthru
      _
    // Predicated region
    $region90: #{annmodel2_forward.1} parent=1 // pred_check
      _
    $region91: #{annmodel2_forward.1} parent=1 // pred_check_branch
      %217 = sbr.rel (0) target = $region93
    $region92: #{annmodel2_forward.1} parent=1 // pred_region
      %218 = dma.done [#allocation16], 1024
    $region93: #{annmodel2_forward.1} parent=1 // pred_fallthru
      _
    // Predicated region
    $region94: #{annmodel2_forward.1} parent=1 // pred_check
      _
    $region95: #{annmodel2_forward.1} parent=1 // pred_check_branch
      %220 = sbr.rel (0) target = $region97
    $region96: #{annmodel2_forward.1} parent=1 // pred_region
      %221 = dma.done [#allocation16], 16
    $region97: #{annmodel2_forward.1} parent=1 // pred_fallthru
      _
    // Predicated region
    $region98: #{annmodel2_forward.1} parent=1 // pred_check
      _
    $region99: #{annmodel2_forward.1} parent=1 // pred_check_branch
      %223 = sbr.rel (0) target = $region101
    $region100: #{annmodel2_forward.1} parent=1 // pred_region
      %224 = dma.done [#allocation19], 1024
    $region101: #{annmodel2_forward.1} parent=1 // pred_fallthru
      _
    // Predicated region
    $region102: #{annmodel2_forward.1} parent=1 // pred_check
      _
    $region103: #{annmodel2_forward.1} parent=1 // pred_check_branch
      %226 = sbr.rel (0) target = $region105
    $region104: #{annmodel2_forward.1} parent=1 // pred_region
      %227 = dma.done [#allocation19], 16
    $region105: #{annmodel2_forward.1} parent=1 // pred_fallthru
      _
    // Predicated region
    $region106: #{annmodel2_forward.1} parent=1 // pred_check
      _
    $region107: #{annmodel2_forward.1} parent=1 // pred_check_branch
      %229 = sbr.rel (0) target = $region109
    $region108: #{annmodel2_forward.1} parent=1 // pred_region
      %230 = dma.done [#allocation22], 1024
    $region109: #{annmodel2_forward.1} parent=1 // pred_fallthru
      _
    // Predicated region
    $region110: #{annmodel2_forward.1} parent=1 // pred_check
      _
    $region111: #{annmodel2_forward.1} parent=1 // pred_check_branch
      %232 = sbr.rel (0) target = $region113
    $region112: #{annmodel2_forward.1} parent=1 // pred_region
      %233 = dma.done [#allocation22], 16
    $region113: #{annmodel2_forward.1} parent=1 // pred_fallthru
      _
    // Predicated region
    $region114: #{annmodel2_forward.1} parent=1 // pred_check
      _
    $region115: #{annmodel2_forward.1} parent=1 // pred_check_branch
      %235 = sbr.rel (0) target = $region117
    $region116: #{annmodel2_forward.1} parent=1 // pred_region
      %236 = dma.done [#allocation25], 1024
    $region117: #{annmodel2_forward.1} parent=1 // pred_fallthru
      _
    // Predicated region
    $region118: #{annmodel2_forward.1} parent=1 // pred_check
      _
    $region119: #{annmodel2_forward.1} parent=1 // pred_check_branch
      %238 = sbr.rel (0) target = $region121
    $region120: #{annmodel2_forward.1} parent=1 // pred_region
      %239 = dma.done [#allocation25], 16
    $region121: #{annmodel2_forward.1} parent=1 // pred_fallthru
      _
    %vm241 = vcmask 1048128
    %242 = vst.msk [vmem:[#allocation2 + $0x8] sm:$0xff] %vm241, 0
    %v243 = vld [vmem:[#allocation3] sm:$0xff]
    %v244 = vld [vmem:[#allocation3 + $0x8] sm:$0xff]
    %v245 = vld [vmem:[#allocation3 + $0x10] sm:$0xff]
    %v246 = vld [vmem:[#allocation3 + $0x18] sm:$0xff]
    %v247 = vpack.c.bf16 %v245, %v243
    %v248 = vpack.c.bf16 %v246, %v244
    %249 = vst [vmem:[#allocation2] sm:$0xff] %v247
    %vm250 = vcmask 588800
    %251 = vst.msk [vmem:[#allocation2 + $0x8] sm:$0xff] %vm250, %v248
    %v252 = vld [vmem:[#allocation2] sm:$0xff]
    %v253 = vld [vmem:[#allocation2 + $0x8] sm:$0xff]
    %v254 = vld [vmem:[#allocation6] sm:$0xff]
    %v255 = vld [vmem:[#allocation6 + $0x8] sm:$0xff]
    %v256 = vld [vmem:[#allocation6 + $0x10] sm:$0xff]
    %v257 = vld [vmem:[#allocation6 + $0x18] sm:$0xf]
    %v258 = vld [vmem:[#allocation6 + $0x1c] sm:$0xff]
    %v259 = vld [vmem:[#allocation6 + $0x24] sm:$0xff]
    %v260 = vld [vmem:[#allocation6 + $0x2c] sm:$0xff]
    %v261 = vld [vmem:[#allocation6 + $0x34] sm:$0xf]
    %v262 = vld [vmem:[#allocation6 + $0x38] sm:$0xff]
    %v263 = vld [vmem:[#allocation6 + $0x40] sm:$0xff]
    %v264 = vld [vmem:[#allocation6 + $0x48] sm:$0xff]
    %v265 = vld [vmem:[#allocation6 + $0x50] sm:$0xf]
    %v266 = vld [vmem:[#allocation6 + $0x54] sm:$0xff]
    %v267 = vld [vmem:[#allocation6 + $0x5c] sm:$0xff]
    %v268 = vld [vmem:[#allocation6 + $0x64] sm:$0xff]
    %v269 = vld [vmem:[#allocation6 + $0x6c] sm:$0xf]
    %v270 = vld [vmem:[#allocation6 + $0x70] sm:$0xff]
    %v271 = vld [vmem:[#allocation6 + $0x78] sm:$0xff]
    %v272 = vld [vmem:[#allocation6 + $0x80] sm:$0xff]
    %v273 = vld [vmem:[#allocation6 + $0x88] sm:$0xf]
    %v274 = vld [vmem:[#allocation6 + $0x8c] sm:$0xff]
    %v275 = vld [vmem:[#allocation6 + $0x94] sm:$0xff]
    %v276 = vld [vmem:[#allocation6 + $0x9c] sm:$0xff]
    %v277 = vld [vmem:[#allocation6 + $0xa4] sm:$0xf]
    %v278 = vld [vmem:[#allocation6 + $0xa8] sm:$0xff]
    %v279 = vld [vmem:[#allocation6 + $0xb0] sm:$0xff]
    %v280 = vld [vmem:[#allocation6 + $0xb8] sm:$0xff]
    %v281 = vld [vmem:[#allocation6 + $0xc0] sm:$0xf]
    %v282 = vld [vmem:[#allocation6 + $0xc4] sm:$0xff]
    %v283 = vld [vmem:[#allocation6 + $0xcc] sm:$0xff]
    %v284 = vld [vmem:[#allocation6 + $0xd4] sm:$0xff]
    %v285 = vld [vmem:[#allocation6 + $0xdc] sm:$0xf]
    %v286 = vld [vmem:[#allocation6 + $0xe0] sm:$0xff]
    %v287 = vld [vmem:[#allocation6 + $0xe8] sm:$0xff]
    %v288 = vld [vmem:[#allocation6 + $0xf0] sm:$0xff]
    %v289 = vld [vmem:[#allocation6 + $0xf8] sm:$0xf]
    %v290 = vld [vmem:[#allocation6 + $0xfc] sm:$0xff]
    %v291 = vld [vmem:[#allocation6 + $0x104] sm:$0xff]
    %v292 = vld [vmem:[#allocation6 + $0x10c] sm:$0xff]
    %v293 = vld [vmem:[#allocation6 + $0x114] sm:$0xf]
    %v294 = vld [vmem:[#allocation6 + $0x118] sm:$0xff]
    %v295 = vld [vmem:[#allocation6 + $0x120] sm:$0xff]
    %v296 = vld [vmem:[#allocation6 + $0x128] sm:$0xff]
    %v297 = vld [vmem:[#allocation6 + $0x130] sm:$0xf]
    %v298 = vld [vmem:[#allocation6 + $0x134] sm:$0xff]
    %v299 = vld [vmem:[#allocation6 + $0x13c] sm:$0xff]
    %v300 = vld [vmem:[#allocation6 + $0x144] sm:$0xff]
    %v301 = vld [vmem:[#allocation6 + $0x14c] sm:$0xf]
    %v302 = vld [vmem:[#allocation6 + $0x150] sm:$0xff]
    %v303 = vld [vmem:[#allocation6 + $0x158] sm:$0xff]
    %v304 = vld [vmem:[#allocation6 + $0x160] sm:$0xff]
    %v305 = vld [vmem:[#allocation6 + $0x168] sm:$0xf]
    %v306 = vld [vmem:[#allocation6 + $0x16c] sm:$0xff]
    %v307 = vld [vmem:[#allocation6 + $0x174] sm:$0xff]
    %v308 = vld [vmem:[#allocation6 + $0x17c] sm:$0xff]
    %v309 = vld [vmem:[#allocation6 + $0x184] sm:$0xf]
    %v310 = vld [vmem:[#allocation6 + $0x188] sm:$0xff]
    %v311 = vld [vmem:[#allocation6 + $0x190] sm:$0xff]
    %v312 = vld [vmem:[#allocation6 + $0x198] sm:$0xff]
    %v313 = vld [vmem:[#allocation6 + $0x1a0] sm:$0xf]
    %v314 = vld [vmem:[#allocation6 + $0x1a4] sm:$0xff]
    %v315 = vld [vmem:[#allocation6 + $0x1ac] sm:$0xff]
    %v316 = vld [vmem:[#allocation6 + $0x1b4] sm:$0xff]
    %v317 = vld [vmem:[#allocation6 + $0x1bc] sm:$0xf]
    %v318 = vld [vmem:[#allocation6 + $0x1c0] sm:$0xff]
    %v319 = vld [vmem:[#allocation6 + $0x1c8] sm:$0xff]
    %v320 = vld [vmem:[#allocation6 + $0x1d0] sm:$0xff]
    %v321 = vld [vmem:[#allocation6 + $0x1d8] sm:$0xf]
    %v322 = vld [vmem:[#allocation6 + $0x1dc] sm:$0xff]
    %v323 = vld [vmem:[#allocation6 + $0x1e4] sm:$0xff]
    %v324 = vld [vmem:[#allocation6 + $0x1ec] sm:$0xff]
    %v325 = vld [vmem:[#allocation6 + $0x1f4] sm:$0xf]
    %v326 = vld [vmem:[#allocation6 + $0x1f8] sm:$0xff]
    %v327 = vld [vmem:[#allocation6 + $0x200] sm:$0xff]
    %v328 = vld [vmem:[#allocation6 + $0x208] sm:$0xff]
    %v329 = vld [vmem:[#allocation6 + $0x210] sm:$0xf]
    %v330 = vld [vmem:[#allocation6 + $0x214] sm:$0xff]
    %v331 = vld [vmem:[#allocation6 + $0x21c] sm:$0xff]
    %v332 = vld [vmem:[#allocation6 + $0x224] sm:$0xff]
    %v333 = vld [vmem:[#allocation6 + $0x22c] sm:$0xf]
    %v334 = vld [vmem:[#allocation6 + $0x230] sm:$0xff]
    %v335 = vld [vmem:[#allocation6 + $0x238] sm:$0xff]
    %v336 = vld [vmem:[#allocation6 + $0x240] sm:$0xff]
    %v337 = vld [vmem:[#allocation6 + $0x248] sm:$0xf]
    %v338 = vld [vmem:[#allocation6 + $0x24c] sm:$0xff]
    %v339 = vld [vmem:[#allocation6 + $0x254] sm:$0xff]
    %v340 = vld [vmem:[#allocation6 + $0x25c] sm:$0xff]
    %v341 = vld [vmem:[#allocation6 + $0x264] sm:$0xf]
    %v342 = vld [vmem:[#allocation6 + $0x268] sm:$0xff]
    %v343 = vld [vmem:[#allocation6 + $0x270] sm:$0xff]
    %v344 = vld [vmem:[#allocation6 + $0x278] sm:$0xff]
    %v345 = vld [vmem:[#allocation6 + $0x280] sm:$0xf]
    %v346 = vld [vmem:[#allocation6 + $0x284] sm:$0xff]
    %v347 = vld [vmem:[#allocation6 + $0x28c] sm:$0xff]
    %v348 = vld [vmem:[#allocation6 + $0x294] sm:$0xff]
    %v349 = vld [vmem:[#allocation6 + $0x29c] sm:$0xf]
    %v350 = vld [vmem:[#allocation6 + $0x2a0] sm:$0xff]
    %v351 = vld [vmem:[#allocation6 + $0x2a8] sm:$0xff]
    %v352 = vld [vmem:[#allocation6 + $0x2b0] sm:$0xff]
    %v353 = vld [vmem:[#allocation6 + $0x2b8] sm:$0xf]
    %v354 = vld [vmem:[#allocation6 + $0x2bc] sm:$0xff]
    %v355 = vld [vmem:[#allocation6 + $0x2c4] sm:$0xff]
    %v356 = vld [vmem:[#allocation6 + $0x2cc] sm:$0xff]
    %v357 = vld [vmem:[#allocation6 + $0x2d4] sm:$0xf]
    %v358 = vld [vmem:[#allocation6 + $0x2d8] sm:$0xff]
    %v359 = vld [vmem:[#allocation6 + $0x2e0] sm:$0xff]
    %v360 = vld [vmem:[#allocation6 + $0x2e8] sm:$0xff]
    %v361 = vld [vmem:[#allocation6 + $0x2f0] sm:$0xf]
    %v362 = vld [vmem:[#allocation6 + $0x2f4] sm:$0xff]
    %v363 = vld [vmem:[#allocation6 + $0x2fc] sm:$0xff]
    %v364 = vld [vmem:[#allocation6 + $0x304] sm:$0xff]
    %v365 = vld [vmem:[#allocation6 + $0x30c] sm:$0xf]
    %v366 = vld [vmem:[#allocation6 + $0x310] sm:$0xff]
    %v367 = vld [vmem:[#allocation6 + $0x318] sm:$0xff]
    %v368 = vld [vmem:[#allocation6 + $0x320] sm:$0xff]
    %v369 = vld [vmem:[#allocation6 + $0x328] sm:$0xf]
    %v370 = vld [vmem:[#allocation6 + $0x32c] sm:$0xff]
    %v371 = vld [vmem:[#allocation6 + $0x334] sm:$0xff]
    %v372 = vld [vmem:[#allocation6 + $0x33c] sm:$0xff]
    %v373 = vld [vmem:[#allocation6 + $0x344] sm:$0xf]
    %v374 = vld [vmem:[#allocation6 + $0x348] sm:$0xff]
    %v375 = vld [vmem:[#allocation6 + $0x350] sm:$0xff]
    %v376 = vld [vmem:[#allocation6 + $0x358] sm:$0xff]
    %v377 = vld [vmem:[#allocation6 + $0x360] sm:$0xf]
    %v378 = vld [vmem:[#allocation6 + $0x364] sm:$0xff]
    %v379 = vld [vmem:[#allocation6 + $0x36c] sm:$0xff]
    %v380 = vld [vmem:[#allocation6 + $0x374] sm:$0xff]
    %v381 = vld [vmem:[#allocation6 + $0x37c] sm:$0xf]
    %v382 = vld [vmem:[#allocation8] sm:$0xff]
    %v384 = vlaneseq
    %v385 = vshrl.u32 %v384, 7
    %v386 = vsub.s32 0, %v385
    %v387 = vrot.slane %v382, %v386
    %v388 = vlaneseq
    %v389 = vshrl.u32 %v388, 7
    %v390 = vsub.s32 1, %v389
    %v391 = vrot.slane %v382, %v390
    %v392 = vlaneseq
    %v393 = vshrl.u32 %v392, 7
    %v394 = vsub.s32 2, %v393
    %v395 = vrot.slane %v382, %v394
    %v396 = vlaneseq
    %v397 = vshrl.u32 %v396, 7
    %v398 = vsub.s32 3, %v397
    %v399 = vrot.slane %v382, %v398
    %v400 = vlaneseq
    %v401 = vshrl.u32 %v400, 7
    %v402 = vsub.s32 4, %v401
    %v403 = vrot.slane %v382, %v402
    %v404 = vlaneseq
    %v405 = vshrl.u32 %v404, 7
    %v406 = vsub.s32 5, %v405
    %v407 = vrot.slane %v382, %v406
    %v408 = vlaneseq
    %v409 = vshrl.u32 %v408, 7
    %v410 = vsub.s32 6, %v409
    %v411 = vrot.slane %v382, %v410
    %v547 = vunpack.c.l.b16 %v254
    %v548 = vunpack.c.h.b16 %v254
    %v549 = vunpack.c.l.b16 %v255
    %v550 = vunpack.c.h.b16 %v255
    %v551 = vunpack.c.l.b16 %v256
    %v552 = vunpack.c.h.b16 %v256
    %v553 = vunpack.c.l.b16 %v257
    %v554 = vunpack.c.l.b16 %v258
    %v555 = vunpack.c.h.b16 %v258
    %v556 = vunpack.c.l.b16 %v259
    %v557 = vunpack.c.h.b16 %v259
    %v558 = vunpack.c.l.b16 %v260
    %v559 = vunpack.c.h.b16 %v260
    %v560 = vunpack.c.l.b16 %v261
    %v561 = vunpack.c.l.b16 %v262
    %v562 = vunpack.c.h.b16 %v262
    %v563 = vunpack.c.l.b16 %v263
    %v564 = vunpack.c.h.b16 %v263
    %v565 = vunpack.c.l.b16 %v264
    %v566 = vunpack.c.h.b16 %v264
    %v567 = vunpack.c.l.b16 %v265
    %v568 = vunpack.c.l.b16 %v266
    %v569 = vunpack.c.h.b16 %v266
    %v570 = vunpack.c.l.b16 %v267
    %v571 = vunpack.c.h.b16 %v267
    %v572 = vunpack.c.l.b16 %v268
    %v573 = vunpack.c.h.b16 %v268
    %v574 = vunpack.c.l.b16 %v269
    %v575 = vunpack.c.l.b16 %v270
    %v576 = vunpack.c.h.b16 %v270
    %v577 = vunpack.c.l.b16 %v271
    %v578 = vunpack.c.h.b16 %v271
    %v579 = vunpack.c.l.b16 %v272
    %v580 = vunpack.c.h.b16 %v272
    %v581 = vunpack.c.l.b16 %v273
    %v582 = vunpack.c.l.b16 %v274
    %v583 = vunpack.c.h.b16 %v274
    %v584 = vunpack.c.l.b16 %v275
    %v585 = vunpack.c.h.b16 %v275
    %v586 = vunpack.c.l.b16 %v276
    %v587 = vunpack.c.h.b16 %v276
    %v588 = vunpack.c.l.b16 %v277
    %v589 = vunpack.c.l.b16 %v278
    %v590 = vunpack.c.h.b16 %v278
    %v591 = vunpack.c.l.b16 %v279
    %v592 = vunpack.c.h.b16 %v279
    %v593 = vunpack.c.l.b16 %v280
    %v594 = vunpack.c.h.b16 %v280
    %v595 = vunpack.c.l.b16 %v281
    %v596 = vunpack.c.l.b16 %v282
    %v597 = vunpack.c.h.b16 %v282
    %v598 = vunpack.c.l.b16 %v283
    %v599 = vunpack.c.h.b16 %v283
    %v600 = vunpack.c.l.b16 %v284
    %v601 = vunpack.c.h.b16 %v284
    %v602 = vunpack.c.l.b16 %v285
    %v603 = vunpack.c.l.b16 %v286
    %v604 = vunpack.c.h.b16 %v286
    %v605 = vunpack.c.l.b16 %v287
    %v606 = vunpack.c.h.b16 %v287
    %v607 = vunpack.c.l.b16 %v288
    %v608 = vunpack.c.h.b16 %v288
    %v609 = vunpack.c.l.b16 %v289
    %v610 = vunpack.c.l.b16 %v290
    %v611 = vunpack.c.h.b16 %v290
    %v612 = vunpack.c.l.b16 %v291
    %v613 = vunpack.c.h.b16 %v291
    %v614 = vunpack.c.l.b16 %v292
    %v615 = vunpack.c.h.b16 %v292
    %v616 = vunpack.c.l.b16 %v293
    %v617 = vunpack.c.l.b16 %v294
    %v618 = vunpack.c.h.b16 %v294
    %v619 = vunpack.c.l.b16 %v295
    %v620 = vunpack.c.h.b16 %v295
    %v621 = vunpack.c.l.b16 %v296
    %v622 = vunpack.c.h.b16 %v296
    %v623 = vunpack.c.l.b16 %v297
    %v624 = vunpack.c.l.b16 %v298
    %v625 = vunpack.c.h.b16 %v298
    %v626 = vunpack.c.l.b16 %v299
    %v627 = vunpack.c.h.b16 %v299
    %v628 = vunpack.c.l.b16 %v300
    %v629 = vunpack.c.h.b16 %v300
    %v630 = vunpack.c.l.b16 %v301
    %v631 = vunpack.c.l.b16 %v302
    %v632 = vunpack.c.h.b16 %v302
    %v633 = vunpack.c.l.b16 %v303
    %v634 = vunpack.c.h.b16 %v303
    %v635 = vunpack.c.l.b16 %v304
    %v636 = vunpack.c.h.b16 %v304
    %v637 = vunpack.c.l.b16 %v305
    %v638 = vunpack.c.l.b16 %v306
    %v639 = vunpack.c.h.b16 %v306
    %v640 = vunpack.c.l.b16 %v307
    %v641 = vunpack.c.h.b16 %v307
    %v642 = vunpack.c.l.b16 %v308
    %v643 = vunpack.c.h.b16 %v308
    %v644 = vunpack.c.l.b16 %v309
    %v645 = vunpack.c.l.b16 %v310
    %v646 = vunpack.c.h.b16 %v310
    %v647 = vunpack.c.l.b16 %v311
    %v648 = vunpack.c.h.b16 %v311
    %v649 = vunpack.c.l.b16 %v312
    %v650 = vunpack.c.h.b16 %v312
    %v651 = vunpack.c.l.b16 %v313
    %v652 = vunpack.c.l.b16 %v314
    %v653 = vunpack.c.h.b16 %v314
    %v654 = vunpack.c.l.b16 %v315
    %v655 = vunpack.c.h.b16 %v315
    %v656 = vunpack.c.l.b16 %v316
    %v657 = vunpack.c.h.b16 %v316
    %v658 = vunpack.c.l.b16 %v317
    %v659 = vunpack.c.l.b16 %v318
    %v660 = vunpack.c.h.b16 %v318
    %v661 = vunpack.c.l.b16 %v319
    %v662 = vunpack.c.h.b16 %v319
    %v663 = vunpack.c.l.b16 %v320
    %v664 = vunpack.c.h.b16 %v320
    %v665 = vunpack.c.l.b16 %v321
    %v666 = vunpack.c.l.b16 %v322
    %v667 = vunpack.c.h.b16 %v322
    %v668 = vunpack.c.l.b16 %v323
    %v669 = vunpack.c.h.b16 %v323
    %v670 = vunpack.c.l.b16 %v324
    %v671 = vunpack.c.h.b16 %v324
    %v672 = vunpack.c.l.b16 %v325
    %v673 = vunpack.c.l.b16 %v326
    %v674 = vunpack.c.h.b16 %v326
    %v675 = vunpack.c.l.b16 %v327
    %v676 = vunpack.c.h.b16 %v327
    %v677 = vunpack.c.l.b16 %v328
    %v678 = vunpack.c.h.b16 %v328
    %v679 = vunpack.c.l.b16 %v329
    %v680 = vunpack.c.l.b16 %v330
    %v681 = vunpack.c.h.b16 %v330
    %v682 = vunpack.c.l.b16 %v331
    %v683 = vunpack.c.h.b16 %v331
    %v684 = vunpack.c.l.b16 %v332
    %v685 = vunpack.c.h.b16 %v332
    %v686 = vunpack.c.l.b16 %v333
    %v687 = vunpack.c.l.b16 %v334
    %v688 = vunpack.c.h.b16 %v334
    %v689 = vunpack.c.l.b16 %v335
    %v690 = vunpack.c.h.b16 %v335
    %v691 = vunpack.c.l.b16 %v336
    %v692 = vunpack.c.h.b16 %v336
    %v693 = vunpack.c.l.b16 %v337
    %v694 = vunpack.c.l.b16 %v338
    %v695 = vunpack.c.h.b16 %v338
    %v696 = vunpack.c.l.b16 %v339
    %v697 = vunpack.c.h.b16 %v339
    %v698 = vunpack.c.l.b16 %v340
    %v699 = vunpack.c.h.b16 %v340
    %v700 = vunpack.c.l.b16 %v341
    %v701 = vunpack.c.l.b16 %v342
    %v702 = vunpack.c.h.b16 %v342
    %v703 = vunpack.c.l.b16 %v343
    %v704 = vunpack.c.h.b16 %v343
    %v705 = vunpack.c.l.b16 %v344
    %v706 = vunpack.c.h.b16 %v344
    %v707 = vunpack.c.l.b16 %v345
    %v708 = vunpack.c.l.b16 %v346
    %v709 = vunpack.c.h.b16 %v346
    %v710 = vunpack.c.l.b16 %v347
    %v711 = vunpack.c.h.b16 %v347
    %v712 = vunpack.c.l.b16 %v348
    %v713 = vunpack.c.h.b16 %v348
    %v714 = vunpack.c.l.b16 %v349
    %v715 = vunpack.c.l.b16 %v350
    %v716 = vunpack.c.h.b16 %v350
    %v717 = vunpack.c.l.b16 %v351
    %v718 = vunpack.c.h.b16 %v351
    %v719 = vunpack.c.l.b16 %v352
    %v720 = vunpack.c.h.b16 %v352
    %v721 = vunpack.c.l.b16 %v353
    %v722 = vunpack.c.l.b16 %v354
    %v723 = vunpack.c.h.b16 %v354
    %v724 = vunpack.c.l.b16 %v355
    %v725 = vunpack.c.h.b16 %v355
    %v726 = vunpack.c.l.b16 %v356
    %v727 = vunpack.c.h.b16 %v356
    %v728 = vunpack.c.l.b16 %v357
    %v729 = vunpack.c.l.b16 %v358
    %v730 = vunpack.c.h.b16 %v358
    %v731 = vunpack.c.l.b16 %v359
    %v732 = vunpack.c.h.b16 %v359
    %v733 = vunpack.c.l.b16 %v360
    %v734 = vunpack.c.h.b16 %v360
    %v735 = vunpack.c.l.b16 %v361
    %v736 = vunpack.c.l.b16 %v362
    %v737 = vunpack.c.h.b16 %v362
    %v738 = vunpack.c.l.b16 %v363
    %v739 = vunpack.c.h.b16 %v363
    %v740 = vunpack.c.l.b16 %v364
    %v741 = vunpack.c.h.b16 %v364
    %v742 = vunpack.c.l.b16 %v365
    %v743 = vunpack.c.l.b16 %v366
    %v744 = vunpack.c.h.b16 %v366
    %v745 = vunpack.c.l.b16 %v367
    %v746 = vunpack.c.h.b16 %v367
    %v747 = vunpack.c.l.b16 %v368
    %v748 = vunpack.c.h.b16 %v368
    %v749 = vunpack.c.l.b16 %v369
    %v750 = vunpack.c.l.b16 %v370
    %v751 = vunpack.c.h.b16 %v370
    %v752 = vunpack.c.l.b16 %v371
    %v753 = vunpack.c.h.b16 %v371
    %v754 = vunpack.c.l.b16 %v372
    %v755 = vunpack.c.h.b16 %v372
    %v756 = vunpack.c.l.b16 %v373
    %v757 = vunpack.c.l.b16 %v374
    %v758 = vunpack.c.h.b16 %v374
    %v759 = vunpack.c.l.b16 %v375
    %v760 = vunpack.c.h.b16 %v375
    %v761 = vunpack.c.l.b16 %v376
    %v762 = vunpack.c.h.b16 %v376
    %v763 = vunpack.c.l.b16 %v377
    %v764 = vunpack.c.l.b16 %v378
    %v765 = vunpack.c.h.b16 %v378
    %v766 = vunpack.c.l.b16 %v379
    %v767 = vunpack.c.h.b16 %v379
    %v768 = vunpack.c.l.b16 %v380
    %v769 = vunpack.c.h.b16 %v380
    %v770 = vunpack.c.l.b16 %v381
    %v771 = vpack.c.b16 %v554, %v547
    %v772 = vpack.c.b16 %v555, %v548
    %v773 = vpack.c.b16 %v556, %v549
    %v774 = vpack.c.b16 %v557, %v550
    %v775 = vpack.c.b16 %v558, %v551
    %v776 = vpack.c.b16 %v559, %v552
    %v777 = vpack.c.b16 %v560, %v553
    %v778 = vpack.c.b16 %v568, %v561
    %v779 = vpack.c.b16 %v569, %v562
    %v780 = vpack.c.b16 %v570, %v563
    %v781 = vpack.c.b16 %v571, %v564
    %v782 = vpack.c.b16 %v572, %v565
    %v783 = vpack.c.b16 %v573, %v566
    %v784 = vpack.c.b16 %v574, %v567
    %v785 = vpack.c.b16 %v582, %v575
    %v786 = vpack.c.b16 %v583, %v576
    %v787 = vpack.c.b16 %v584, %v577
    %v788 = vpack.c.b16 %v585, %v578
    %v789 = vpack.c.b16 %v586, %v579
    %v790 = vpack.c.b16 %v587, %v580
    %v791 = vpack.c.b16 %v588, %v581
    %v792 = vpack.c.b16 %v596, %v589
    %v793 = vpack.c.b16 %v597, %v590
    %v794 = vpack.c.b16 %v598, %v591
    %v795 = vpack.c.b16 %v599, %v592
    %v796 = vpack.c.b16 %v600, %v593
    %v797 = vpack.c.b16 %v601, %v594
    %v798 = vpack.c.b16 %v602, %v595
    %v799 = vpack.c.b16 %v610, %v603
    %v800 = vpack.c.b16 %v611, %v604
    %v801 = vpack.c.b16 %v612, %v605
    %v802 = vpack.c.b16 %v613, %v606
    %v803 = vpack.c.b16 %v614, %v607
    %v804 = vpack.c.b16 %v615, %v608
    %v805 = vpack.c.b16 %v616, %v609
    %v806 = vpack.c.b16 %v624, %v617
    %v807 = vpack.c.b16 %v625, %v618
    %v808 = vpack.c.b16 %v626, %v619
    %v809 = vpack.c.b16 %v627, %v620
    %v810 = vpack.c.b16 %v628, %v621
    %v811 = vpack.c.b16 %v629, %v622
    %v812 = vpack.c.b16 %v630, %v623
    %v813 = vpack.c.b16 %v638, %v631
    %v814 = vpack.c.b16 %v639, %v632
    %v815 = vpack.c.b16 %v640, %v633
    %v816 = vpack.c.b16 %v641, %v634
    %v817 = vpack.c.b16 %v642, %v635
    %v818 = vpack.c.b16 %v643, %v636
    %v819 = vpack.c.b16 %v644, %v637
    %v820 = vpack.c.b16 %v652, %v645
    %v821 = vpack.c.b16 %v653, %v646
    %v822 = vpack.c.b16 %v654, %v647
    %v823 = vpack.c.b16 %v655, %v648
    %v824 = vpack.c.b16 %v656, %v649
    %v825 = vpack.c.b16 %v657, %v650
    %v826 = vpack.c.b16 %v658, %v651
    %v827 = vpack.c.b16 %v666, %v659
    %v828 = vpack.c.b16 %v667, %v660
    %v829 = vpack.c.b16 %v668, %v661
    %v830 = vpack.c.b16 %v669, %v662
    %v831 = vpack.c.b16 %v670, %v663
    %v832 = vpack.c.b16 %v671, %v664
    %v833 = vpack.c.b16 %v672, %v665
    %v834 = vpack.c.b16 %v680, %v673
    %v835 = vpack.c.b16 %v681, %v674
    %v836 = vpack.c.b16 %v682, %v675
    %v837 = vpack.c.b16 %v683, %v676
    %v838 = vpack.c.b16 %v684, %v677
    %v839 = vpack.c.b16 %v685, %v678
    %v840 = vpack.c.b16 %v686, %v679
    %v841 = vpack.c.b16 %v694, %v687
    %v842 = vpack.c.b16 %v695, %v688
    %v843 = vpack.c.b16 %v696, %v689
    %v844 = vpack.c.b16 %v697, %v690
    %v845 = vpack.c.b16 %v698, %v691
    %v846 = vpack.c.b16 %v699, %v692
    %v847 = vpack.c.b16 %v700, %v693
    %v848 = vpack.c.b16 %v708, %v701
    %v849 = vpack.c.b16 %v709, %v702
    %v850 = vpack.c.b16 %v710, %v703
    %v851 = vpack.c.b16 %v711, %v704
    %v852 = vpack.c.b16 %v712, %v705
    %v853 = vpack.c.b16 %v713, %v706
    %v854 = vpack.c.b16 %v714, %v707
    %v855 = vpack.c.b16 %v722, %v715
    %v856 = vpack.c.b16 %v723, %v716
    %v857 = vpack.c.b16 %v724, %v717
    %v858 = vpack.c.b16 %v725, %v718
    %v859 = vpack.c.b16 %v726, %v719
    %v860 = vpack.c.b16 %v727, %v720
    %v861 = vpack.c.b16 %v728, %v721
    %v862 = vpack.c.b16 %v736, %v729
    %v863 = vpack.c.b16 %v737, %v730
    %v864 = vpack.c.b16 %v738, %v731
    %v865 = vpack.c.b16 %v739, %v732
    %v866 = vpack.c.b16 %v740, %v733
    %v867 = vpack.c.b16 %v741, %v734
    %v868 = vpack.c.b16 %v742, %v735
    %v869 = vpack.c.b16 %v750, %v743
    %v870 = vpack.c.b16 %v751, %v744
    %v871 = vpack.c.b16 %v752, %v745
    %v872 = vpack.c.b16 %v753, %v746
    %v873 = vpack.c.b16 %v754, %v747
    %v874 = vpack.c.b16 %v755, %v748
    %v875 = vpack.c.b16 %v756, %v749
    %v876 = vpack.c.b16 %v764, %v757
    %v877 = vpack.c.b16 %v765, %v758
    %v878 = vpack.c.b16 %v766, %v759
    %v879 = vpack.c.b16 %v767, %v760
    %v880 = vpack.c.b16 %v768, %v761
    %v881 = vpack.c.b16 %v769, %v762
    %v882 = vpack.c.b16 %v770, %v763
    %995 = vmatprep.subr.bf16.mxu0 %v772
    %996 = vmatpush1.bf16.msra.mxu0 %v771
    %997 = vmatprep.subr.bf16.mxu0 %v779
    %998 = vmatpush1.bf16.msra.mxu0 %v778
    %999 = vmatprep.subr.bf16.mxu0 %v786
    %1000 = vmatpush1.bf16.msra.mxu0 %v785
    %1001 = vmatprep.subr.bf16.mxu0 %v793
    %1002 = vmatpush1.bf16.msra.mxu0 %v792
    %1003 = vmatprep.subr.bf16.mxu0 %v800
    %1004 = vmatpush1.bf16.msra.mxu0 %v799
    %1005 = vmatprep.subr.bf16.mxu0 %v807
    %1006 = vmatpush1.bf16.msra.mxu0 %v806
    %1007 = vmatprep.subr.bf16.mxu0 %v814
    %1008 = vmatpush1.bf16.msra.mxu0 %v813
    %1009 = vmatprep.subr.bf16.mxu0 %v821
    %1010 = vmatpush1.bf16.msra.mxu0 %v820
    %1011 = vmatprep.subr.bf16.mxu0 %v828
    %1012 = vmatpush1.bf16.msra.mxu0 %v827
    %1013 = vmatprep.subr.bf16.mxu0 %v835
    %1014 = vmatpush1.bf16.msra.mxu0 %v834
    %1015 = vmatprep.subr.bf16.mxu0 %v842
    %1016 = vmatpush1.bf16.msra.mxu0 %v841
    %1017 = vmatprep.subr.bf16.mxu0 %v849
    %1018 = vmatpush1.bf16.msra.mxu0 %v848
    %1019 = vmatprep.subr.bf16.mxu0 %v856
    %1020 = vmatpush1.bf16.msra.mxu0 %v855
    %1021 = vmatprep.subr.bf16.mxu0 %v863
    %1022 = vmatpush1.bf16.msra.mxu0 %v862
    %1023 = vmatprep.subr.bf16.mxu0 %v870
    %1024 = vmatpush1.bf16.msra.mxu0 %v869
    %1025 = vmatprep.subr.bf16.mxu0 %v877
    %1026 = vmatpush1.bf16.msra.mxu0 %v876
    %1027 = vmatprep.mubr.bf16.mxu0 %v253
    %1028 = vmatmul.mubr.bf16.gmra.mrb[0].mxu0 %v252
    %v1029 = vpop.f32.mrb[0].mxu0
    %v1030 = vadd.f32 %v387, %v1029
    %v1031 = vpop.f32.mrb[0].mxu0
    %v1032 = vadd.f32 %v391, %v1031
    %v1033 = vpop.f32.mrb[0].mxu0
    %v1034 = vadd.f32 %v387, %v1033
    %v1035 = vpop.f32.mrb[0].mxu0
    %v1036 = vadd.f32 %v391, %v1035
    %1037 = vdwg.mxu0
    %1038 = vmatprep.subr.bf16.mxu0 %v774
    %1039 = vmatpush1.bf16.msra.mxu0 %v773
    %1040 = vmatprep.subr.bf16.mxu0 %v781
    %1041 = vmatpush1.bf16.msra.mxu0 %v780
    %1042 = vmatprep.subr.bf16.mxu0 %v788
    %1043 = vmatpush1.bf16.msra.mxu0 %v787
    %1044 = vmatprep.subr.bf16.mxu0 %v795
    %1045 = vmatpush1.bf16.msra.mxu0 %v794
    %1046 = vmatprep.subr.bf16.mxu0 %v802
    %1047 = vmatpush1.bf16.msra.mxu0 %v801
    %1048 = vmatprep.subr.bf16.mxu0 %v809
    %1049 = vmatpush1.bf16.msra.mxu0 %v808
    %1050 = vmatprep.subr.bf16.mxu0 %v816
    %1051 = vmatpush1.bf16.msra.mxu0 %v815
    %1052 = vmatprep.subr.bf16.mxu0 %v823
    %1053 = vmatpush1.bf16.msra.mxu0 %v822
    %1054 = vmatprep.subr.bf16.mxu0 %v830
    %1055 = vmatpush1.bf16.msra.mxu0 %v829
    %1056 = vmatprep.subr.bf16.mxu0 %v837
    %1057 = vmatpush1.bf16.msra.mxu0 %v836
    %1058 = vmatprep.subr.bf16.mxu0 %v844
    %1059 = vmatpush1.bf16.msra.mxu0 %v843
    %1060 = vmatprep.subr.bf16.mxu0 %v851
    %1061 = vmatpush1.bf16.msra.mxu0 %v850
    %1062 = vmatprep.subr.bf16.mxu0 %v858
    %1063 = vmatpush1.bf16.msra.mxu0 %v857
    %1064 = vmatprep.subr.bf16.mxu0 %v865
    %1065 = vmatpush1.bf16.msra.mxu0 %v864
    %1066 = vmatprep.subr.bf16.mxu0 %v872
    %1067 = vmatpush1.bf16.msra.mxu0 %v871
    %1068 = vmatprep.subr.bf16.mxu0 %v879
    %1069 = vmatpush1.bf16.msra.mxu0 %v878
    %1070 = vmatprep.mubr.bf16.mxu0 %v253
    %1071 = vmatmul.mubr.bf16.gmra.mrb[0].mxu0 %v252
    %v1072 = vpop.f32.mrb[0].mxu0
    %v1073 = vadd.f32 %v395, %v1072
    %v1074 = vpop.f32.mrb[0].mxu0
    %v1075 = vadd.f32 %v399, %v1074
    %v1076 = vpop.f32.mrb[0].mxu0
    %v1077 = vadd.f32 %v395, %v1076
    %v1078 = vpop.f32.mrb[0].mxu0
    %v1079 = vadd.f32 %v399, %v1078
    %1080 = vdwg.mxu0
    %1081 = vmatprep.subr.bf16.mxu0 %v776
    %1082 = vmatpush1.bf16.msra.mxu0 %v775
    %1083 = vmatprep.subr.bf16.mxu0 %v783
    %1084 = vmatpush1.bf16.msra.mxu0 %v782
    %1085 = vmatprep.subr.bf16.mxu0 %v790
    %1086 = vmatpush1.bf16.msra.mxu0 %v789
    %1087 = vmatprep.subr.bf16.mxu0 %v797
    %1088 = vmatpush1.bf16.msra.mxu0 %v796
    %1089 = vmatprep.subr.bf16.mxu0 %v804
    %1090 = vmatpush1.bf16.msra.mxu0 %v803
    %1091 = vmatprep.subr.bf16.mxu0 %v811
    %1092 = vmatpush1.bf16.msra.mxu0 %v810
    %1093 = vmatprep.subr.bf16.mxu0 %v818
    %1094 = vmatpush1.bf16.msra.mxu0 %v817
    %1095 = vmatprep.subr.bf16.mxu0 %v825
    %1096 = vmatpush1.bf16.msra.mxu0 %v824
    %1097 = vmatprep.subr.bf16.mxu0 %v832
    %1098 = vmatpush1.bf16.msra.mxu0 %v831
    %1099 = vmatprep.subr.bf16.mxu0 %v839
    %1100 = vmatpush1.bf16.msra.mxu0 %v838
    %1101 = vmatprep.subr.bf16.mxu0 %v846
    %1102 = vmatpush1.bf16.msra.mxu0 %v845
    %1103 = vmatprep.subr.bf16.mxu0 %v853
    %1104 = vmatpush1.bf16.msra.mxu0 %v852
    %1105 = vmatprep.subr.bf16.mxu0 %v860
    %1106 = vmatpush1.bf16.msra.mxu0 %v859
    %1107 = vmatprep.subr.bf16.mxu0 %v867
    %1108 = vmatpush1.bf16.msra.mxu0 %v866
    %1109 = vmatprep.subr.bf16.mxu0 %v874
    %1110 = vmatpush1.bf16.msra.mxu0 %v873
    %1111 = vmatprep.subr.bf16.mxu0 %v881
    %1112 = vmatpush1.bf16.msra.mxu0 %v880
    %1113 = vmatprep.mubr.bf16.mxu0 %v253
    %1114 = vmatmul.mubr.bf16.gmra.mrb[0].mxu0 %v252
    %v1115 = vpop.f32.mrb[0].mxu0
    %v1116 = vadd.f32 %v403, %v1115
    %v1117 = vpop.f32.mrb[0].mxu0
    %v1118 = vadd.f32 %v407, %v1117
    %v1119 = vpop.f32.mrb[0].mxu0
    %v1120 = vadd.f32 %v403, %v1119
    %v1121 = vpop.f32.mrb[0].mxu0
    %v1122 = vadd.f32 %v407, %v1121
    %1123 = vdwg.mxu0
    %1124 = vmatprep.subr.bf16.mxu0 0
    %1125 = vmatpush1.bf16.msra.mxu0 %v777
    %1126 = vmatprep.subr.bf16.mxu0 0
    %1127 = vmatpush1.bf16.msra.mxu0 %v784
    %1128 = vmatprep.subr.bf16.mxu0 0
    %1129 = vmatpush1.bf16.msra.mxu0 %v791
    %1130 = vmatprep.subr.bf16.mxu0 0
    %1131 = vmatpush1.bf16.msra.mxu0 %v798
    %1132 = vmatprep.subr.bf16.mxu0 0
    %1133 = vmatpush1.bf16.msra.mxu0 %v805
    %1134 = vmatprep.subr.bf16.mxu0 0
    %1135 = vmatpush1.bf16.msra.mxu0 %v812
    %1136 = vmatprep.subr.bf16.mxu0 0
    %1137 = vmatpush1.bf16.msra.mxu0 %v819
    %1138 = vmatprep.subr.bf16.mxu0 0
    %1139 = vmatpush1.bf16.msra.mxu0 %v826
    %1140 = vmatprep.subr.bf16.mxu0 0
    %1141 = vmatpush1.bf16.msra.mxu0 %v833
    %1142 = vmatprep.subr.bf16.mxu0 0
    %1143 = vmatpush1.bf16.msra.mxu0 %v840
    %1144 = vmatprep.subr.bf16.mxu0 0
    %1145 = vmatpush1.bf16.msra.mxu0 %v847
    %1146 = vmatprep.subr.bf16.mxu0 0
    %1147 = vmatpush1.bf16.msra.mxu0 %v854
    %1148 = vmatprep.subr.bf16.mxu0 0
    %1149 = vmatpush1.bf16.msra.mxu0 %v861
    %1150 = vmatprep.subr.bf16.mxu0 0
    %1151 = vmatpush1.bf16.msra.mxu0 %v868
    %1152 = vmatprep.subr.bf16.mxu0 0
    %1153 = vmatpush1.bf16.msra.mxu0 %v875
    %1154 = vmatprep.subr.bf16.mxu0 0
    %1155 = vmatpush1.bf16.msra.mxu0 %v882
    %1156 = vmatprep.mubr.bf16.mxu0 %v253
    %1157 = vmatmul.mubr.bf16.gmra.mrb[0].mxu0 %v252
    %v1158 = vpop.f32.mrb[0].mxu0
    %v1159 = vadd.f32 %v411, %v1158
    %v1160 = vpop.f32.mrb[0].mxu0
    %v1161 = vpop.f32.mrb[0].mxu0
    %v1162 = vadd.f32 %v411, %v1161
    %v1163 = vpop.f32.mrb[0].mxu0
    %1164 = vdwg.mxu0
    %v1165 = vmax.f32 %v1030, 0.0
    %v1166 = vmax.f32 %v1032, 0.0
    %v1167 = vmax.f32 %v1073, 0.0
    %v1168 = vmax.f32 %v1075, 0.0
    %v1169 = vmax.f32 %v1116, 0.0
    %v1170 = vmax.f32 %v1118, 0.0
    %v1171 = vmax.f32 %v1159, 0.0
    %v1172 = vmax.f32 %v1034, 0.0
    %v1173 = vmax.f32 %v1036, 0.0
    %v1174 = vmax.f32 %v1077, 0.0
    %v1175 = vmax.f32 %v1079, 0.0
    %v1176 = vmax.f32 %v1120, 0.0
    %v1177 = vmax.f32 %v1122, 0.0
    %v1178 = vmax.f32 %v1162, 0.0
    %v1179 = vpack.c.bf16 %v1172, %v1165
    %v1180 = vpack.c.bf16 %v1173, %v1166
    %v1181 = vpack.c.bf16 %v1174, %v1167
    %v1182 = vpack.c.bf16 %v1175, %v1168
    %v1183 = vpack.c.bf16 %v1176, %v1169
    %v1184 = vpack.c.bf16 %v1177, %v1170
    %v1185 = vpack.c.bf16 %v1178, %v1171
    %v1186 = vld [vmem:[#allocation9] sm:$0xff]
    %v1187 = vld [vmem:[#allocation9 + $0x8] sm:$0xff]
    %v1188 = vld [vmem:[#allocation9 + $0x10] sm:$0xff]
    %v1189 = vld [vmem:[#allocation9 + $0x18] sm:$0xff]
    %v1190 = vld [vmem:[#allocation9 + $0x20] sm:$0xff]
    %v1191 = vld [vmem:[#allocation9 + $0x28] sm:$0xff]
    %v1192 = vld [vmem:[#allocation9 + $0x30] sm:$0xff]
    %v1193 = vld [vmem:[#allocation9 + $0x38] sm:$0xff]
    %v1194 = vld [vmem:[#allocation9 + $0x40] sm:$0xff]
    %v1195 = vld [vmem:[#allocation9 + $0x48] sm:$0xff]
    %v1196 = vld [vmem:[#allocation9 + $0x50] sm:$0xff]
    %v1197 = vld [vmem:[#allocation9 + $0x58] sm:$0xff]
    %v1198 = vld [vmem:[#allocation9 + $0x60] sm:$0xff]
    %v1199 = vld [vmem:[#allocation9 + $0x68] sm:$0xff]
    %v1200 = vld [vmem:[#allocation9 + $0x70] sm:$0xff]
    %v1201 = vld [vmem:[#allocation9 + $0x78] sm:$0xff]
    %v1202 = vld [vmem:[#allocation9 + $0x80] sm:$0xff]
    %v1203 = vld [vmem:[#allocation9 + $0x88] sm:$0xff]
    %v1204 = vld [vmem:[#allocation9 + $0x90] sm:$0xff]
    %v1205 = vld [vmem:[#allocation9 + $0x98] sm:$0xff]
    %v1206 = vld [vmem:[#allocation9 + $0xa0] sm:$0xff]
    %v1207 = vld [vmem:[#allocation9 + $0xa8] sm:$0xff]
    %v1208 = vld [vmem:[#allocation9 + $0xb0] sm:$0xff]
    %v1209 = vld [vmem:[#allocation9 + $0xb8] sm:$0xff]
    %v1210 = vld [vmem:[#allocation9 + $0xc0] sm:$0xff]
    %v1211 = vld [vmem:[#allocation9 + $0xc8] sm:$0xff]
    %v1212 = vld [vmem:[#allocation9 + $0xd0] sm:$0xff]
    %v1213 = vld [vmem:[#allocation9 + $0xd8] sm:$0xff]
    %v1214 = vld [vmem:[#allocation9 + $0xe0] sm:$0xff]
    %v1215 = vld [vmem:[#allocation9 + $0xe8] sm:$0xff]
    %v1216 = vld [vmem:[#allocation9 + $0xf0] sm:$0xff]
    %v1217 = vld [vmem:[#allocation9 + $0xf8] sm:$0xff]
    %v1218 = vld [vmem:[#allocation9 + $0x100] sm:$0xff]
    %v1219 = vld [vmem:[#allocation9 + $0x108] sm:$0xff]
    %v1220 = vld [vmem:[#allocation9 + $0x110] sm:$0xff]
    %v1221 = vld [vmem:[#allocation9 + $0x118] sm:$0xff]
    %v1222 = vld [vmem:[#allocation9 + $0x120] sm:$0xff]
    %v1223 = vld [vmem:[#allocation9 + $0x128] sm:$0xff]
    %v1224 = vld [vmem:[#allocation9 + $0x130] sm:$0xff]
    %v1225 = vld [vmem:[#allocation9 + $0x138] sm:$0xff]
    %v1226 = vld [vmem:[#allocation9 + $0x140] sm:$0xff]
    %v1227 = vld [vmem:[#allocation9 + $0x148] sm:$0xff]
    %v1228 = vld [vmem:[#allocation9 + $0x150] sm:$0xff]
    %v1229 = vld [vmem:[#allocation9 + $0x158] sm:$0xff]
    %v1230 = vld [vmem:[#allocation9 + $0x160] sm:$0xff]
    %v1231 = vld [vmem:[#allocation9 + $0x168] sm:$0xff]
    %v1232 = vld [vmem:[#allocation9 + $0x170] sm:$0xff]
    %v1233 = vld [vmem:[#allocation9 + $0x178] sm:$0xff]
    %v1234 = vld [vmem:[#allocation9 + $0x180] sm:$0xff]
    %v1235 = vld [vmem:[#allocation9 + $0x188] sm:$0xff]
    %v1236 = vld [vmem:[#allocation9 + $0x190] sm:$0xff]
    %v1237 = vld [vmem:[#allocation9 + $0x198] sm:$0xff]
    %v1238 = vld [vmem:[#allocation9 + $0x1a0] sm:$0xff]
    %v1239 = vld [vmem:[#allocation9 + $0x1a8] sm:$0xff]
    %v1240 = vld [vmem:[#allocation9 + $0x1b0] sm:$0xff]
    %v1241 = vld [vmem:[#allocation9 + $0x1b8] sm:$0xff]
    %v1242 = vld [vmem:[#allocation9 + $0x1c0] sm:$0xff]
    %v1243 = vld [vmem:[#allocation9 + $0x1c8] sm:$0xff]
    %v1244 = vld [vmem:[#allocation9 + $0x1d0] sm:$0xff]
    %v1245 = vld [vmem:[#allocation9 + $0x1d8] sm:$0xff]
    %v1246 = vld [vmem:[#allocation9 + $0x1e0] sm:$0xff]
    %v1247 = vld [vmem:[#allocation9 + $0x1e8] sm:$0xff]
    %v1248 = vld [vmem:[#allocation9 + $0x1f0] sm:$0xff]
    %v1249 = vld [vmem:[#allocation9 + $0x1f8] sm:$0xff]
    %v1250 = vld [vmem:[#allocation9 + $0x200] sm:$0xff]
    %v1251 = vld [vmem:[#allocation9 + $0x208] sm:$0xff]
    %v1252 = vld [vmem:[#allocation9 + $0x210] sm:$0xff]
    %v1253 = vld [vmem:[#allocation9 + $0x218] sm:$0xff]
    %v1254 = vld [vmem:[#allocation9 + $0x220] sm:$0xff]
    %v1255 = vld [vmem:[#allocation9 + $0x228] sm:$0xff]
    %v1256 = vld [vmem:[#allocation9 + $0x230] sm:$0xff]
    %v1257 = vld [vmem:[#allocation9 + $0x238] sm:$0xff]
    %v1258 = vld [vmem:[#allocation9 + $0x240] sm:$0xff]
    %v1259 = vld [vmem:[#allocation9 + $0x248] sm:$0xff]
    %v1260 = vld [vmem:[#allocation9 + $0x250] sm:$0xff]
    %v1261 = vld [vmem:[#allocation9 + $0x258] sm:$0xff]
    %v1262 = vld [vmem:[#allocation9 + $0x260] sm:$0xff]
    %v1263 = vld [vmem:[#allocation9 + $0x268] sm:$0xff]
    %v1264 = vld [vmem:[#allocation9 + $0x270] sm:$0xff]
    %v1265 = vld [vmem:[#allocation9 + $0x278] sm:$0xff]
    %v1266 = vld [vmem:[#allocation9 + $0x280] sm:$0xff]
    %v1267 = vld [vmem:[#allocation9 + $0x288] sm:$0xff]
    %v1268 = vld [vmem:[#allocation9 + $0x290] sm:$0xff]
    %v1269 = vld [vmem:[#allocation9 + $0x298] sm:$0xff]
    %v1270 = vld [vmem:[#allocation9 + $0x2a0] sm:$0xff]
    %v1271 = vld [vmem:[#allocation9 + $0x2a8] sm:$0xff]
    %v1272 = vld [vmem:[#allocation9 + $0x2b0] sm:$0xff]
    %v1273 = vld [vmem:[#allocation9 + $0x2b8] sm:$0xff]
    %v1274 = vld [vmem:[#allocation9 + $0x2c0] sm:$0xff]
    %v1275 = vld [vmem:[#allocation9 + $0x2c8] sm:$0xff]
    %v1276 = vld [vmem:[#allocation9 + $0x2d0] sm:$0xff]
    %v1277 = vld [vmem:[#allocation9 + $0x2d8] sm:$0xff]
    %v1278 = vld [vmem:[#allocation9 + $0x2e0] sm:$0xff]
    %v1279 = vld [vmem:[#allocation9 + $0x2e8] sm:$0xff]
    %v1280 = vld [vmem:[#allocation9 + $0x2f0] sm:$0xff]
    %v1281 = vld [vmem:[#allocation9 + $0x2f8] sm:$0xff]
    %v1282 = vld [vmem:[#allocation9 + $0x300] sm:$0xff]
    %v1283 = vld [vmem:[#allocation9 + $0x308] sm:$0xff]
    %v1284 = vld [vmem:[#allocation9 + $0x310] sm:$0xff]
    %v1285 = vld [vmem:[#allocation9 + $0x318] sm:$0xff]
    %v1286 = vld [vmem:[#allocation9 + $0x320] sm:$0xff]
    %v1287 = vld [vmem:[#allocation9 + $0x328] sm:$0xff]
    %v1288 = vld [vmem:[#allocation9 + $0x330] sm:$0xff]
    %v1289 = vld [vmem:[#allocation9 + $0x338] sm:$0xff]
    %v1290 = vld [vmem:[#allocation9 + $0x340] sm:$0xff]
    %v1291 = vld [vmem:[#allocation9 + $0x348] sm:$0xff]
    %v1292 = vld [vmem:[#allocation9 + $0x350] sm:$0xff]
    %v1293 = vld [vmem:[#allocation9 + $0x358] sm:$0xff]
    %v1294 = vld [vmem:[#allocation9 + $0x360] sm:$0xff]
    %v1295 = vld [vmem:[#allocation9 + $0x368] sm:$0xff]
    %v1296 = vld [vmem:[#allocation9 + $0x370] sm:$0xff]
    %v1297 = vld [vmem:[#allocation9 + $0x378] sm:$0xff]
    %v1298 = vld [vmem:[#allocation9 + $0x380] sm:$0xff]
    %v1299 = vld [vmem:[#allocation9 + $0x388] sm:$0xff]
    %v1300 = vld [vmem:[#allocation9 + $0x390] sm:$0xff]
    %v1301 = vld [vmem:[#allocation9 + $0x398] sm:$0xff]
    %v1302 = vld [vmem:[#allocation9 + $0x3a0] sm:$0xff]
    %v1303 = vld [vmem:[#allocation9 + $0x3a8] sm:$0xff]
    %v1304 = vld [vmem:[#allocation9 + $0x3b0] sm:$0xff]
    %v1305 = vld [vmem:[#allocation9 + $0x3b8] sm:$0xff]
    %v1306 = vld [vmem:[#allocation9 + $0x3c0] sm:$0xff]
    %v1307 = vld [vmem:[#allocation9 + $0x3c8] sm:$0xff]
    %v1308 = vld [vmem:[#allocation9 + $0x3d0] sm:$0xff]
    %v1309 = vld [vmem:[#allocation9 + $0x3d8] sm:$0xff]
    %v1310 = vld [vmem:[#allocation9 + $0x3e0] sm:$0xff]
    %v1311 = vld [vmem:[#allocation9 + $0x3e8] sm:$0xff]
    %v1312 = vld [vmem:[#allocation9 + $0x3f0] sm:$0xff]
    %v1313 = vld [vmem:[#allocation9 + $0x3f8] sm:$0xff]
    %v1314 = vld [vmem:[#allocation9 + $0x400] sm:$0xff]
    %v1315 = vld [vmem:[#allocation9 + $0x408] sm:$0xff]
    %v1316 = vld [vmem:[#allocation9 + $0x410] sm:$0xff]
    %v1317 = vld [vmem:[#allocation9 + $0x418] sm:$0xff]
    %v1318 = vld [vmem:[#allocation9 + $0x420] sm:$0xff]
    %v1319 = vld [vmem:[#allocation9 + $0x428] sm:$0xff]
    %v1320 = vld [vmem:[#allocation9 + $0x430] sm:$0xff]
    %v1321 = vld [vmem:[#allocation9 + $0x438] sm:$0xff]
    %v1322 = vld [vmem:[#allocation9 + $0x440] sm:$0xff]
    %v1323 = vld [vmem:[#allocation9 + $0x448] sm:$0xff]
    %v1324 = vld [vmem:[#allocation9 + $0x450] sm:$0xff]
    %v1325 = vld [vmem:[#allocation9 + $0x458] sm:$0xff]
    %v1326 = vld [vmem:[#allocation9 + $0x460] sm:$0xff]
    %v1327 = vld [vmem:[#allocation9 + $0x468] sm:$0xff]
    %v1328 = vld [vmem:[#allocation9 + $0x470] sm:$0xff]
    %v1329 = vld [vmem:[#allocation9 + $0x478] sm:$0xff]
    %v1330 = vld [vmem:[#allocation9 + $0x480] sm:$0xff]
    %v1331 = vld [vmem:[#allocation9 + $0x488] sm:$0xff]
    %v1332 = vld [vmem:[#allocation9 + $0x490] sm:$0xff]
    %v1333 = vld [vmem:[#allocation9 + $0x498] sm:$0xff]
    %v1334 = vld [vmem:[#allocation9 + $0x4a0] sm:$0xff]
    %v1335 = vld [vmem:[#allocation9 + $0x4a8] sm:$0xff]
    %v1336 = vld [vmem:[#allocation9 + $0x4b0] sm:$0xff]
    %v1337 = vld [vmem:[#allocation9 + $0x4b8] sm:$0xff]
    %v1338 = vld [vmem:[#allocation9 + $0x4c0] sm:$0xff]
    %v1339 = vld [vmem:[#allocation9 + $0x4c8] sm:$0xff]
    %v1340 = vld [vmem:[#allocation9 + $0x4d0] sm:$0xff]
    %v1341 = vld [vmem:[#allocation9 + $0x4d8] sm:$0xff]
    %v1342 = vld [vmem:[#allocation9 + $0x4e0] sm:$0xff]
    %v1343 = vld [vmem:[#allocation9 + $0x4e8] sm:$0xff]
    %v1344 = vld [vmem:[#allocation9 + $0x4f0] sm:$0xff]
    %v1345 = vld [vmem:[#allocation9 + $0x4f8] sm:$0xff]
    %v1346 = vld [vmem:[#allocation9 + $0x500] sm:$0xff]
    %v1347 = vld [vmem:[#allocation9 + $0x508] sm:$0xff]
    %v1348 = vld [vmem:[#allocation9 + $0x510] sm:$0xff]
    %v1349 = vld [vmem:[#allocation9 + $0x518] sm:$0xff]
    %v1350 = vld [vmem:[#allocation9 + $0x520] sm:$0xff]
    %v1351 = vld [vmem:[#allocation9 + $0x528] sm:$0xff]
    %v1352 = vld [vmem:[#allocation9 + $0x530] sm:$0xff]
    %v1353 = vld [vmem:[#allocation9 + $0x538] sm:$0xff]
    %v1354 = vld [vmem:[#allocation9 + $0x540] sm:$0xff]
    %v1355 = vld [vmem:[#allocation9 + $0x548] sm:$0xff]
    %v1356 = vld [vmem:[#allocation9 + $0x550] sm:$0xff]
    %v1357 = vld [vmem:[#allocation9 + $0x558] sm:$0xff]
    %v1358 = vld [vmem:[#allocation9 + $0x560] sm:$0xff]
    %v1359 = vld [vmem:[#allocation9 + $0x568] sm:$0xff]
    %v1360 = vld [vmem:[#allocation9 + $0x570] sm:$0xff]
    %v1361 = vld [vmem:[#allocation9 + $0x578] sm:$0xff]
    %v1362 = vld [vmem:[#allocation9 + $0x580] sm:$0xff]
    %v1363 = vld [vmem:[#allocation9 + $0x588] sm:$0xff]
    %v1364 = vld [vmem:[#allocation9 + $0x590] sm:$0xff]
    %v1365 = vld [vmem:[#allocation9 + $0x598] sm:$0xff]
    %v1366 = vld [vmem:[#allocation9 + $0x5a0] sm:$0xff]
    %v1367 = vld [vmem:[#allocation9 + $0x5a8] sm:$0xff]
    %v1368 = vld [vmem:[#allocation9 + $0x5b0] sm:$0xff]
    %v1369 = vld [vmem:[#allocation9 + $0x5b8] sm:$0xff]
    %v1370 = vld [vmem:[#allocation9 + $0x5c0] sm:$0xff]
    %v1371 = vld [vmem:[#allocation9 + $0x5c8] sm:$0xff]
    %v1372 = vld [vmem:[#allocation9 + $0x5d0] sm:$0xff]
    %v1373 = vld [vmem:[#allocation9 + $0x5d8] sm:$0xff]
    %v1374 = vld [vmem:[#allocation9 + $0x5e0] sm:$0xff]
    %v1375 = vld [vmem:[#allocation9 + $0x5e8] sm:$0xff]
    %v1376 = vld [vmem:[#allocation9 + $0x5f0] sm:$0xff]
    %v1377 = vld [vmem:[#allocation9 + $0x5f8] sm:$0xff]
    %v1378 = vld [vmem:[#allocation9 + $0x600] sm:$0xff]
    %v1379 = vld [vmem:[#allocation9 + $0x608] sm:$0xff]
    %v1380 = vld [vmem:[#allocation9 + $0x610] sm:$0xff]
    %v1381 = vld [vmem:[#allocation9 + $0x618] sm:$0xff]
    %v1382 = vld [vmem:[#allocation9 + $0x620] sm:$0xff]
    %v1383 = vld [vmem:[#allocation9 + $0x628] sm:$0xff]
    %v1384 = vld [vmem:[#allocation9 + $0x630] sm:$0xff]
    %v1385 = vld [vmem:[#allocation9 + $0x638] sm:$0xff]
    %v1386 = vld [vmem:[#allocation9 + $0x640] sm:$0xff]
    %v1387 = vld [vmem:[#allocation9 + $0x648] sm:$0xff]
    %v1388 = vld [vmem:[#allocation9 + $0x650] sm:$0xff]
    %v1389 = vld [vmem:[#allocation9 + $0x658] sm:$0xff]
    %v1390 = vld [vmem:[#allocation9 + $0x660] sm:$0xff]
    %v1391 = vld [vmem:[#allocation9 + $0x668] sm:$0xff]
    %v1392 = vld [vmem:[#allocation9 + $0x670] sm:$0xff]
    %v1393 = vld [vmem:[#allocation9 + $0x678] sm:$0xff]
    %v1394 = vld [vmem:[#allocation9 + $0x680] sm:$0xff]
    %v1395 = vld [vmem:[#allocation9 + $0x688] sm:$0xff]
    %v1396 = vld [vmem:[#allocation9 + $0x690] sm:$0xff]
    %v1397 = vld [vmem:[#allocation9 + $0x698] sm:$0xff]
    %v1398 = vld [vmem:[#allocation9 + $0x6a0] sm:$0xff]
    %v1399 = vld [vmem:[#allocation9 + $0x6a8] sm:$0xff]
    %v1400 = vld [vmem:[#allocation9 + $0x6b0] sm:$0xff]
    %v1401 = vld [vmem:[#allocation9 + $0x6b8] sm:$0xff]
    %v1402 = vld [vmem:[#allocation9 + $0x6c0] sm:$0xff]
    %v1403 = vld [vmem:[#allocation9 + $0x6c8] sm:$0xff]
    %v1404 = vld [vmem:[#allocation9 + $0x6d0] sm:$0xff]
    %v1405 = vld [vmem:[#allocation9 + $0x6d8] sm:$0xff]
    %v1406 = vld [vmem:[#allocation9 + $0x6e0] sm:$0xff]
    %v1407 = vld [vmem:[#allocation9 + $0x6e8] sm:$0xff]
    %v1408 = vld [vmem:[#allocation9 + $0x6f0] sm:$0xff]
    %v1409 = vld [vmem:[#allocation9 + $0x6f8] sm:$0xff]
    %v1410 = vld [vmem:[#allocation11] sm:$0xf]
    %v1412 = vlaneseq
    %v1413 = vshrl.u32 %v1412, 7
    %v1414 = vsub.s32 0, %v1413
    %v1415 = vrot.slane %v1410, %v1414
    %v1416 = vlaneseq
    %v1417 = vshrl.u32 %v1416, 7
    %v1418 = vsub.s32 1, %v1417
    %v1419 = vrot.slane %v1410, %v1418
    %v1420 = vlaneseq
    %v1421 = vshrl.u32 %v1420, 7
    %v1422 = vsub.s32 2, %v1421
    %v1423 = vrot.slane %v1410, %v1422
    %v1424 = vlaneseq
    %v1425 = vshrl.u32 %v1424, 7
    %v1426 = vsub.s32 3, %v1425
    %v1427 = vrot.slane %v1410, %v1426
    %v1656 = vunpack.c.l.b16 %v1186
    %v1657 = vunpack.c.h.b16 %v1186
    %v1658 = vunpack.c.l.b16 %v1187
    %v1659 = vunpack.c.h.b16 %v1187
    %v1660 = vunpack.c.l.b16 %v1188
    %v1661 = vunpack.c.h.b16 %v1188
    %v1662 = vunpack.c.l.b16 %v1189
    %v1663 = vunpack.c.h.b16 %v1189
    %v1664 = vunpack.c.l.b16 %v1190
    %v1665 = vunpack.c.h.b16 %v1190
    %v1666 = vunpack.c.l.b16 %v1191
    %v1667 = vunpack.c.h.b16 %v1191
    %v1668 = vunpack.c.l.b16 %v1192
    %v1669 = vunpack.c.h.b16 %v1192
    %v1670 = vunpack.c.l.b16 %v1193
    %v1671 = vunpack.c.h.b16 %v1193
    %v1672 = vunpack.c.l.b16 %v1194
    %v1673 = vunpack.c.h.b16 %v1194
    %v1674 = vunpack.c.l.b16 %v1195
    %v1675 = vunpack.c.h.b16 %v1195
    %v1676 = vunpack.c.l.b16 %v1196
    %v1677 = vunpack.c.h.b16 %v1196
    %v1678 = vunpack.c.l.b16 %v1197
    %v1679 = vunpack.c.h.b16 %v1197
    %v1680 = vunpack.c.l.b16 %v1198
    %v1681 = vunpack.c.h.b16 %v1198
    %v1682 = vunpack.c.l.b16 %v1199
    %v1683 = vunpack.c.h.b16 %v1199
    %v1684 = vunpack.c.l.b16 %v1200
    %v1685 = vunpack.c.h.b16 %v1200
    %v1686 = vunpack.c.l.b16 %v1201
    %v1687 = vunpack.c.h.b16 %v1201
    %v1688 = vunpack.c.l.b16 %v1202
    %v1689 = vunpack.c.h.b16 %v1202
    %v1690 = vunpack.c.l.b16 %v1203
    %v1691 = vunpack.c.h.b16 %v1203
    %v1692 = vunpack.c.l.b16 %v1204
    %v1693 = vunpack.c.h.b16 %v1204
    %v1694 = vunpack.c.l.b16 %v1205
    %v1695 = vunpack.c.h.b16 %v1205
    %v1696 = vunpack.c.l.b16 %v1206
    %v1697 = vunpack.c.h.b16 %v1206
    %v1698 = vunpack.c.l.b16 %v1207
    %v1699 = vunpack.c.h.b16 %v1207
    %v1700 = vunpack.c.l.b16 %v1208
    %v1701 = vunpack.c.h.b16 %v1208
    %v1702 = vunpack.c.l.b16 %v1209
    %v1703 = vunpack.c.h.b16 %v1209
    %v1704 = vunpack.c.l.b16 %v1210
    %v1705 = vunpack.c.h.b16 %v1210
    %v1706 = vunpack.c.l.b16 %v1211
    %v1707 = vunpack.c.h.b16 %v1211
    %v1708 = vunpack.c.l.b16 %v1212
    %v1709 = vunpack.c.h.b16 %v1212
    %v1710 = vunpack.c.l.b16 %v1213
    %v1711 = vunpack.c.h.b16 %v1213
    %v1712 = vunpack.c.l.b16 %v1214
    %v1713 = vunpack.c.h.b16 %v1214
    %v1714 = vunpack.c.l.b16 %v1215
    %v1715 = vunpack.c.h.b16 %v1215
    %v1716 = vunpack.c.l.b16 %v1216
    %v1717 = vunpack.c.h.b16 %v1216
    %v1718 = vunpack.c.l.b16 %v1217
    %v1719 = vunpack.c.h.b16 %v1217
    %v1720 = vunpack.c.l.b16 %v1218
    %v1721 = vunpack.c.h.b16 %v1218
    %v1722 = vunpack.c.l.b16 %v1219
    %v1723 = vunpack.c.h.b16 %v1219
    %v1724 = vunpack.c.l.b16 %v1220
    %v1725 = vunpack.c.h.b16 %v1220
    %v1726 = vunpack.c.l.b16 %v1221
    %v1727 = vunpack.c.h.b16 %v1221
    %v1728 = vunpack.c.l.b16 %v1222
    %v1729 = vunpack.c.h.b16 %v1222
    %v1730 = vunpack.c.l.b16 %v1223
    %v1731 = vunpack.c.h.b16 %v1223
    %v1732 = vunpack.c.l.b16 %v1224
    %v1733 = vunpack.c.h.b16 %v1224
    %v1734 = vunpack.c.l.b16 %v1225
    %v1735 = vunpack.c.h.b16 %v1225
    %v1736 = vunpack.c.l.b16 %v1226
    %v1737 = vunpack.c.h.b16 %v1226
    %v1738 = vunpack.c.l.b16 %v1227
    %v1739 = vunpack.c.h.b16 %v1227
    %v1740 = vunpack.c.l.b16 %v1228
    %v1741 = vunpack.c.h.b16 %v1228
    %v1742 = vunpack.c.l.b16 %v1229
    %v1743 = vunpack.c.h.b16 %v1229
    %v1744 = vunpack.c.l.b16 %v1230
    %v1745 = vunpack.c.h.b16 %v1230
    %v1746 = vunpack.c.l.b16 %v1231
    %v1747 = vunpack.c.h.b16 %v1231
    %v1748 = vunpack.c.l.b16 %v1232
    %v1749 = vunpack.c.h.b16 %v1232
    %v1750 = vunpack.c.l.b16 %v1233
    %v1751 = vunpack.c.h.b16 %v1233
    %v1752 = vunpack.c.l.b16 %v1234
    %v1753 = vunpack.c.h.b16 %v1234
    %v1754 = vunpack.c.l.b16 %v1235
    %v1755 = vunpack.c.h.b16 %v1235
    %v1756 = vunpack.c.l.b16 %v1236
    %v1757 = vunpack.c.h.b16 %v1236
    %v1758 = vunpack.c.l.b16 %v1237
    %v1759 = vunpack.c.h.b16 %v1237
    %v1760 = vunpack.c.l.b16 %v1238
    %v1761 = vunpack.c.h.b16 %v1238
    %v1762 = vunpack.c.l.b16 %v1239
    %v1763 = vunpack.c.h.b16 %v1239
    %v1764 = vunpack.c.l.b16 %v1240
    %v1765 = vunpack.c.h.b16 %v1240
    %v1766 = vunpack.c.l.b16 %v1241
    %v1767 = vunpack.c.h.b16 %v1241
    %v1768 = vunpack.c.l.b16 %v1242
    %v1769 = vunpack.c.h.b16 %v1242
    %v1770 = vunpack.c.l.b16 %v1243
    %v1771 = vunpack.c.h.b16 %v1243
    %v1772 = vunpack.c.l.b16 %v1244
    %v1773 = vunpack.c.h.b16 %v1244
    %v1774 = vunpack.c.l.b16 %v1245
    %v1775 = vunpack.c.h.b16 %v1245
    %v1776 = vunpack.c.l.b16 %v1246
    %v1777 = vunpack.c.h.b16 %v1246
    %v1778 = vunpack.c.l.b16 %v1247
    %v1779 = vunpack.c.h.b16 %v1247
    %v1780 = vunpack.c.l.b16 %v1248
    %v1781 = vunpack.c.h.b16 %v1248
    %v1782 = vunpack.c.l.b16 %v1249
    %v1783 = vunpack.c.h.b16 %v1249
    %v1784 = vunpack.c.l.b16 %v1250
    %v1785 = vunpack.c.h.b16 %v1250
    %v1786 = vunpack.c.l.b16 %v1251
    %v1787 = vunpack.c.h.b16 %v1251
    %v1788 = vunpack.c.l.b16 %v1252
    %v1789 = vunpack.c.h.b16 %v1252
    %v1790 = vunpack.c.l.b16 %v1253
    %v1791 = vunpack.c.h.b16 %v1253
    %v1792 = vunpack.c.l.b16 %v1254
    %v1793 = vunpack.c.h.b16 %v1254
    %v1794 = vunpack.c.l.b16 %v1255
    %v1795 = vunpack.c.h.b16 %v1255
    %v1796 = vunpack.c.l.b16 %v1256
    %v1797 = vunpack.c.h.b16 %v1256
    %v1798 = vunpack.c.l.b16 %v1257
    %v1799 = vunpack.c.h.b16 %v1257
    %v1800 = vunpack.c.l.b16 %v1258
    %v1801 = vunpack.c.h.b16 %v1258
    %v1802 = vunpack.c.l.b16 %v1259
    %v1803 = vunpack.c.h.b16 %v1259
    %v1804 = vunpack.c.l.b16 %v1260
    %v1805 = vunpack.c.h.b16 %v1260
    %v1806 = vunpack.c.l.b16 %v1261
    %v1807 = vunpack.c.h.b16 %v1261
    %v1808 = vunpack.c.l.b16 %v1262
    %v1809 = vunpack.c.h.b16 %v1262
    %v1810 = vunpack.c.l.b16 %v1263
    %v1811 = vunpack.c.h.b16 %v1263
    %v1812 = vunpack.c.l.b16 %v1264
    %v1813 = vunpack.c.h.b16 %v1264
    %v1814 = vunpack.c.l.b16 %v1265
    %v1815 = vunpack.c.h.b16 %v1265
    %v1816 = vunpack.c.l.b16 %v1266
    %v1817 = vunpack.c.h.b16 %v1266
    %v1818 = vunpack.c.l.b16 %v1267
    %v1819 = vunpack.c.h.b16 %v1267
    %v1820 = vunpack.c.l.b16 %v1268
    %v1821 = vunpack.c.h.b16 %v1268
    %v1822 = vunpack.c.l.b16 %v1269
    %v1823 = vunpack.c.h.b16 %v1269
    %v1824 = vunpack.c.l.b16 %v1270
    %v1825 = vunpack.c.h.b16 %v1270
    %v1826 = vunpack.c.l.b16 %v1271
    %v1827 = vunpack.c.h.b16 %v1271
    %v1828 = vunpack.c.l.b16 %v1272
    %v1829 = vunpack.c.h.b16 %v1272
    %v1830 = vunpack.c.l.b16 %v1273
    %v1831 = vunpack.c.h.b16 %v1273
    %v1832 = vunpack.c.l.b16 %v1274
    %v1833 = vunpack.c.h.b16 %v1274
    %v1834 = vunpack.c.l.b16 %v1275
    %v1835 = vunpack.c.h.b16 %v1275
    %v1836 = vunpack.c.l.b16 %v1276
    %v1837 = vunpack.c.h.b16 %v1276
    %v1838 = vunpack.c.l.b16 %v1277
    %v1839 = vunpack.c.h.b16 %v1277
    %v1840 = vunpack.c.l.b16 %v1278
    %v1841 = vunpack.c.h.b16 %v1278
    %v1842 = vunpack.c.l.b16 %v1279
    %v1843 = vunpack.c.h.b16 %v1279
    %v1844 = vunpack.c.l.b16 %v1280
    %v1845 = vunpack.c.h.b16 %v1280
    %v1846 = vunpack.c.l.b16 %v1281
    %v1847 = vunpack.c.h.b16 %v1281
    %v1848 = vunpack.c.l.b16 %v1282
    %v1849 = vunpack.c.h.b16 %v1282
    %v1850 = vunpack.c.l.b16 %v1283
    %v1851 = vunpack.c.h.b16 %v1283
    %v1852 = vunpack.c.l.b16 %v1284
    %v1853 = vunpack.c.h.b16 %v1284
    %v1854 = vunpack.c.l.b16 %v1285
    %v1855 = vunpack.c.h.b16 %v1285
    %v1856 = vunpack.c.l.b16 %v1286
    %v1857 = vunpack.c.h.b16 %v1286
    %v1858 = vunpack.c.l.b16 %v1287
    %v1859 = vunpack.c.h.b16 %v1287
    %v1860 = vunpack.c.l.b16 %v1288
    %v1861 = vunpack.c.h.b16 %v1288
    %v1862 = vunpack.c.l.b16 %v1289
    %v1863 = vunpack.c.h.b16 %v1289
    %v1864 = vunpack.c.l.b16 %v1290
    %v1865 = vunpack.c.h.b16 %v1290
    %v1866 = vunpack.c.l.b16 %v1291
    %v1867 = vunpack.c.h.b16 %v1291
    %v1868 = vunpack.c.l.b16 %v1292
    %v1869 = vunpack.c.h.b16 %v1292
    %v1870 = vunpack.c.l.b16 %v1293
    %v1871 = vunpack.c.h.b16 %v1293
    %v1872 = vunpack.c.l.b16 %v1294
    %v1873 = vunpack.c.h.b16 %v1294
    %v1874 = vunpack.c.l.b16 %v1295
    %v1875 = vunpack.c.h.b16 %v1295
    %v1876 = vunpack.c.l.b16 %v1296
    %v1877 = vunpack.c.h.b16 %v1296
    %v1878 = vunpack.c.l.b16 %v1297
    %v1879 = vunpack.c.h.b16 %v1297
    %v1880 = vunpack.c.l.b16 %v1298
    %v1881 = vunpack.c.h.b16 %v1298
    %v1882 = vunpack.c.l.b16 %v1299
    %v1883 = vunpack.c.h.b16 %v1299
    %v1884 = vunpack.c.l.b16 %v1300
    %v1885 = vunpack.c.h.b16 %v1300
    %v1886 = vunpack.c.l.b16 %v1301
    %v1887 = vunpack.c.h.b16 %v1301
    %v1888 = vunpack.c.l.b16 %v1302
    %v1889 = vunpack.c.h.b16 %v1302
    %v1890 = vunpack.c.l.b16 %v1303
    %v1891 = vunpack.c.h.b16 %v1303
    %v1892 = vunpack.c.l.b16 %v1304
    %v1893 = vunpack.c.h.b16 %v1304
    %v1894 = vunpack.c.l.b16 %v1305
    %v1895 = vunpack.c.h.b16 %v1305
    %v1896 = vunpack.c.l.b16 %v1306
    %v1897 = vunpack.c.h.b16 %v1306
    %v1898 = vunpack.c.l.b16 %v1307
    %v1899 = vunpack.c.h.b16 %v1307
    %v1900 = vunpack.c.l.b16 %v1308
    %v1901 = vunpack.c.h.b16 %v1308
    %v1902 = vunpack.c.l.b16 %v1309
    %v1903 = vunpack.c.h.b16 %v1309
    %v1904 = vunpack.c.l.b16 %v1310
    %v1905 = vunpack.c.h.b16 %v1310
    %v1906 = vunpack.c.l.b16 %v1311
    %v1907 = vunpack.c.h.b16 %v1311
    %v1908 = vunpack.c.l.b16 %v1312
    %v1909 = vunpack.c.h.b16 %v1312
    %v1910 = vunpack.c.l.b16 %v1313
    %v1911 = vunpack.c.h.b16 %v1313
    %v1912 = vunpack.c.l.b16 %v1314
    %v1913 = vunpack.c.h.b16 %v1314
    %v1914 = vunpack.c.l.b16 %v1315
    %v1915 = vunpack.c.h.b16 %v1315
    %v1916 = vunpack.c.l.b16 %v1316
    %v1917 = vunpack.c.h.b16 %v1316
    %v1918 = vunpack.c.l.b16 %v1317
    %v1919 = vunpack.c.h.b16 %v1317
    %v1920 = vunpack.c.l.b16 %v1318
    %v1921 = vunpack.c.h.b16 %v1318
    %v1922 = vunpack.c.l.b16 %v1319
    %v1923 = vunpack.c.h.b16 %v1319
    %v1924 = vunpack.c.l.b16 %v1320
    %v1925 = vunpack.c.h.b16 %v1320
    %v1926 = vunpack.c.l.b16 %v1321
    %v1927 = vunpack.c.h.b16 %v1321
    %v1928 = vunpack.c.l.b16 %v1322
    %v1929 = vunpack.c.h.b16 %v1322
    %v1930 = vunpack.c.l.b16 %v1323
    %v1931 = vunpack.c.h.b16 %v1323
    %v1932 = vunpack.c.l.b16 %v1324
    %v1933 = vunpack.c.h.b16 %v1324
    %v1934 = vunpack.c.l.b16 %v1325
    %v1935 = vunpack.c.h.b16 %v1325
    %v1936 = vunpack.c.l.b16 %v1326
    %v1937 = vunpack.c.h.b16 %v1326
    %v1938 = vunpack.c.l.b16 %v1327
    %v1939 = vunpack.c.h.b16 %v1327
    %v1940 = vunpack.c.l.b16 %v1328
    %v1941 = vunpack.c.h.b16 %v1328
    %v1942 = vunpack.c.l.b16 %v1329
    %v1943 = vunpack.c.h.b16 %v1329
    %v1944 = vunpack.c.l.b16 %v1330
    %v1945 = vunpack.c.h.b16 %v1330
    %v1946 = vunpack.c.l.b16 %v1331
    %v1947 = vunpack.c.h.b16 %v1331
    %v1948 = vunpack.c.l.b16 %v1332
    %v1949 = vunpack.c.h.b16 %v1332
    %v1950 = vunpack.c.l.b16 %v1333
    %v1951 = vunpack.c.h.b16 %v1333
    %v1952 = vunpack.c.l.b16 %v1334
    %v1953 = vunpack.c.h.b16 %v1334
    %v1954 = vunpack.c.l.b16 %v1335
    %v1955 = vunpack.c.h.b16 %v1335
    %v1956 = vunpack.c.l.b16 %v1336
    %v1957 = vunpack.c.h.b16 %v1336
    %v1958 = vunpack.c.l.b16 %v1337
    %v1959 = vunpack.c.h.b16 %v1337
    %v1960 = vunpack.c.l.b16 %v1338
    %v1961 = vunpack.c.h.b16 %v1338
    %v1962 = vunpack.c.l.b16 %v1339
    %v1963 = vunpack.c.h.b16 %v1339
    %v1964 = vunpack.c.l.b16 %v1340
    %v1965 = vunpack.c.h.b16 %v1340
    %v1966 = vunpack.c.l.b16 %v1341
    %v1967 = vunpack.c.h.b16 %v1341
    %v1968 = vunpack.c.l.b16 %v1342
    %v1969 = vunpack.c.h.b16 %v1342
    %v1970 = vunpack.c.l.b16 %v1343
    %v1971 = vunpack.c.h.b16 %v1343
    %v1972 = vunpack.c.l.b16 %v1344
    %v1973 = vunpack.c.h.b16 %v1344
    %v1974 = vunpack.c.l.b16 %v1345
    %v1975 = vunpack.c.h.b16 %v1345
    %v1976 = vunpack.c.l.b16 %v1346
    %v1977 = vunpack.c.h.b16 %v1346
    %v1978 = vunpack.c.l.b16 %v1347
    %v1979 = vunpack.c.h.b16 %v1347
    %v1980 = vunpack.c.l.b16 %v1348
    %v1981 = vunpack.c.h.b16 %v1348
    %v1982 = vunpack.c.l.b16 %v1349
    %v1983 = vunpack.c.h.b16 %v1349
    %v1984 = vunpack.c.l.b16 %v1350
    %v1985 = vunpack.c.h.b16 %v1350
    %v1986 = vunpack.c.l.b16 %v1351
    %v1987 = vunpack.c.h.b16 %v1351
    %v1988 = vunpack.c.l.b16 %v1352
    %v1989 = vunpack.c.h.b16 %v1352
    %v1990 = vunpack.c.l.b16 %v1353
    %v1991 = vunpack.c.h.b16 %v1353
    %v1992 = vunpack.c.l.b16 %v1354
    %v1993 = vunpack.c.h.b16 %v1354
    %v1994 = vunpack.c.l.b16 %v1355
    %v1995 = vunpack.c.h.b16 %v1355
    %v1996 = vunpack.c.l.b16 %v1356
    %v1997 = vunpack.c.h.b16 %v1356
    %v1998 = vunpack.c.l.b16 %v1357
    %v1999 = vunpack.c.h.b16 %v1357
    %v2000 = vunpack.c.l.b16 %v1358
    %v2001 = vunpack.c.h.b16 %v1358
    %v2002 = vunpack.c.l.b16 %v1359
    %v2003 = vunpack.c.h.b16 %v1359
    %v2004 = vunpack.c.l.b16 %v1360
    %v2005 = vunpack.c.h.b16 %v1360
    %v2006 = vunpack.c.l.b16 %v1361
    %v2007 = vunpack.c.h.b16 %v1361
    %v2008 = vunpack.c.l.b16 %v1362
    %v2009 = vunpack.c.h.b16 %v1362
    %v2010 = vunpack.c.l.b16 %v1363
    %v2011 = vunpack.c.h.b16 %v1363
    %v2012 = vunpack.c.l.b16 %v1364
    %v2013 = vunpack.c.h.b16 %v1364
    %v2014 = vunpack.c.l.b16 %v1365
    %v2015 = vunpack.c.h.b16 %v1365
    %v2016 = vunpack.c.l.b16 %v1366
    %v2017 = vunpack.c.h.b16 %v1366
    %v2018 = vunpack.c.l.b16 %v1367
    %v2019 = vunpack.c.h.b16 %v1367
    %v2020 = vunpack.c.l.b16 %v1368
    %v2021 = vunpack.c.h.b16 %v1368
    %v2022 = vunpack.c.l.b16 %v1369
    %v2023 = vunpack.c.h.b16 %v1369
    %v2024 = vunpack.c.l.b16 %v1370
    %v2025 = vunpack.c.h.b16 %v1370
    %v2026 = vunpack.c.l.b16 %v1371
    %v2027 = vunpack.c.h.b16 %v1371
    %v2028 = vunpack.c.l.b16 %v1372
    %v2029 = vunpack.c.h.b16 %v1372
    %v2030 = vunpack.c.l.b16 %v1373
    %v2031 = vunpack.c.h.b16 %v1373
    %v2032 = vunpack.c.l.b16 %v1374
    %v2033 = vunpack.c.h.b16 %v1374
    %v2034 = vunpack.c.l.b16 %v1375
    %v2035 = vunpack.c.h.b16 %v1375
    %v2036 = vunpack.c.l.b16 %v1376
    %v2037 = vunpack.c.h.b16 %v1376
    %v2038 = vunpack.c.l.b16 %v1377
    %v2039 = vunpack.c.h.b16 %v1377
    %v2040 = vunpack.c.l.b16 %v1378
    %v2041 = vunpack.c.h.b16 %v1378
    %v2042 = vunpack.c.l.b16 %v1379
    %v2043 = vunpack.c.h.b16 %v1379
    %v2044 = vunpack.c.l.b16 %v1380
    %v2045 = vunpack.c.h.b16 %v1380
    %v2046 = vunpack.c.l.b16 %v1381
    %v2047 = vunpack.c.h.b16 %v1381
    %v2048 = vunpack.c.l.b16 %v1382
    %v2049 = vunpack.c.h.b16 %v1382
    %v2050 = vunpack.c.l.b16 %v1383
    %v2051 = vunpack.c.h.b16 %v1383
    %v2052 = vunpack.c.l.b16 %v1384
    %v2053 = vunpack.c.h.b16 %v1384
    %v2054 = vunpack.c.l.b16 %v1385
    %v2055 = vunpack.c.h.b16 %v1385
    %v2056 = vunpack.c.l.b16 %v1386
    %v2057 = vunpack.c.h.b16 %v1386
    %v2058 = vunpack.c.l.b16 %v1387
    %v2059 = vunpack.c.h.b16 %v1387
    %v2060 = vunpack.c.l.b16 %v1388
    %v2061 = vunpack.c.h.b16 %v1388
    %v2062 = vunpack.c.l.b16 %v1389
    %v2063 = vunpack.c.h.b16 %v1389
    %v2064 = vunpack.c.l.b16 %v1390
    %v2065 = vunpack.c.h.b16 %v1390
    %v2066 = vunpack.c.l.b16 %v1391
    %v2067 = vunpack.c.h.b16 %v1391
    %v2068 = vunpack.c.l.b16 %v1392
    %v2069 = vunpack.c.h.b16 %v1392
    %v2070 = vunpack.c.l.b16 %v1393
    %v2071 = vunpack.c.h.b16 %v1393
    %v2072 = vunpack.c.l.b16 %v1394
    %v2073 = vunpack.c.h.b16 %v1394
    %v2074 = vunpack.c.l.b16 %v1395
    %v2075 = vunpack.c.h.b16 %v1395
    %v2076 = vunpack.c.l.b16 %v1396
    %v2077 = vunpack.c.h.b16 %v1396
    %v2078 = vunpack.c.l.b16 %v1397
    %v2079 = vunpack.c.h.b16 %v1397
    %v2080 = vunpack.c.l.b16 %v1398
    %v2081 = vunpack.c.h.b16 %v1398
    %v2082 = vunpack.c.l.b16 %v1399
    %v2083 = vunpack.c.h.b16 %v1399
    %v2084 = vunpack.c.l.b16 %v1400
    %v2085 = vunpack.c.h.b16 %v1400
    %v2086 = vunpack.c.l.b16 %v1401
    %v2087 = vunpack.c.h.b16 %v1401
    %v2088 = vunpack.c.l.b16 %v1402
    %v2089 = vunpack.c.h.b16 %v1402
    %v2090 = vunpack.c.l.b16 %v1403
    %v2091 = vunpack.c.h.b16 %v1403
    %v2092 = vunpack.c.l.b16 %v1404
    %v2093 = vunpack.c.h.b16 %v1404
    %v2094 = vunpack.c.l.b16 %v1405
    %v2095 = vunpack.c.h.b16 %v1405
    %v2096 = vunpack.c.l.b16 %v1406
    %v2097 = vunpack.c.h.b16 %v1406
    %v2098 = vunpack.c.l.b16 %v1407
    %v2099 = vunpack.c.h.b16 %v1407
    %v2100 = vunpack.c.l.b16 %v1408
    %v2101 = vunpack.c.h.b16 %v1408
    %v2102 = vunpack.c.l.b16 %v1409
    %v2103 = vunpack.c.h.b16 %v1409
    %v2104 = vpack.c.b16 %v1660, %v1656
    %v2105 = vpack.c.b16 %v1661, %v1657
    %v2106 = vpack.c.b16 %v1662, %v1658
    %v2107 = vpack.c.b16 %v1663, %v1659
    %v2108 = vpack.c.b16 %v1668, %v1664
    %v2109 = vpack.c.b16 %v1669, %v1665
    %v2110 = vpack.c.b16 %v1670, %v1666
    %v2111 = vpack.c.b16 %v1671, %v1667
    %v2112 = vpack.c.b16 %v1676, %v1672
    %v2113 = vpack.c.b16 %v1677, %v1673
    %v2114 = vpack.c.b16 %v1678, %v1674
    %v2115 = vpack.c.b16 %v1679, %v1675
    %v2116 = vpack.c.b16 %v1684, %v1680
    %v2117 = vpack.c.b16 %v1685, %v1681
    %v2118 = vpack.c.b16 %v1686, %v1682
    %v2119 = vpack.c.b16 %v1687, %v1683
    %v2120 = vpack.c.b16 %v1692, %v1688
    %v2121 = vpack.c.b16 %v1693, %v1689
    %v2122 = vpack.c.b16 %v1694, %v1690
    %v2123 = vpack.c.b16 %v1695, %v1691
    %v2124 = vpack.c.b16 %v1700, %v1696
    %v2125 = vpack.c.b16 %v1701, %v1697
    %v2126 = vpack.c.b16 %v1702, %v1698
    %v2127 = vpack.c.b16 %v1703, %v1699
    %v2128 = vpack.c.b16 %v1708, %v1704
    %v2129 = vpack.c.b16 %v1709, %v1705
    %v2130 = vpack.c.b16 %v1710, %v1706
    %v2131 = vpack.c.b16 %v1711, %v1707
    %v2132 = vpack.c.b16 %v1716, %v1712
    %v2133 = vpack.c.b16 %v1717, %v1713
    %v2134 = vpack.c.b16 %v1718, %v1714
    %v2135 = vpack.c.b16 %v1719, %v1715
    %v2136 = vpack.c.b16 %v1724, %v1720
    %v2137 = vpack.c.b16 %v1725, %v1721
    %v2138 = vpack.c.b16 %v1726, %v1722
    %v2139 = vpack.c.b16 %v1727, %v1723
    %v2140 = vpack.c.b16 %v1732, %v1728
    %v2141 = vpack.c.b16 %v1733, %v1729
    %v2142 = vpack.c.b16 %v1734, %v1730
    %v2143 = vpack.c.b16 %v1735, %v1731
    %v2144 = vpack.c.b16 %v1740, %v1736
    %v2145 = vpack.c.b16 %v1741, %v1737
    %v2146 = vpack.c.b16 %v1742, %v1738
    %v2147 = vpack.c.b16 %v1743, %v1739
    %v2148 = vpack.c.b16 %v1748, %v1744
    %v2149 = vpack.c.b16 %v1749, %v1745
    %v2150 = vpack.c.b16 %v1750, %v1746
    %v2151 = vpack.c.b16 %v1751, %v1747
    %v2152 = vpack.c.b16 %v1756, %v1752
    %v2153 = vpack.c.b16 %v1757, %v1753
    %v2154 = vpack.c.b16 %v1758, %v1754
    %v2155 = vpack.c.b16 %v1759, %v1755
    %v2156 = vpack.c.b16 %v1764, %v1760
    %v2157 = vpack.c.b16 %v1765, %v1761
    %v2158 = vpack.c.b16 %v1766, %v1762
    %v2159 = vpack.c.b16 %v1767, %v1763
    %v2160 = vpack.c.b16 %v1772, %v1768
    %v2161 = vpack.c.b16 %v1773, %v1769
    %v2162 = vpack.c.b16 %v1774, %v1770
    %v2163 = vpack.c.b16 %v1775, %v1771
    %v2164 = vpack.c.b16 %v1780, %v1776
    %v2165 = vpack.c.b16 %v1781, %v1777
    %v2166 = vpack.c.b16 %v1782, %v1778
    %v2167 = vpack.c.b16 %v1783, %v1779
    %v2168 = vpack.c.b16 %v1788, %v1784
    %v2169 = vpack.c.b16 %v1789, %v1785
    %v2170 = vpack.c.b16 %v1790, %v1786
    %v2171 = vpack.c.b16 %v1791, %v1787
    %v2172 = vpack.c.b16 %v1796, %v1792
    %v2173 = vpack.c.b16 %v1797, %v1793
    %v2174 = vpack.c.b16 %v1798, %v1794
    %v2175 = vpack.c.b16 %v1799, %v1795
    %v2176 = vpack.c.b16 %v1804, %v1800
    %v2177 = vpack.c.b16 %v1805, %v1801
    %v2178 = vpack.c.b16 %v1806, %v1802
    %v2179 = vpack.c.b16 %v1807, %v1803
    %v2180 = vpack.c.b16 %v1812, %v1808
    %v2181 = vpack.c.b16 %v1813, %v1809
    %v2182 = vpack.c.b16 %v1814, %v1810
    %v2183 = vpack.c.b16 %v1815, %v1811
    %v2184 = vpack.c.b16 %v1820, %v1816
    %v2185 = vpack.c.b16 %v1821, %v1817
    %v2186 = vpack.c.b16 %v1822, %v1818
    %v2187 = vpack.c.b16 %v1823, %v1819
    %v2188 = vpack.c.b16 %v1828, %v1824
    %v2189 = vpack.c.b16 %v1829, %v1825
    %v2190 = vpack.c.b16 %v1830, %v1826
    %v2191 = vpack.c.b16 %v1831, %v1827
    %v2192 = vpack.c.b16 %v1836, %v1832
    %v2193 = vpack.c.b16 %v1837, %v1833
    %v2194 = vpack.c.b16 %v1838, %v1834
    %v2195 = vpack.c.b16 %v1839, %v1835
    %v2196 = vpack.c.b16 %v1844, %v1840
    %v2197 = vpack.c.b16 %v1845, %v1841
    %v2198 = vpack.c.b16 %v1846, %v1842
    %v2199 = vpack.c.b16 %v1847, %v1843
    %v2200 = vpack.c.b16 %v1852, %v1848
    %v2201 = vpack.c.b16 %v1853, %v1849
    %v2202 = vpack.c.b16 %v1854, %v1850
    %v2203 = vpack.c.b16 %v1855, %v1851
    %v2204 = vpack.c.b16 %v1860, %v1856
    %v2205 = vpack.c.b16 %v1861, %v1857
    %v2206 = vpack.c.b16 %v1862, %v1858
    %v2207 = vpack.c.b16 %v1863, %v1859
    %v2208 = vpack.c.b16 %v1868, %v1864
    %v2209 = vpack.c.b16 %v1869, %v1865
    %v2210 = vpack.c.b16 %v1870, %v1866
    %v2211 = vpack.c.b16 %v1871, %v1867
    %v2212 = vpack.c.b16 %v1876, %v1872
    %v2213 = vpack.c.b16 %v1877, %v1873
    %v2214 = vpack.c.b16 %v1878, %v1874
    %v2215 = vpack.c.b16 %v1879, %v1875
    %v2216 = vpack.c.b16 %v1884, %v1880
    %v2217 = vpack.c.b16 %v1885, %v1881
    %v2218 = vpack.c.b16 %v1886, %v1882
    %v2219 = vpack.c.b16 %v1887, %v1883
    %v2220 = vpack.c.b16 %v1892, %v1888
    %v2221 = vpack.c.b16 %v1893, %v1889
    %v2222 = vpack.c.b16 %v1894, %v1890
    %v2223 = vpack.c.b16 %v1895, %v1891
    %v2224 = vpack.c.b16 %v1900, %v1896
    %v2225 = vpack.c.b16 %v1901, %v1897
    %v2226 = vpack.c.b16 %v1902, %v1898
    %v2227 = vpack.c.b16 %v1903, %v1899
    %v2228 = vpack.c.b16 %v1908, %v1904
    %v2229 = vpack.c.b16 %v1909, %v1905
    %v2230 = vpack.c.b16 %v1910, %v1906
    %v2231 = vpack.c.b16 %v1911, %v1907
    %v2232 = vpack.c.b16 %v1916, %v1912
    %v2233 = vpack.c.b16 %v1917, %v1913
    %v2234 = vpack.c.b16 %v1918, %v1914
    %v2235 = vpack.c.b16 %v1919, %v1915
    %v2236 = vpack.c.b16 %v1924, %v1920
    %v2237 = vpack.c.b16 %v1925, %v1921
    %v2238 = vpack.c.b16 %v1926, %v1922
    %v2239 = vpack.c.b16 %v1927, %v1923
    %v2240 = vpack.c.b16 %v1932, %v1928
    %v2241 = vpack.c.b16 %v1933, %v1929
    %v2242 = vpack.c.b16 %v1934, %v1930
    %v2243 = vpack.c.b16 %v1935, %v1931
    %v2244 = vpack.c.b16 %v1940, %v1936
    %v2245 = vpack.c.b16 %v1941, %v1937
    %v2246 = vpack.c.b16 %v1942, %v1938
    %v2247 = vpack.c.b16 %v1943, %v1939
    %v2248 = vpack.c.b16 %v1948, %v1944
    %v2249 = vpack.c.b16 %v1949, %v1945
    %v2250 = vpack.c.b16 %v1950, %v1946
    %v2251 = vpack.c.b16 %v1951, %v1947
    %v2252 = vpack.c.b16 %v1956, %v1952
    %v2253 = vpack.c.b16 %v1957, %v1953
    %v2254 = vpack.c.b16 %v1958, %v1954
    %v2255 = vpack.c.b16 %v1959, %v1955
    %v2256 = vpack.c.b16 %v1964, %v1960
    %v2257 = vpack.c.b16 %v1965, %v1961
    %v2258 = vpack.c.b16 %v1966, %v1962
    %v2259 = vpack.c.b16 %v1967, %v1963
    %v2260 = vpack.c.b16 %v1972, %v1968
    %v2261 = vpack.c.b16 %v1973, %v1969
    %v2262 = vpack.c.b16 %v1974, %v1970
    %v2263 = vpack.c.b16 %v1975, %v1971
    %v2264 = vpack.c.b16 %v1980, %v1976
    %v2265 = vpack.c.b16 %v1981, %v1977
    %v2266 = vpack.c.b16 %v1982, %v1978
    %v2267 = vpack.c.b16 %v1983, %v1979
    %v2268 = vpack.c.b16 %v1988, %v1984
    %v2269 = vpack.c.b16 %v1989, %v1985
    %v2270 = vpack.c.b16 %v1990, %v1986
    %v2271 = vpack.c.b16 %v1991, %v1987
    %v2272 = vpack.c.b16 %v1996, %v1992
    %v2273 = vpack.c.b16 %v1997, %v1993
    %v2274 = vpack.c.b16 %v1998, %v1994
    %v2275 = vpack.c.b16 %v1999, %v1995
    %v2276 = vpack.c.b16 %v2004, %v2000
    %v2277 = vpack.c.b16 %v2005, %v2001
    %v2278 = vpack.c.b16 %v2006, %v2002
    %v2279 = vpack.c.b16 %v2007, %v2003
    %v2280 = vpack.c.b16 %v2012, %v2008
    %v2281 = vpack.c.b16 %v2013, %v2009
    %v2282 = vpack.c.b16 %v2014, %v2010
    %v2283 = vpack.c.b16 %v2015, %v2011
    %v2284 = vpack.c.b16 %v2020, %v2016
    %v2285 = vpack.c.b16 %v2021, %v2017
    %v2286 = vpack.c.b16 %v2022, %v2018
    %v2287 = vpack.c.b16 %v2023, %v2019
    %v2288 = vpack.c.b16 %v2028, %v2024
    %v2289 = vpack.c.b16 %v2029, %v2025
    %v2290 = vpack.c.b16 %v2030, %v2026
    %v2291 = vpack.c.b16 %v2031, %v2027
    %v2292 = vpack.c.b16 %v2036, %v2032
    %v2293 = vpack.c.b16 %v2037, %v2033
    %v2294 = vpack.c.b16 %v2038, %v2034
    %v2295 = vpack.c.b16 %v2039, %v2035
    %v2296 = vpack.c.b16 %v2044, %v2040
    %v2297 = vpack.c.b16 %v2045, %v2041
    %v2298 = vpack.c.b16 %v2046, %v2042
    %v2299 = vpack.c.b16 %v2047, %v2043
    %v2300 = vpack.c.b16 %v2052, %v2048
    %v2301 = vpack.c.b16 %v2053, %v2049
    %v2302 = vpack.c.b16 %v2054, %v2050
    %v2303 = vpack.c.b16 %v2055, %v2051
    %v2304 = vpack.c.b16 %v2060, %v2056
    %v2305 = vpack.c.b16 %v2061, %v2057
    %v2306 = vpack.c.b16 %v2062, %v2058
    %v2307 = vpack.c.b16 %v2063, %v2059
    %v2308 = vpack.c.b16 %v2068, %v2064
    %v2309 = vpack.c.b16 %v2069, %v2065
    %v2310 = vpack.c.b16 %v2070, %v2066
    %v2311 = vpack.c.b16 %v2071, %v2067
    %v2312 = vpack.c.b16 %v2076, %v2072
    %v2313 = vpack.c.b16 %v2077, %v2073
    %v2314 = vpack.c.b16 %v2078, %v2074
    %v2315 = vpack.c.b16 %v2079, %v2075
    %v2316 = vpack.c.b16 %v2084, %v2080
    %v2317 = vpack.c.b16 %v2085, %v2081
    %v2318 = vpack.c.b16 %v2086, %v2082
    %v2319 = vpack.c.b16 %v2087, %v2083
    %v2320 = vpack.c.b16 %v2092, %v2088
    %v2321 = vpack.c.b16 %v2093, %v2089
    %v2322 = vpack.c.b16 %v2094, %v2090
    %v2323 = vpack.c.b16 %v2095, %v2091
    %v2324 = vpack.c.b16 %v2100, %v2096
    %v2325 = vpack.c.b16 %v2101, %v2097
    %v2326 = vpack.c.b16 %v2102, %v2098
    %v2327 = vpack.c.b16 %v2103, %v2099
    %2552 = vmatprep.subr.bf16.mxu0 %v2105
    %2553 = vmatpush1.bf16.msra.mxu0 %v2104
    %2554 = vmatprep.subr.bf16.mxu0 %v2109
    %2555 = vmatpush1.bf16.msra.mxu0 %v2108
    %2556 = vmatprep.subr.bf16.mxu0 %v2113
    %2557 = vmatpush1.bf16.msra.mxu0 %v2112
    %2558 = vmatprep.subr.bf16.mxu0 %v2117
    %2559 = vmatpush1.bf16.msra.mxu0 %v2116
    %2560 = vmatprep.subr.bf16.mxu0 %v2121
    %2561 = vmatpush1.bf16.msra.mxu0 %v2120
    %2562 = vmatprep.subr.bf16.mxu0 %v2125
    %2563 = vmatpush1.bf16.msra.mxu0 %v2124
    %2564 = vmatprep.subr.bf16.mxu0 %v2129
    %2565 = vmatpush1.bf16.msra.mxu0 %v2128
    %2566 = vmatprep.subr.bf16.mxu0 %v2133
    %2567 = vmatpush1.bf16.msra.mxu0 %v2132
    %2568 = vmatprep.subr.bf16.mxu0 %v2137
    %2569 = vmatpush1.bf16.msra.mxu0 %v2136
    %2570 = vmatprep.subr.bf16.mxu0 %v2141
    %2571 = vmatpush1.bf16.msra.mxu0 %v2140
    %2572 = vmatprep.subr.bf16.mxu0 %v2145
    %2573 = vmatpush1.bf16.msra.mxu0 %v2144
    %2574 = vmatprep.subr.bf16.mxu0 %v2149
    %2575 = vmatpush1.bf16.msra.mxu0 %v2148
    %2576 = vmatprep.subr.bf16.mxu0 %v2153
    %2577 = vmatpush1.bf16.msra.mxu0 %v2152
    %2578 = vmatprep.subr.bf16.mxu0 %v2157
    %2579 = vmatpush1.bf16.msra.mxu0 %v2156
    %2580 = vmatprep.subr.bf16.mxu0 %v2161
    %2581 = vmatpush1.bf16.msra.mxu0 %v2160
    %2582 = vmatprep.subr.bf16.mxu0 %v2165
    %2583 = vmatpush1.bf16.msra.mxu0 %v2164
    %2584 = vmatprep.mubr.bf16.mxu0 %v1180
    %2585 = vmatmul.mubr.bf16.gmra.mrb[0].mxu0 %v1179
    %v2586 = vpop.f32.mrb[0].mxu0
    %v2587 = vadd.f32 %v1415, %v2586
    %v2588 = vpop.f32.mrb[0].mxu0
    %v2589 = vadd.f32 %v1419, %v2588
    %v2590 = vpop.f32.mrb[0].mxu0
    %v2591 = vadd.f32 %v1415, %v2590
    %v2592 = vpop.f32.mrb[0].mxu0
    %v2593 = vadd.f32 %v1419, %v2592
    %2594 = vdwg.mxu0
    %2595 = vmatprep.subr.bf16.mxu0 %v2169
    %2596 = vmatpush1.bf16.msra.mxu0 %v2168
    %2597 = vmatprep.subr.bf16.mxu0 %v2173
    %2598 = vmatpush1.bf16.msra.mxu0 %v2172
    %2599 = vmatprep.subr.bf16.mxu0 %v2177
    %2600 = vmatpush1.bf16.msra.mxu0 %v2176
    %2601 = vmatprep.subr.bf16.mxu0 %v2181
    %2602 = vmatpush1.bf16.msra.mxu0 %v2180
    %2603 = vmatprep.subr.bf16.mxu0 %v2185
    %2604 = vmatpush1.bf16.msra.mxu0 %v2184
    %2605 = vmatprep.subr.bf16.mxu0 %v2189
    %2606 = vmatpush1.bf16.msra.mxu0 %v2188
    %2607 = vmatprep.subr.bf16.mxu0 %v2193
    %2608 = vmatpush1.bf16.msra.mxu0 %v2192
    %2609 = vmatprep.subr.bf16.mxu0 %v2197
    %2610 = vmatpush1.bf16.msra.mxu0 %v2196
    %2611 = vmatprep.subr.bf16.mxu0 %v2201
    %2612 = vmatpush1.bf16.msra.mxu0 %v2200
    %2613 = vmatprep.subr.bf16.mxu0 %v2205
    %2614 = vmatpush1.bf16.msra.mxu0 %v2204
    %2615 = vmatprep.subr.bf16.mxu0 %v2209
    %2616 = vmatpush1.bf16.msra.mxu0 %v2208
    %2617 = vmatprep.subr.bf16.mxu0 %v2213
    %2618 = vmatpush1.bf16.msra.mxu0 %v2212
    %2619 = vmatprep.subr.bf16.mxu0 %v2217
    %2620 = vmatpush1.bf16.msra.mxu0 %v2216
    %2621 = vmatprep.subr.bf16.mxu0 %v2221
    %2622 = vmatpush1.bf16.msra.mxu0 %v2220
    %2623 = vmatprep.subr.bf16.mxu0 %v2225
    %2624 = vmatpush1.bf16.msra.mxu0 %v2224
    %2625 = vmatprep.subr.bf16.mxu0 %v2229
    %2626 = vmatpush1.bf16.msra.mxu0 %v2228
    %2627 = vmatprep.mubr.bf16.mxu0 %v1182
    %2628 = vmatmul.mubr.bf16.gmra.mrb[0].mxu0 %v1181
    %v2629 = vpop.f32.mrb[0].mxu0
    %v2630 = vadd.f32 %v2587, %v2629
    %v2631 = vpop.f32.mrb[0].mxu0
    %v2632 = vadd.f32 %v2589, %v2631
    %v2633 = vpop.f32.mrb[0].mxu0
    %v2634 = vadd.f32 %v2591, %v2633
    %v2635 = vpop.f32.mrb[0].mxu0
    %v2636 = vadd.f32 %v2593, %v2635
    %2637 = vdwg.mxu0
    %2638 = vmatprep.subr.bf16.mxu0 %v2233
    %2639 = vmatpush1.bf16.msra.mxu0 %v2232
    %2640 = vmatprep.subr.bf16.mxu0 %v2237
    %2641 = vmatpush1.bf16.msra.mxu0 %v2236
    %2642 = vmatprep.subr.bf16.mxu0 %v2241
    %2643 = vmatpush1.bf16.msra.mxu0 %v2240
    %2644 = vmatprep.subr.bf16.mxu0 %v2245
    %2645 = vmatpush1.bf16.msra.mxu0 %v2244
    %2646 = vmatprep.subr.bf16.mxu0 %v2249
    %2647 = vmatpush1.bf16.msra.mxu0 %v2248
    %2648 = vmatprep.subr.bf16.mxu0 %v2253
    %2649 = vmatpush1.bf16.msra.mxu0 %v2252
    %2650 = vmatprep.subr.bf16.mxu0 %v2257
    %2651 = vmatpush1.bf16.msra.mxu0 %v2256
    %2652 = vmatprep.subr.bf16.mxu0 %v2261
    %2653 = vmatpush1.bf16.msra.mxu0 %v2260
    %2654 = vmatprep.subr.bf16.mxu0 %v2265
    %2655 = vmatpush1.bf16.msra.mxu0 %v2264
    %2656 = vmatprep.subr.bf16.mxu0 %v2269
    %2657 = vmatpush1.bf16.msra.mxu0 %v2268
    %2658 = vmatprep.subr.bf16.mxu0 %v2273
    %2659 = vmatpush1.bf16.msra.mxu0 %v2272
    %2660 = vmatprep.subr.bf16.mxu0 %v2277
    %2661 = vmatpush1.bf16.msra.mxu0 %v2276
    %2662 = vmatprep.subr.bf16.mxu0 %v2281
    %2663 = vmatpush1.bf16.msra.mxu0 %v2280
    %2664 = vmatprep.subr.bf16.mxu0 %v2285
    %2665 = vmatpush1.bf16.msra.mxu0 %v2284
    %2666 = vmatprep.subr.bf16.mxu0 %v2289
    %2667 = vmatpush1.bf16.msra.mxu0 %v2288
    %2668 = vmatprep.subr.bf16.mxu0 %v2293
    %2669 = vmatpush1.bf16.msra.mxu0 %v2292
    %2670 = vmatprep.mubr.bf16.mxu0 %v1184
    %2671 = vmatmul.mubr.bf16.gmra.mrb[0].mxu0 %v1183
    %v2672 = vpop.f32.mrb[0].mxu0
    %v2673 = vadd.f32 %v2630, %v2672
    %v2674 = vpop.f32.mrb[0].mxu0
    %v2675 = vadd.f32 %v2632, %v2674
    %v2676 = vpop.f32.mrb[0].mxu0
    %v2677 = vadd.f32 %v2634, %v2676
    %v2678 = vpop.f32.mrb[0].mxu0
    %v2679 = vadd.f32 %v2636, %v2678
    %2680 = vdwg.mxu0
    %2681 = vmatprep.subr.bf16.mxu0 %v2297
    %2682 = vmatpush1.bf16.msra.mxu0 %v2296
    %2683 = vmatprep.subr.bf16.mxu0 %v2301
    %2684 = vmatpush1.bf16.msra.mxu0 %v2300
    %2685 = vmatprep.subr.bf16.mxu0 %v2305
    %2686 = vmatpush1.bf16.msra.mxu0 %v2304
    %2687 = vmatprep.subr.bf16.mxu0 %v2309
    %2688 = vmatpush1.bf16.msra.mxu0 %v2308
    %2689 = vmatprep.subr.bf16.mxu0 %v2313
    %2690 = vmatpush1.bf16.msra.mxu0 %v2312
    %2691 = vmatprep.subr.bf16.mxu0 %v2317
    %2692 = vmatpush1.bf16.msra.mxu0 %v2316
    %2693 = vmatprep.subr.bf16.mxu0 %v2321
    %2694 = vmatpush1.bf16.msra.mxu0 %v2320
    %2695 = vmatprep.subr.bf16.mxu0 %v2325
    %2696 = vmatpush1.bf16.msra.mxu0 %v2324
    %2697 = vmatprep.subr.bf16.mxu0 0
    %2698 = vmatpush1.bf16.msra.mxu0 0
    %2699 = vmatprep.subr.bf16.mxu0 0
    %2700 = vmatpush1.bf16.msra.mxu0 0
    %2701 = vmatprep.subr.bf16.mxu0 0
    %2702 = vmatpush1.bf16.msra.mxu0 0
    %2703 = vmatprep.subr.bf16.mxu0 0
    %2704 = vmatpush1.bf16.msra.mxu0 0
    %2705 = vmatprep.subr.bf16.mxu0 0
    %2706 = vmatpush1.bf16.msra.mxu0 0
    %2707 = vmatprep.subr.bf16.mxu0 0
    %2708 = vmatpush1.bf16.msra.mxu0 0
    %2709 = vmatprep.subr.bf16.mxu0 0
    %2710 = vmatpush1.bf16.msra.mxu0 0
    %2711 = vmatprep.subr.bf16.mxu0 0
    %2712 = vmatpush1.bf16.msra.mxu0 0
    %2713 = vmatprep.mubr.bf16.mxu0 0
    %2714 = vmatmul.mubr.bf16.gmra.mrb[0].mxu0 %v1185
    %v2715 = vpop.f32.mrb[0].mxu0
    %v2716 = vadd.f32 %v2673, %v2715
    %v2717 = vpop.f32.mrb[0].mxu0
    %v2718 = vadd.f32 %v2675, %v2717
    %v2719 = vpop.f32.mrb[0].mxu0
    %v2720 = vadd.f32 %v2677, %v2719
    %v2721 = vpop.f32.mrb[0].mxu0
    %v2722 = vadd.f32 %v2679, %v2721
    %2723 = vdwg.mxu0
    %2724 = vmatprep.subr.bf16.mxu0 %v2107
    %2725 = vmatpush1.bf16.msra.mxu0 %v2106
    %2726 = vmatprep.subr.bf16.mxu0 %v2111
    %2727 = vmatpush1.bf16.msra.mxu0 %v2110
    %2728 = vmatprep.subr.bf16.mxu0 %v2115
    %2729 = vmatpush1.bf16.msra.mxu0 %v2114
    %2730 = vmatprep.subr.bf16.mxu0 %v2119
    %2731 = vmatpush1.bf16.msra.mxu0 %v2118
    %2732 = vmatprep.subr.bf16.mxu0 %v2123
    %2733 = vmatpush1.bf16.msra.mxu0 %v2122
    %2734 = vmatprep.subr.bf16.mxu0 %v2127
    %2735 = vmatpush1.bf16.msra.mxu0 %v2126
    %2736 = vmatprep.subr.bf16.mxu0 %v2131
    %2737 = vmatpush1.bf16.msra.mxu0 %v2130
    %2738 = vmatprep.subr.bf16.mxu0 %v2135
    %2739 = vmatpush1.bf16.msra.mxu0 %v2134
    %2740 = vmatprep.subr.bf16.mxu0 %v2139
    %2741 = vmatpush1.bf16.msra.mxu0 %v2138
    %2742 = vmatprep.subr.bf16.mxu0 %v2143
    %2743 = vmatpush1.bf16.msra.mxu0 %v2142
    %2744 = vmatprep.subr.bf16.mxu0 %v2147
    %2745 = vmatpush1.bf16.msra.mxu0 %v2146
    %2746 = vmatprep.subr.bf16.mxu0 %v2151
    %2747 = vmatpush1.bf16.msra.mxu0 %v2150
    %2748 = vmatprep.subr.bf16.mxu0 %v2155
    %2749 = vmatpush1.bf16.msra.mxu0 %v2154
    %2750 = vmatprep.subr.bf16.mxu0 %v2159
    %2751 = vmatpush1.bf16.msra.mxu0 %v2158
    %2752 = vmatprep.subr.bf16.mxu0 %v2163
    %2753 = vmatpush1.bf16.msra.mxu0 %v2162
    %2754 = vmatprep.subr.bf16.mxu0 %v2167
    %2755 = vmatpush1.bf16.msra.mxu0 %v2166
    %2756 = vmatprep.mubr.bf16.mxu0 %v1180
    %2757 = vmatmul.mubr.bf16.gmra.mrb[0].mxu0 %v1179
    %v2758 = vpop.f32.mrb[0].mxu0
    %v2759 = vadd.f32 %v1423, %v2758
    %v2760 = vpop.f32.mrb[0].mxu0
    %v2761 = vadd.f32 %v1427, %v2760
    %v2762 = vpop.f32.mrb[0].mxu0
    %v2763 = vadd.f32 %v1423, %v2762
    %v2764 = vpop.f32.mrb[0].mxu0
    %v2765 = vadd.f32 %v1427, %v2764
    %2766 = vdwg.mxu0
    %2767 = vmatprep.subr.bf16.mxu0 %v2171
    %2768 = vmatpush1.bf16.msra.mxu0 %v2170
    %2769 = vmatprep.subr.bf16.mxu0 %v2175
    %2770 = vmatpush1.bf16.msra.mxu0 %v2174
    %2771 = vmatprep.subr.bf16.mxu0 %v2179
    %2772 = vmatpush1.bf16.msra.mxu0 %v2178
    %2773 = vmatprep.subr.bf16.mxu0 %v2183
    %2774 = vmatpush1.bf16.msra.mxu0 %v2182
    %2775 = vmatprep.subr.bf16.mxu0 %v2187
    %2776 = vmatpush1.bf16.msra.mxu0 %v2186
    %2777 = vmatprep.subr.bf16.mxu0 %v2191
    %2778 = vmatpush1.bf16.msra.mxu0 %v2190
    %2779 = vmatprep.subr.bf16.mxu0 %v2195
    %2780 = vmatpush1.bf16.msra.mxu0 %v2194
    %2781 = vmatprep.subr.bf16.mxu0 %v2199
    %2782 = vmatpush1.bf16.msra.mxu0 %v2198
    %2783 = vmatprep.subr.bf16.mxu0 %v2203
    %2784 = vmatpush1.bf16.msra.mxu0 %v2202
    %2785 = vmatprep.subr.bf16.mxu0 %v2207
    %2786 = vmatpush1.bf16.msra.mxu0 %v2206
    %2787 = vmatprep.subr.bf16.mxu0 %v2211
    %2788 = vmatpush1.bf16.msra.mxu0 %v2210
    %2789 = vmatprep.subr.bf16.mxu0 %v2215
    %2790 = vmatpush1.bf16.msra.mxu0 %v2214
    %2791 = vmatprep.subr.bf16.mxu0 %v2219
    %2792 = vmatpush1.bf16.msra.mxu0 %v2218
    %2793 = vmatprep.subr.bf16.mxu0 %v2223
    %2794 = vmatpush1.bf16.msra.mxu0 %v2222
    %2795 = vmatprep.subr.bf16.mxu0 %v2227
    %2796 = vmatpush1.bf16.msra.mxu0 %v2226
    %2797 = vmatprep.subr.bf16.mxu0 %v2231
    %2798 = vmatpush1.bf16.msra.mxu0 %v2230
    %2799 = vmatprep.mubr.bf16.mxu0 %v1182
    %2800 = vmatmul.mubr.bf16.gmra.mrb[0].mxu0 %v1181
    %v2801 = vpop.f32.mrb[0].mxu0
    %v2802 = vadd.f32 %v2759, %v2801
    %v2803 = vpop.f32.mrb[0].mxu0
    %v2804 = vadd.f32 %v2761, %v2803
    %v2805 = vpop.f32.mrb[0].mxu0
    %v2806 = vadd.f32 %v2763, %v2805
    %v2807 = vpop.f32.mrb[0].mxu0
    %v2808 = vadd.f32 %v2765, %v2807
    %2809 = vdwg.mxu0
    %2810 = vmatprep.subr.bf16.mxu0 %v2235
    %2811 = vmatpush1.bf16.msra.mxu0 %v2234
    %2812 = vmatprep.subr.bf16.mxu0 %v2239
    %2813 = vmatpush1.bf16.msra.mxu0 %v2238
    %2814 = vmatprep.subr.bf16.mxu0 %v2243
    %2815 = vmatpush1.bf16.msra.mxu0 %v2242
    %2816 = vmatprep.subr.bf16.mxu0 %v2247
    %2817 = vmatpush1.bf16.msra.mxu0 %v2246
    %2818 = vmatprep.subr.bf16.mxu0 %v2251
    %2819 = vmatpush1.bf16.msra.mxu0 %v2250
    %2820 = vmatprep.subr.bf16.mxu0 %v2255
    %2821 = vmatpush1.bf16.msra.mxu0 %v2254
    %2822 = vmatprep.subr.bf16.mxu0 %v2259
    %2823 = vmatpush1.bf16.msra.mxu0 %v2258
    %2824 = vmatprep.subr.bf16.mxu0 %v2263
    %2825 = vmatpush1.bf16.msra.mxu0 %v2262
    %2826 = vmatprep.subr.bf16.mxu0 %v2267
    %2827 = vmatpush1.bf16.msra.mxu0 %v2266
    %2828 = vmatprep.subr.bf16.mxu0 %v2271
    %2829 = vmatpush1.bf16.msra.mxu0 %v2270
    %2830 = vmatprep.subr.bf16.mxu0 %v2275
    %2831 = vmatpush1.bf16.msra.mxu0 %v2274
    %2832 = vmatprep.subr.bf16.mxu0 %v2279
    %2833 = vmatpush1.bf16.msra.mxu0 %v2278
    %2834 = vmatprep.subr.bf16.mxu0 %v2283
    %2835 = vmatpush1.bf16.msra.mxu0 %v2282
    %2836 = vmatprep.subr.bf16.mxu0 %v2287
    %2837 = vmatpush1.bf16.msra.mxu0 %v2286
    %2838 = vmatprep.subr.bf16.mxu0 %v2291
    %2839 = vmatpush1.bf16.msra.mxu0 %v2290
    %2840 = vmatprep.subr.bf16.mxu0 %v2295
    %2841 = vmatpush1.bf16.msra.mxu0 %v2294
    %2842 = vmatprep.mubr.bf16.mxu0 %v1184
    %2843 = vmatmul.mubr.bf16.gmra.mrb[0].mxu0 %v1183
    %v2844 = vpop.f32.mrb[0].mxu0
    %v2845 = vadd.f32 %v2802, %v2844
    %v2846 = vpop.f32.mrb[0].mxu0
    %v2847 = vadd.f32 %v2804, %v2846
    %v2848 = vpop.f32.mrb[0].mxu0
    %v2849 = vadd.f32 %v2806, %v2848
    %v2850 = vpop.f32.mrb[0].mxu0
    %v2851 = vadd.f32 %v2808, %v2850
    %2852 = vdwg.mxu0
    %2853 = vmatprep.subr.bf16.mxu0 %v2299
    %2854 = vmatpush1.bf16.msra.mxu0 %v2298
    %2855 = vmatprep.subr.bf16.mxu0 %v2303
    %2856 = vmatpush1.bf16.msra.mxu0 %v2302
    %2857 = vmatprep.subr.bf16.mxu0 %v2307
    %2858 = vmatpush1.bf16.msra.mxu0 %v2306
    %2859 = vmatprep.subr.bf16.mxu0 %v2311
    %2860 = vmatpush1.bf16.msra.mxu0 %v2310
    %2861 = vmatprep.subr.bf16.mxu0 %v2315
    %2862 = vmatpush1.bf16.msra.mxu0 %v2314
    %2863 = vmatprep.subr.bf16.mxu0 %v2319
    %2864 = vmatpush1.bf16.msra.mxu0 %v2318
    %2865 = vmatprep.subr.bf16.mxu0 %v2323
    %2866 = vmatpush1.bf16.msra.mxu0 %v2322
    %2867 = vmatprep.subr.bf16.mxu0 %v2327
    %2868 = vmatpush1.bf16.msra.mxu0 %v2326
    %2869 = vmatprep.subr.bf16.mxu0 0
    %2870 = vmatpush1.bf16.msra.mxu0 0
    %2871 = vmatprep.subr.bf16.mxu0 0
    %2872 = vmatpush1.bf16.msra.mxu0 0
    %2873 = vmatprep.subr.bf16.mxu0 0
    %2874 = vmatpush1.bf16.msra.mxu0 0
    %2875 = vmatprep.subr.bf16.mxu0 0
    %2876 = vmatpush1.bf16.msra.mxu0 0
    %2877 = vmatprep.subr.bf16.mxu0 0
    %2878 = vmatpush1.bf16.msra.mxu0 0
    %2879 = vmatprep.subr.bf16.mxu0 0
    %2880 = vmatpush1.bf16.msra.mxu0 0
    %2881 = vmatprep.subr.bf16.mxu0 0
    %2882 = vmatpush1.bf16.msra.mxu0 0
    %2883 = vmatprep.subr.bf16.mxu0 0
    %2884 = vmatpush1.bf16.msra.mxu0 0
    %2885 = vmatprep.mubr.bf16.mxu0 0
    %2886 = vmatmul.mubr.bf16.gmra.mrb[0].mxu0 %v1185
    %v2887 = vpop.f32.mrb[0].mxu0
    %v2888 = vadd.f32 %v2845, %v2887
    %v2889 = vpop.f32.mrb[0].mxu0
    %v2890 = vadd.f32 %v2847, %v2889
    %v2891 = vpop.f32.mrb[0].mxu0
    %v2892 = vadd.f32 %v2849, %v2891
    %v2893 = vpop.f32.mrb[0].mxu0
    %v2894 = vadd.f32 %v2851, %v2893
    %2895 = vdwg.mxu0
    %v2896 = vmax.f32 %v2716, 0.0
    %v2897 = vmax.f32 %v2718, 0.0
    %v2898 = vmax.f32 %v2888, 0.0
    %v2899 = vmax.f32 %v2890, 0.0
    %v2900 = vmax.f32 %v2720, 0.0
    %v2901 = vmax.f32 %v2722, 0.0
    %v2902 = vmax.f32 %v2892, 0.0
    %v2903 = vmax.f32 %v2894, 0.0
    %v2904 = vpack.c.bf16 %v2900, %v2896
    %v2905 = vpack.c.bf16 %v2901, %v2897
    %v2906 = vpack.c.bf16 %v2902, %v2898
    %v2907 = vpack.c.bf16 %v2903, %v2899
    %v2908 = vld [vmem:[#allocation12] sm:$0xf]
    %v2909 = vld [vmem:[#allocation12 + $0x4] sm:$0xf]
    %v2910 = vld [vmem:[#allocation12 + $0x8] sm:$0xf]
    %v2911 = vld [vmem:[#allocation12 + $0xc] sm:$0xf]
    %v2912 = vld [vmem:[#allocation12 + $0x10] sm:$0xf]
    %v2913 = vld [vmem:[#allocation12 + $0x14] sm:$0xf]
    %v2914 = vld [vmem:[#allocation12 + $0x18] sm:$0xf]
    %v2915 = vld [vmem:[#allocation12 + $0x1c] sm:$0xf]
    %v2916 = vld [vmem:[#allocation12 + $0x20] sm:$0xf]
    %v2917 = vld [vmem:[#allocation12 + $0x24] sm:$0xf]
    %v2918 = vld [vmem:[#allocation12 + $0x28] sm:$0xf]
    %v2919 = vld [vmem:[#allocation12 + $0x2c] sm:$0xf]
    %v2920 = vld [vmem:[#allocation12 + $0x30] sm:$0xf]
    %v2921 = vld [vmem:[#allocation12 + $0x34] sm:$0xf]
    %v2922 = vld [vmem:[#allocation12 + $0x38] sm:$0xf]
    %v2923 = vld [vmem:[#allocation12 + $0x3c] sm:$0xf]
    %v2924 = vld [vmem:[#allocation12 + $0x40] sm:$0xf]
    %v2925 = vld [vmem:[#allocation12 + $0x44] sm:$0xf]
    %v2926 = vld [vmem:[#allocation12 + $0x48] sm:$0xf]
    %v2927 = vld [vmem:[#allocation12 + $0x4c] sm:$0xf]
    %v2928 = vld [vmem:[#allocation12 + $0x50] sm:$0xf]
    %v2929 = vld [vmem:[#allocation12 + $0x54] sm:$0xf]
    %v2930 = vld [vmem:[#allocation12 + $0x58] sm:$0xf]
    %v2931 = vld [vmem:[#allocation12 + $0x5c] sm:$0xf]
    %v2932 = vld [vmem:[#allocation12 + $0x60] sm:$0xf]
    %v2933 = vld [vmem:[#allocation12 + $0x64] sm:$0xf]
    %v2934 = vld [vmem:[#allocation12 + $0x68] sm:$0xf]
    %v2935 = vld [vmem:[#allocation12 + $0x6c] sm:$0xf]
    %v2936 = vld [vmem:[#allocation12 + $0x70] sm:$0xf]
    %v2937 = vld [vmem:[#allocation12 + $0x74] sm:$0xf]
    %v2938 = vld [vmem:[#allocation12 + $0x78] sm:$0xf]
    %v2939 = vld [vmem:[#allocation12 + $0x7c] sm:$0xf]
    %v2940 = vld [vmem:[#allocation12 + $0x80] sm:$0xf]
    %v2941 = vld [vmem:[#allocation12 + $0x84] sm:$0xf]
    %v2942 = vld [vmem:[#allocation12 + $0x88] sm:$0xf]
    %v2943 = vld [vmem:[#allocation12 + $0x8c] sm:$0xf]
    %v2944 = vld [vmem:[#allocation12 + $0x90] sm:$0xf]
    %v2945 = vld [vmem:[#allocation12 + $0x94] sm:$0xf]
    %v2946 = vld [vmem:[#allocation12 + $0x98] sm:$0xf]
    %v2947 = vld [vmem:[#allocation12 + $0x9c] sm:$0xf]
    %v2948 = vld [vmem:[#allocation12 + $0xa0] sm:$0xf]
    %v2949 = vld [vmem:[#allocation12 + $0xa4] sm:$0xf]
    %v2950 = vld [vmem:[#allocation12 + $0xa8] sm:$0xf]
    %v2951 = vld [vmem:[#allocation12 + $0xac] sm:$0xf]
    %v2952 = vld [vmem:[#allocation12 + $0xb0] sm:$0xf]
    %v2953 = vld [vmem:[#allocation12 + $0xb4] sm:$0xf]
    %v2954 = vld [vmem:[#allocation12 + $0xb8] sm:$0xf]
    %v2955 = vld [vmem:[#allocation12 + $0xbc] sm:$0xf]
    %v2956 = vld [vmem:[#allocation12 + $0xc0] sm:$0xf]
    %v2957 = vld [vmem:[#allocation12 + $0xc4] sm:$0xf]
    %v2958 = vld [vmem:[#allocation12 + $0xc8] sm:$0xf]
    %v2959 = vld [vmem:[#allocation12 + $0xcc] sm:$0xf]
    %v2960 = vld [vmem:[#allocation12 + $0xd0] sm:$0xf]
    %v2961 = vld [vmem:[#allocation12 + $0xd4] sm:$0xf]
    %v2962 = vld [vmem:[#allocation12 + $0xd8] sm:$0xf]
    %v2963 = vld [vmem:[#allocation12 + $0xdc] sm:$0xf]
    %v2964 = vld [vmem:[#allocation12 + $0xe0] sm:$0xf]
    %v2965 = vld [vmem:[#allocation12 + $0xe4] sm:$0xf]
    %v2966 = vld [vmem:[#allocation12 + $0xe8] sm:$0xf]
    %v2967 = vld [vmem:[#allocation12 + $0xec] sm:$0xf]
    %v2968 = vld [vmem:[#allocation12 + $0xf0] sm:$0xf]
    %v2969 = vld [vmem:[#allocation12 + $0xf4] sm:$0xf]
    %v2970 = vld [vmem:[#allocation12 + $0xf8] sm:$0xf]
    %v2971 = vld [vmem:[#allocation12 + $0xfc] sm:$0xf]
    %v2972 = vld [vmem:[#allocation14] sm:$0x1]
    %v2974 = vlaneseq
    %v2975 = vshrl.u32 %v2974, 7
    %v2976 = vsub.s32 0, %v2975
    %v2977 = vrot.slane %v2972, %v2976
    %v3043 = vunpack.c.l.b16 %v2908
    %v3044 = vunpack.c.l.b16 %v2909
    %v3045 = vunpack.c.l.b16 %v2910
    %v3046 = vunpack.c.l.b16 %v2911
    %v3047 = vunpack.c.l.b16 %v2912
    %v3048 = vunpack.c.l.b16 %v2913
    %v3049 = vunpack.c.l.b16 %v2914
    %v3050 = vunpack.c.l.b16 %v2915
    %v3051 = vunpack.c.l.b16 %v2916
    %v3052 = vunpack.c.l.b16 %v2917
    %v3053 = vunpack.c.l.b16 %v2918
    %v3054 = vunpack.c.l.b16 %v2919
    %v3055 = vunpack.c.l.b16 %v2920
    %v3056 = vunpack.c.l.b16 %v2921
    %v3057 = vunpack.c.l.b16 %v2922
    %v3058 = vunpack.c.l.b16 %v2923
    %v3059 = vunpack.c.l.b16 %v2924
    %v3060 = vunpack.c.l.b16 %v2925
    %v3061 = vunpack.c.l.b16 %v2926
    %v3062 = vunpack.c.l.b16 %v2927
    %v3063 = vunpack.c.l.b16 %v2928
    %v3064 = vunpack.c.l.b16 %v2929
    %v3065 = vunpack.c.l.b16 %v2930
    %v3066 = vunpack.c.l.b16 %v2931
    %v3067 = vunpack.c.l.b16 %v2932
    %v3068 = vunpack.c.l.b16 %v2933
    %v3069 = vunpack.c.l.b16 %v2934
    %v3070 = vunpack.c.l.b16 %v2935
    %v3071 = vunpack.c.l.b16 %v2936
    %v3072 = vunpack.c.l.b16 %v2937
    %v3073 = vunpack.c.l.b16 %v2938
    %v3074 = vunpack.c.l.b16 %v2939
    %v3075 = vunpack.c.l.b16 %v2940
    %v3076 = vunpack.c.l.b16 %v2941
    %v3077 = vunpack.c.l.b16 %v2942
    %v3078 = vunpack.c.l.b16 %v2943
    %v3079 = vunpack.c.l.b16 %v2944
    %v3080 = vunpack.c.l.b16 %v2945
    %v3081 = vunpack.c.l.b16 %v2946
    %v3082 = vunpack.c.l.b16 %v2947
    %v3083 = vunpack.c.l.b16 %v2948
    %v3084 = vunpack.c.l.b16 %v2949
    %v3085 = vunpack.c.l.b16 %v2950
    %v3086 = vunpack.c.l.b16 %v2951
    %v3087 = vunpack.c.l.b16 %v2952
    %v3088 = vunpack.c.l.b16 %v2953
    %v3089 = vunpack.c.l.b16 %v2954
    %v3090 = vunpack.c.l.b16 %v2955
    %v3091 = vunpack.c.l.b16 %v2956
    %v3092 = vunpack.c.l.b16 %v2957
    %v3093 = vunpack.c.l.b16 %v2958
    %v3094 = vunpack.c.l.b16 %v2959
    %v3095 = vunpack.c.l.b16 %v2960
    %v3096 = vunpack.c.l.b16 %v2961
    %v3097 = vunpack.c.l.b16 %v2962
    %v3098 = vunpack.c.l.b16 %v2963
    %v3099 = vunpack.c.l.b16 %v2964
    %v3100 = vunpack.c.l.b16 %v2965
    %v3101 = vunpack.c.l.b16 %v2966
    %v3102 = vunpack.c.l.b16 %v2967
    %v3103 = vunpack.c.l.b16 %v2968
    %v3104 = vunpack.c.l.b16 %v2969
    %v3105 = vunpack.c.l.b16 %v2970
    %v3106 = vunpack.c.l.b16 %v2971
    %v3107 = vpack.c.b16 %v3044, %v3043
    %v3108 = vpack.c.b16 %v3046, %v3045
    %v3109 = vpack.c.b16 %v3048, %v3047
    %v3110 = vpack.c.b16 %v3050, %v3049
    %v3111 = vpack.c.b16 %v3052, %v3051
    %v3112 = vpack.c.b16 %v3054, %v3053
    %v3113 = vpack.c.b16 %v3056, %v3055
    %v3114 = vpack.c.b16 %v3058, %v3057
    %v3115 = vpack.c.b16 %v3060, %v3059
    %v3116 = vpack.c.b16 %v3062, %v3061
    %v3117 = vpack.c.b16 %v3064, %v3063
    %v3118 = vpack.c.b16 %v3066, %v3065
    %v3119 = vpack.c.b16 %v3068, %v3067
    %v3120 = vpack.c.b16 %v3070, %v3069
    %v3121 = vpack.c.b16 %v3072, %v3071
    %v3122 = vpack.c.b16 %v3074, %v3073
    %v3123 = vpack.c.b16 %v3076, %v3075
    %v3124 = vpack.c.b16 %v3078, %v3077
    %v3125 = vpack.c.b16 %v3080, %v3079
    %v3126 = vpack.c.b16 %v3082, %v3081
    %v3127 = vpack.c.b16 %v3084, %v3083
    %v3128 = vpack.c.b16 %v3086, %v3085
    %v3129 = vpack.c.b16 %v3088, %v3087
    %v3130 = vpack.c.b16 %v3090, %v3089
    %v3131 = vpack.c.b16 %v3092, %v3091
    %v3132 = vpack.c.b16 %v3094, %v3093
    %v3133 = vpack.c.b16 %v3096, %v3095
    %v3134 = vpack.c.b16 %v3098, %v3097
    %v3135 = vpack.c.b16 %v3100, %v3099
    %v3136 = vpack.c.b16 %v3102, %v3101
    %v3137 = vpack.c.b16 %v3104, %v3103
    %v3138 = vpack.c.b16 %v3106, %v3105
    %3171 = vmatprep.subr.bf16.mxu0 0
    %3172 = vmatpush1.bf16.msra.mxu0 %v3107
    %3173 = vmatprep.subr.bf16.mxu0 0
    %3174 = vmatpush1.bf16.msra.mxu0 %v3108
    %3175 = vmatprep.subr.bf16.mxu0 0
    %3176 = vmatpush1.bf16.msra.mxu0 %v3109
    %3177 = vmatprep.subr.bf16.mxu0 0
    %3178 = vmatpush1.bf16.msra.mxu0 %v3110
    %3179 = vmatprep.subr.bf16.mxu0 0
    %3180 = vmatpush1.bf16.msra.mxu0 %v3111
    %3181 = vmatprep.subr.bf16.mxu0 0
    %3182 = vmatpush1.bf16.msra.mxu0 %v3112
    %3183 = vmatprep.subr.bf16.mxu0 0
    %3184 = vmatpush1.bf16.msra.mxu0 %v3113
    %3185 = vmatprep.subr.bf16.mxu0 0
    %3186 = vmatpush1.bf16.msra.mxu0 %v3114
    %3187 = vmatprep.subr.bf16.mxu0 0
    %3188 = vmatpush1.bf16.msra.mxu0 %v3115
    %3189 = vmatprep.subr.bf16.mxu0 0
    %3190 = vmatpush1.bf16.msra.mxu0 %v3116
    %3191 = vmatprep.subr.bf16.mxu0 0
    %3192 = vmatpush1.bf16.msra.mxu0 %v3117
    %3193 = vmatprep.subr.bf16.mxu0 0
    %3194 = vmatpush1.bf16.msra.mxu0 %v3118
    %3195 = vmatprep.subr.bf16.mxu0 0
    %3196 = vmatpush1.bf16.msra.mxu0 %v3119
    %3197 = vmatprep.subr.bf16.mxu0 0
    %3198 = vmatpush1.bf16.msra.mxu0 %v3120
    %3199 = vmatprep.subr.bf16.mxu0 0
    %3200 = vmatpush1.bf16.msra.mxu0 %v3121
    %3201 = vmatprep.subr.bf16.mxu0 0
    %3202 = vmatpush1.bf16.msra.mxu0 %v3122
    %3203 = vmatprep.mubr.bf16.mxu0 %v2905
    %3204 = vmatmul.mubr.bf16.gmra.mrb[0].mxu0 %v2904
    %v3205 = vpop.f32.mrb[0].mxu0
    %v3206 = vadd.f32 %v2977, %v3205
    %v3207 = vpop.f32.mrb[0].mxu0
    %v3208 = vpop.f32.mrb[0].mxu0
    %v3209 = vadd.f32 %v2977, %v3208
    %v3210 = vpop.f32.mrb[0].mxu0
    %3211 = vdwg.mxu0
    %3212 = vmatprep.subr.bf16.mxu0 0
    %3213 = vmatpush1.bf16.msra.mxu0 %v3123
    %3214 = vmatprep.subr.bf16.mxu0 0
    %3215 = vmatpush1.bf16.msra.mxu0 %v3124
    %3216 = vmatprep.subr.bf16.mxu0 0
    %3217 = vmatpush1.bf16.msra.mxu0 %v3125
    %3218 = vmatprep.subr.bf16.mxu0 0
    %3219 = vmatpush1.bf16.msra.mxu0 %v3126
    %3220 = vmatprep.subr.bf16.mxu0 0
    %3221 = vmatpush1.bf16.msra.mxu0 %v3127
    %3222 = vmatprep.subr.bf16.mxu0 0
    %3223 = vmatpush1.bf16.msra.mxu0 %v3128
    %3224 = vmatprep.subr.bf16.mxu0 0
    %3225 = vmatpush1.bf16.msra.mxu0 %v3129
    %3226 = vmatprep.subr.bf16.mxu0 0
    %3227 = vmatpush1.bf16.msra.mxu0 %v3130
    %3228 = vmatprep.subr.bf16.mxu0 0
    %3229 = vmatpush1.bf16.msra.mxu0 %v3131
    %3230 = vmatprep.subr.bf16.mxu0 0
    %3231 = vmatpush1.bf16.msra.mxu0 %v3132
    %3232 = vmatprep.subr.bf16.mxu0 0
    %3233 = vmatpush1.bf16.msra.mxu0 %v3133
    %3234 = vmatprep.subr.bf16.mxu0 0
    %3235 = vmatpush1.bf16.msra.mxu0 %v3134
    %3236 = vmatprep.subr.bf16.mxu0 0
    %3237 = vmatpush1.bf16.msra.mxu0 %v3135
    %3238 = vmatprep.subr.bf16.mxu0 0
    %3239 = vmatpush1.bf16.msra.mxu0 %v3136
    %3240 = vmatprep.subr.bf16.mxu0 0
    %3241 = vmatpush1.bf16.msra.mxu0 %v3137
    %3242 = vmatprep.subr.bf16.mxu0 0
    %3243 = vmatpush1.bf16.msra.mxu0 %v3138
    %3244 = vmatprep.mubr.bf16.mxu0 %v2907
    %3245 = vmatmul.mubr.bf16.gmra.mrb[0].mxu0 %v2906
    %v3246 = vpop.f32.mrb[0].mxu0
    %v3247 = vadd.f32 %v3206, %v3246
    %v3248 = vpop.f32.mrb[0].mxu0
    %v3249 = vpop.f32.mrb[0].mxu0
    %v3250 = vadd.f32 %v3209, %v3249
    %v3251 = vpop.f32.mrb[0].mxu0
    %3252 = vdwg.mxu0
    %v3253 = vmax.f32 %v3247, 0.0
    %v3254 = vmax.f32 %v3250, 0.0
    %v3255 = vpack.c.bf16 %v3254, %v3253
    %v3256 = vld [vmem:[#allocation15] sm:$0xf]
    %v3257 = vld [vmem:[#allocation15 + $0x4] sm:$0xf]
    %v3258 = vld [vmem:[#allocation15 + $0x8] sm:$0xf]
    %v3259 = vld [vmem:[#allocation15 + $0xc] sm:$0xf]
    %v3260 = vld [vmem:[#allocation15 + $0x10] sm:$0xf]
    %v3261 = vld [vmem:[#allocation15 + $0x14] sm:$0xf]
    %v3262 = vld [vmem:[#allocation15 + $0x18] sm:$0xf]
    %v3263 = vld [vmem:[#allocation15 + $0x1c] sm:$0xf]
    %v3264 = vld [vmem:[#allocation15 + $0x20] sm:$0xf]
    %v3265 = vld [vmem:[#allocation15 + $0x24] sm:$0xf]
    %v3266 = vld [vmem:[#allocation15 + $0x28] sm:$0xf]
    %v3267 = vld [vmem:[#allocation15 + $0x2c] sm:$0xf]
    %v3268 = vld [vmem:[#allocation15 + $0x30] sm:$0xf]
    %v3269 = vld [vmem:[#allocation15 + $0x34] sm:$0xf]
    %v3270 = vld [vmem:[#allocation15 + $0x38] sm:$0xf]
    %v3271 = vld [vmem:[#allocation15 + $0x3c] sm:$0xf]
    %v3272 = vld [vmem:[#allocation17] sm:$0x1]
    %v3274 = vlaneseq
    %v3275 = vshrl.u32 %v3274, 7
    %v3276 = vsub.s32 0, %v3275
    %v3277 = vrot.slane %v3272, %v3276
    %v3295 = vunpack.c.l.b16 %v3256
    %v3296 = vunpack.c.l.b16 %v3257
    %v3297 = vunpack.c.l.b16 %v3258
    %v3298 = vunpack.c.l.b16 %v3259
    %v3299 = vunpack.c.l.b16 %v3260
    %v3300 = vunpack.c.l.b16 %v3261
    %v3301 = vunpack.c.l.b16 %v3262
    %v3302 = vunpack.c.l.b16 %v3263
    %v3303 = vunpack.c.l.b16 %v3264
    %v3304 = vunpack.c.l.b16 %v3265
    %v3305 = vunpack.c.l.b16 %v3266
    %v3306 = vunpack.c.l.b16 %v3267
    %v3307 = vunpack.c.l.b16 %v3268
    %v3308 = vunpack.c.l.b16 %v3269
    %v3309 = vunpack.c.l.b16 %v3270
    %v3310 = vunpack.c.l.b16 %v3271
    %v3311 = vpack.c.b16 %v3296, %v3295
    %v3312 = vpack.c.b16 %v3298, %v3297
    %v3313 = vpack.c.b16 %v3300, %v3299
    %v3314 = vpack.c.b16 %v3302, %v3301
    %v3315 = vpack.c.b16 %v3304, %v3303
    %v3316 = vpack.c.b16 %v3306, %v3305
    %v3317 = vpack.c.b16 %v3308, %v3307
    %v3318 = vpack.c.b16 %v3310, %v3309
    %3327 = vmatprep.subr.bf16.mxu0 0
    %3328 = vmatpush1.bf16.msra.mxu0 %v3311
    %3329 = vmatprep.subr.bf16.mxu0 0
    %3330 = vmatpush1.bf16.msra.mxu0 %v3312
    %3331 = vmatprep.subr.bf16.mxu0 0
    %3332 = vmatpush1.bf16.msra.mxu0 %v3313
    %3333 = vmatprep.subr.bf16.mxu0 0
    %3334 = vmatpush1.bf16.msra.mxu0 %v3314
    %3335 = vmatprep.subr.bf16.mxu0 0
    %3336 = vmatpush1.bf16.msra.mxu0 %v3315
    %3337 = vmatprep.subr.bf16.mxu0 0
    %3338 = vmatpush1.bf16.msra.mxu0 %v3316
    %3339 = vmatprep.subr.bf16.mxu0 0
    %3340 = vmatpush1.bf16.msra.mxu0 %v3317
    %3341 = vmatprep.subr.bf16.mxu0 0
    %3342 = vmatpush1.bf16.msra.mxu0 %v3318
    %3343 = vmatprep.subr.bf16.mxu0 0
    %3344 = vmatpush1.bf16.msra.mxu0 0
    %3345 = vmatprep.subr.bf16.mxu0 0
    %3346 = vmatpush1.bf16.msra.mxu0 0
    %3347 = vmatprep.subr.bf16.mxu0 0
    %3348 = vmatpush1.bf16.msra.mxu0 0
    %3349 = vmatprep.subr.bf16.mxu0 0
    %3350 = vmatpush1.bf16.msra.mxu0 0
    %3351 = vmatprep.subr.bf16.mxu0 0
    %3352 = vmatpush1.bf16.msra.mxu0 0
    %3353 = vmatprep.subr.bf16.mxu0 0
    %3354 = vmatpush1.bf16.msra.mxu0 0
    %3355 = vmatprep.subr.bf16.mxu0 0
    %3356 = vmatpush1.bf16.msra.mxu0 0
    %3357 = vmatprep.subr.bf16.mxu0 0
    %3358 = vmatpush1.bf16.msra.mxu0 0
    %3359 = vmatprep.mubr.bf16.mxu0 0
    %3360 = vmatmul.mubr.bf16.gmra.mrb[0].mxu0 %v3255
    %v3361 = vpop.f32.mrb[0].mxu0
    %v3362 = vadd.f32 %v3277, %v3361
    %v3363 = vpop.f32.mrb[0].mxu0
    %v3364 = vpop.f32.mrb[0].mxu0
    %v3365 = vadd.f32 %v3277, %v3364
    %v3366 = vpop.f32.mrb[0].mxu0
    %3367 = vdwg.mxu0
    %v3368 = vmax.f32 %v3362, 0.0
    %v3369 = vmax.f32 %v3365, 0.0
    %v3370 = vpack.c.bf16 %v3369, %v3368
    %v3371 = vld [vmem:[#allocation18] sm:$0xf]
    %v3372 = vld [vmem:[#allocation18 + $0x4] sm:$0xf]
    %v3373 = vld [vmem:[#allocation18 + $0x8] sm:$0xf]
    %v3374 = vld [vmem:[#allocation18 + $0xc] sm:$0xf]
    %v3375 = vld [vmem:[#allocation18 + $0x10] sm:$0xf]
    %v3376 = vld [vmem:[#allocation18 + $0x14] sm:$0xf]
    %v3377 = vld [vmem:[#allocation18 + $0x18] sm:$0xf]
    %v3378 = vld [vmem:[#allocation18 + $0x1c] sm:$0xf]
    %v3379 = vld [vmem:[#allocation18 + $0x20] sm:$0xf]
    %v3380 = vld [vmem:[#allocation18 + $0x24] sm:$0xf]
    %v3381 = vld [vmem:[#allocation18 + $0x28] sm:$0xf]
    %v3382 = vld [vmem:[#allocation18 + $0x2c] sm:$0xf]
    %v3383 = vld [vmem:[#allocation18 + $0x30] sm:$0xf]
    %v3384 = vld [vmem:[#allocation18 + $0x34] sm:$0xf]
    %v3385 = vld [vmem:[#allocation18 + $0x38] sm:$0xf]
    %v3386 = vld [vmem:[#allocation18 + $0x3c] sm:$0xf]
    %v3387 = vld [vmem:[#allocation20] sm:$0x1]
    %v3389 = vlaneseq
    %v3390 = vshrl.u32 %v3389, 7
    %v3391 = vsub.s32 0, %v3390
    %v3392 = vrot.slane %v3387, %v3391
    %v3410 = vunpack.c.l.b16 %v3371
    %v3411 = vunpack.c.l.b16 %v3372
    %v3412 = vunpack.c.l.b16 %v3373
    %v3413 = vunpack.c.l.b16 %v3374
    %v3414 = vunpack.c.l.b16 %v3375
    %v3415 = vunpack.c.l.b16 %v3376
    %v3416 = vunpack.c.l.b16 %v3377
    %v3417 = vunpack.c.l.b16 %v3378
    %v3418 = vunpack.c.l.b16 %v3379
    %v3419 = vunpack.c.l.b16 %v3380
    %v3420 = vunpack.c.l.b16 %v3381
    %v3421 = vunpack.c.l.b16 %v3382
    %v3422 = vunpack.c.l.b16 %v3383
    %v3423 = vunpack.c.l.b16 %v3384
    %v3424 = vunpack.c.l.b16 %v3385
    %v3425 = vunpack.c.l.b16 %v3386
    %v3426 = vpack.c.b16 %v3411, %v3410
    %v3427 = vpack.c.b16 %v3413, %v3412
    %v3428 = vpack.c.b16 %v3415, %v3414
    %v3429 = vpack.c.b16 %v3417, %v3416
    %v3430 = vpack.c.b16 %v3419, %v3418
    %v3431 = vpack.c.b16 %v3421, %v3420
    %v3432 = vpack.c.b16 %v3423, %v3422
    %v3433 = vpack.c.b16 %v3425, %v3424
    %3442 = vmatprep.subr.bf16.mxu0 0
    %3443 = vmatpush1.bf16.msra.mxu0 %v3426
    %3444 = vmatprep.subr.bf16.mxu0 0
    %3445 = vmatpush1.bf16.msra.mxu0 %v3427
    %3446 = vmatprep.subr.bf16.mxu0 0
    %3447 = vmatpush1.bf16.msra.mxu0 %v3428
    %3448 = vmatprep.subr.bf16.mxu0 0
    %3449 = vmatpush1.bf16.msra.mxu0 %v3429
    %3450 = vmatprep.subr.bf16.mxu0 0
    %3451 = vmatpush1.bf16.msra.mxu0 %v3430
    %3452 = vmatprep.subr.bf16.mxu0 0
    %3453 = vmatpush1.bf16.msra.mxu0 %v3431
    %3454 = vmatprep.subr.bf16.mxu0 0
    %3455 = vmatpush1.bf16.msra.mxu0 %v3432
    %3456 = vmatprep.subr.bf16.mxu0 0
    %3457 = vmatpush1.bf16.msra.mxu0 %v3433
    %3458 = vmatprep.subr.bf16.mxu0 0
    %3459 = vmatpush1.bf16.msra.mxu0 0
    %3460 = vmatprep.subr.bf16.mxu0 0
    %3461 = vmatpush1.bf16.msra.mxu0 0
    %3462 = vmatprep.subr.bf16.mxu0 0
    %3463 = vmatpush1.bf16.msra.mxu0 0
    %3464 = vmatprep.subr.bf16.mxu0 0
    %3465 = vmatpush1.bf16.msra.mxu0 0
    %3466 = vmatprep.subr.bf16.mxu0 0
    %3467 = vmatpush1.bf16.msra.mxu0 0
    %3468 = vmatprep.subr.bf16.mxu0 0
    %3469 = vmatpush1.bf16.msra.mxu0 0
    %3470 = vmatprep.subr.bf16.mxu0 0
    %3471 = vmatpush1.bf16.msra.mxu0 0
    %3472 = vmatprep.subr.bf16.mxu0 0
    %3473 = vmatpush1.bf16.msra.mxu0 0
    %3474 = vmatprep.mubr.bf16.mxu0 0
    %3475 = vmatmul.mubr.bf16.gmra.mrb[0].mxu0 %v3370
    %v3476 = vpop.f32.mrb[0].mxu0
    %v3477 = vadd.f32 %v3392, %v3476
    %v3478 = vpop.f32.mrb[0].mxu0
    %v3479 = vpop.f32.mrb[0].mxu0
    %v3480 = vadd.f32 %v3392, %v3479
    %v3481 = vpop.f32.mrb[0].mxu0
    %3482 = vdwg.mxu0
    %v3483 = vmax.f32 %v3477, 0.0
    %v3484 = vmax.f32 %v3480, 0.0
    %v3485 = vpack.c.bf16 %v3484, %v3483
    %v3486 = vld [vmem:[#allocation21] sm:$0xf]
    %v3487 = vld [vmem:[#allocation21 + $0x4] sm:$0xf]
    %v3488 = vld [vmem:[#allocation21 + $0x8] sm:$0xf]
    %v3489 = vld [vmem:[#allocation21 + $0xc] sm:$0xf]
    %v3490 = vld [vmem:[#allocation21 + $0x10] sm:$0xf]
    %v3491 = vld [vmem:[#allocation21 + $0x14] sm:$0xf]
    %v3492 = vld [vmem:[#allocation21 + $0x18] sm:$0xf]
    %v3493 = vld [vmem:[#allocation21 + $0x1c] sm:$0xf]
    %v3494 = vld [vmem:[#allocation21 + $0x20] sm:$0xf]
    %v3495 = vld [vmem:[#allocation21 + $0x24] sm:$0xf]
    %v3496 = vld [vmem:[#allocation21 + $0x28] sm:$0xf]
    %v3497 = vld [vmem:[#allocation21 + $0x2c] sm:$0xf]
    %v3498 = vld [vmem:[#allocation21 + $0x30] sm:$0xf]
    %v3499 = vld [vmem:[#allocation21 + $0x34] sm:$0xf]
    %v3500 = vld [vmem:[#allocation21 + $0x38] sm:$0xf]
    %v3501 = vld [vmem:[#allocation21 + $0x3c] sm:$0xf]
    %v3502 = vld [vmem:[#allocation23] sm:$0x1]
    %v3504 = vlaneseq
    %v3505 = vshrl.u32 %v3504, 7
    %v3506 = vsub.s32 0, %v3505
    %v3507 = vrot.slane %v3502, %v3506
    %v3525 = vunpack.c.l.b16 %v3486
    %v3526 = vunpack.c.l.b16 %v3487
    %v3527 = vunpack.c.l.b16 %v3488
    %v3528 = vunpack.c.l.b16 %v3489
    %v3529 = vunpack.c.l.b16 %v3490
    %v3530 = vunpack.c.l.b16 %v3491
    %v3531 = vunpack.c.l.b16 %v3492
    %v3532 = vunpack.c.l.b16 %v3493
    %v3533 = vunpack.c.l.b16 %v3494
    %v3534 = vunpack.c.l.b16 %v3495
    %v3535 = vunpack.c.l.b16 %v3496
    %v3536 = vunpack.c.l.b16 %v3497
    %v3537 = vunpack.c.l.b16 %v3498
    %v3538 = vunpack.c.l.b16 %v3499
    %v3539 = vunpack.c.l.b16 %v3500
    %v3540 = vunpack.c.l.b16 %v3501
    %v3541 = vpack.c.b16 %v3526, %v3525
    %v3542 = vpack.c.b16 %v3528, %v3527
    %v3543 = vpack.c.b16 %v3530, %v3529
    %v3544 = vpack.c.b16 %v3532, %v3531
    %v3545 = vpack.c.b16 %v3534, %v3533
    %v3546 = vpack.c.b16 %v3536, %v3535
    %v3547 = vpack.c.b16 %v3538, %v3537
    %v3548 = vpack.c.b16 %v3540, %v3539
    %3557 = vmatprep.subr.bf16.mxu0 0
    %3558 = vmatpush1.bf16.msra.mxu0 %v3541
    %3559 = vmatprep.subr.bf16.mxu0 0
    %3560 = vmatpush1.bf16.msra.mxu0 %v3542
    %3561 = vmatprep.subr.bf16.mxu0 0
    %3562 = vmatpush1.bf16.msra.mxu0 %v3543
    %3563 = vmatprep.subr.bf16.mxu0 0
    %3564 = vmatpush1.bf16.msra.mxu0 %v3544
    %3565 = vmatprep.subr.bf16.mxu0 0
    %3566 = vmatpush1.bf16.msra.mxu0 %v3545
    %3567 = vmatprep.subr.bf16.mxu0 0
    %3568 = vmatpush1.bf16.msra.mxu0 %v3546
    %3569 = vmatprep.subr.bf16.mxu0 0
    %3570 = vmatpush1.bf16.msra.mxu0 %v3547
    %3571 = vmatprep.subr.bf16.mxu0 0
    %3572 = vmatpush1.bf16.msra.mxu0 %v3548
    %3573 = vmatprep.subr.bf16.mxu0 0
    %3574 = vmatpush1.bf16.msra.mxu0 0
    %3575 = vmatprep.subr.bf16.mxu0 0
    %3576 = vmatpush1.bf16.msra.mxu0 0
    %3577 = vmatprep.subr.bf16.mxu0 0
    %3578 = vmatpush1.bf16.msra.mxu0 0
    %3579 = vmatprep.subr.bf16.mxu0 0
    %3580 = vmatpush1.bf16.msra.mxu0 0
    %3581 = vmatprep.subr.bf16.mxu0 0
    %3582 = vmatpush1.bf16.msra.mxu0 0
    %3583 = vmatprep.subr.bf16.mxu0 0
    %3584 = vmatpush1.bf16.msra.mxu0 0
    %3585 = vmatprep.subr.bf16.mxu0 0
    %3586 = vmatpush1.bf16.msra.mxu0 0
    %3587 = vmatprep.subr.bf16.mxu0 0
    %3588 = vmatpush1.bf16.msra.mxu0 0
    %3589 = vmatprep.mubr.bf16.mxu0 0
    %3590 = vmatmul.mubr.bf16.gmra.mrb[0].mxu0 %v3485
    %v3591 = vpop.f32.mrb[0].mxu0
    %v3592 = vadd.f32 %v3507, %v3591
    %v3593 = vpop.f32.mrb[0].mxu0
    %v3594 = vpop.f32.mrb[0].mxu0
    %v3595 = vadd.f32 %v3507, %v3594
    %v3596 = vpop.f32.mrb[0].mxu0
    %3597 = vdwg.mxu0
    %v3598 = vmax.f32 %v3592, 0.0
    %v3599 = vmax.f32 %v3595, 0.0
    %v3600 = vpack.c.bf16 %v3599, %v3598
    %v3601 = vld [vmem:[#allocation24] sm:$0xf]
    %v3602 = vld [vmem:[#allocation24 + $0x4] sm:$0xf]
    %v3603 = vld [vmem:[#allocation24 + $0x8] sm:$0xf]
    %v3604 = vld [vmem:[#allocation24 + $0xc] sm:$0xf]
    %v3605 = vld [vmem:[#allocation24 + $0x10] sm:$0xf]
    %v3606 = vld [vmem:[#allocation24 + $0x14] sm:$0xf]
    %v3607 = vld [vmem:[#allocation24 + $0x18] sm:$0xf]
    %v3608 = vld [vmem:[#allocation24 + $0x1c] sm:$0xf]
    %v3609 = vld [vmem:[#allocation24 + $0x20] sm:$0xf]
    %v3610 = vld [vmem:[#allocation24 + $0x24] sm:$0xf]
    %v3611 = vld [vmem:[#allocation24 + $0x28] sm:$0xf]
    %v3612 = vld [vmem:[#allocation24 + $0x2c] sm:$0xf]
    %v3613 = vld [vmem:[#allocation24 + $0x30] sm:$0xf]
    %v3614 = vld [vmem:[#allocation24 + $0x34] sm:$0xf]
    %v3615 = vld [vmem:[#allocation24 + $0x38] sm:$0xf]
    %v3616 = vld [vmem:[#allocation24 + $0x3c] sm:$0xf]
    %v3617 = vld [vmem:[#allocation26] sm:$0x1]
    %v3619 = vlaneseq
    %v3620 = vshrl.u32 %v3619, 7
    %v3621 = vsub.s32 0, %v3620
    %v3622 = vrot.slane %v3617, %v3621
    %v3640 = vunpack.c.l.b16 %v3601
    %v3641 = vunpack.c.l.b16 %v3602
    %v3642 = vunpack.c.l.b16 %v3603
    %v3643 = vunpack.c.l.b16 %v3604
    %v3644 = vunpack.c.l.b16 %v3605
    %v3645 = vunpack.c.l.b16 %v3606
    %v3646 = vunpack.c.l.b16 %v3607
    %v3647 = vunpack.c.l.b16 %v3608
    %v3648 = vunpack.c.l.b16 %v3609
    %v3649 = vunpack.c.l.b16 %v3610
    %v3650 = vunpack.c.l.b16 %v3611
    %v3651 = vunpack.c.l.b16 %v3612
    %v3652 = vunpack.c.l.b16 %v3613
    %v3653 = vunpack.c.l.b16 %v3614
    %v3654 = vunpack.c.l.b16 %v3615
    %v3655 = vunpack.c.l.b16 %v3616
    %v3656 = vpack.c.b16 %v3641, %v3640
    %v3657 = vpack.c.b16 %v3643, %v3642
    %v3658 = vpack.c.b16 %v3645, %v3644
    %v3659 = vpack.c.b16 %v3647, %v3646
    %v3660 = vpack.c.b16 %v3649, %v3648
    %v3661 = vpack.c.b16 %v3651, %v3650
    %v3662 = vpack.c.b16 %v3653, %v3652
    %v3663 = vpack.c.b16 %v3655, %v3654
    %3672 = vmatprep.subr.bf16.mxu0 0
    %3673 = vmatpush1.bf16.msra.mxu0 %v3656
    %3674 = vmatprep.subr.bf16.mxu0 0
    %3675 = vmatpush1.bf16.msra.mxu0 %v3657
    %3676 = vmatprep.subr.bf16.mxu0 0
    %3677 = vmatpush1.bf16.msra.mxu0 %v3658
    %3678 = vmatprep.subr.bf16.mxu0 0
    %3679 = vmatpush1.bf16.msra.mxu0 %v3659
    %3680 = vmatprep.subr.bf16.mxu0 0
    %3681 = vmatpush1.bf16.msra.mxu0 %v3660
    %3682 = vmatprep.subr.bf16.mxu0 0
    %3683 = vmatpush1.bf16.msra.mxu0 %v3661
    %3684 = vmatprep.subr.bf16.mxu0 0
    %3685 = vmatpush1.bf16.msra.mxu0 %v3662
    %3686 = vmatprep.subr.bf16.mxu0 0
    %3687 = vmatpush1.bf16.msra.mxu0 %v3663
    %3688 = vmatprep.subr.bf16.mxu0 0
    %3689 = vmatpush1.bf16.msra.mxu0 0
    %3690 = vmatprep.subr.bf16.mxu0 0
    %3691 = vmatpush1.bf16.msra.mxu0 0
    %3692 = vmatprep.subr.bf16.mxu0 0
    %3693 = vmatpush1.bf16.msra.mxu0 0
    %3694 = vmatprep.subr.bf16.mxu0 0
    %3695 = vmatpush1.bf16.msra.mxu0 0
    %3696 = vmatprep.subr.bf16.mxu0 0
    %3697 = vmatpush1.bf16.msra.mxu0 0
    %3698 = vmatprep.subr.bf16.mxu0 0
    %3699 = vmatpush1.bf16.msra.mxu0 0
    %3700 = vmatprep.subr.bf16.mxu0 0
    %3701 = vmatpush1.bf16.msra.mxu0 0
    %3702 = vmatprep.subr.bf16.mxu0 0
    %3703 = vmatpush1.bf16.msra.mxu0 0
    %3704 = vmatprep.mubr.bf16.mxu0 0
    %3705 = vmatmul.mubr.bf16.gmra.mrb[0].mxu0 %v3600
    %v3706 = vpop.f32.mrb[0].mxu0
    %v3707 = vadd.f32 %v3622, %v3706
    %v3708 = vpop.f32.mrb[0].mxu0
    %v3709 = vpop.f32.mrb[0].mxu0
    %v3710 = vadd.f32 %v3622, %v3709
    %v3711 = vpop.f32.mrb[0].mxu0
    %3712 = vdwg.mxu0
    %v3713 = vpack.c.bf16 %v3710, %v3707
    %v3715 = vunpack.c.l.b16 %v3713
    %v3716 = vunpack.c.h.b16 %v3713
    %v3717 = vpack.c.b16 %v3715, %v3715
    %v3718 = vpack.c.b16 %v3716, %v3716
    %3721 = vst [vmem:[#allocation27] sm:$0xf] %v3717
    %3722 = vst [vmem:[#allocation27 + $0x4] sm:$0xf] %v3718
    // Predicated region
    $region122: #{annmodel2_forward.1} parent=1 // pred_check
      _
    $region123: #{annmodel2_forward.1} parent=1 // pred_check_branch
      %3724 = sbr.rel (0) target = $region125
    $region124: #{annmodel2_forward.1} parent=1 // pred_region
      %s3726 = ssub.s32 128, 128
      %3727 = vsyncadd [#allocation5], %s3726
      %s3728 = sshll.u32 [#allocation27], 4
      %s3729 = int_to_ptr.vmem [resolvable:$true] %s3728
      %3734 = dma.vmem_to_hbm [thread:$0]  %s3729, 128, %s15, [#allocation5], 64, 64, 4
    $region125: #{annmodel2_forward.1} parent=1 // pred_fallthru
      _
    // Predicated region
    $region126: #{annmodel2_forward.1} parent=1 // pred_check
      _
    $region127: #{annmodel2_forward.1} parent=1 // pred_check_branch
      %3736 = sbr.rel (0) target = $region129
    $region128: #{annmodel2_forward.1} parent=1 // pred_region
      %3737 = dma.done [#allocation5], 128
    $region129: #{annmodel2_forward.1} parent=1 // pred_fallthru
      _
    %3738 = vsyncpa [#allocation4], 1
    %3739 = vsyncpa [#allocation7], 1
    %3740 = vsyncpa [#allocation10], 1
    %3741 = vsyncpa [#allocation13], 1
    %3742 = vsyncpa [#allocation16], 1
    %3743 = vsyncpa [#allocation19], 1
    %3744 = vsyncpa [#allocation22], 1
    %3745 = vsyncpa [#allocation25], 1
    %3746 = vsyncpa [#allocation5], 1

</llo_original>
